<compile_context>
chip_gen: v6e
topology: v6e:2x2x1
jax: 0.10.0
libtpu: 0.0.40
codegen_flags: <defaults>
</compile_context>

<pallas_src>
import functools

import jax
import jax.numpy as jnp
from jax import lax
from jax.experimental import pallas as pl
from jax.experimental.pallas import tpu as pltpu


_DOT_DTYPE = jnp.bfloat16   # MXU-native operand dtype; accumulation is f32.

_TAPS3 = [(i - 1, j - 1) for i in range(3) for j in range(3)]
_TAPS5 = [(i - 2, j - 2) for i in range(5) for j in range(5)]


# ---------------------------------------------------------------------------
# Fused WDSR forward kernel (one batch element per grid step).
# ---------------------------------------------------------------------------
def _wdsr_kernel(x_ref, hsw_ref, tw_ref, fb_ref,
                 w1_ref, w2_ref, w3_ref, bb_ref,
                 out_ref, pad_ref, im_ref,
                 *, H, W, C, E, L, S, NB, PAD):
    HW = H * W
    f32 = jnp.float32
    bf = _DOT_DTYPE

    # Re-zero ONLY the two PAD-wide pad-column strips of the staging buffer.
    # INVARIANT: nothing below writes outside pad_ref[:, PAD:PAD+HW], so these
    # strips stay zero for the whole grid step and provide the conv "same"
    # zero padding (row overflow of a shifted read lands in them).
    rows_all = pad_ref.shape[0]
    pad_ref[:, 0:PAD] = jnp.zeros((rows_all, PAD), f32)
    pad_ref[:, PAD + HW:PAD + HW + PAD] = jnp.zeros((rows_all, PAD), f32)

    # Column-validity masks for horizontal tap offsets dj != 0 (column
    # wrap-around inside the flattened HW axis must be masked).
    w_idx = lax.broadcasted_iota(jnp.int32, (1, HW), 1) % W
    col_ok = {dj: (w_idx + dj >= 0) & (w_idx + dj < W) for dj in (-2, -1, 1, 2)}

    def stage(val):
        # Stage a (rows, HW) activation in the interior of the padded buffer.
        pad_ref[0:val.shape[0], PAD:PAD + HW] = val

    def im2col(rows, taps):
        # Fill im_ref[0 : len(taps)*rows] with masked, shifted copies of the
        # staged activation.  Mask applied once per tap, while writing.
        for k, (di, dj) in enumerate(taps):
            d = di * W + dj
            v = pad_ref[0:rows, PAD + d:PAD + d + HW]
            if dj != 0:
                v = jnp.where(col_ok[dj], v, 0.0)
            im_ref[k * rows:(k + 1) * rows, :] = v
        return len(taps) * rows

    def im_dot(w, k_rows):
        # One fused MXU dot over the whole im2col (replaces per-tap dots).
        return jnp.dot(w, im_ref[0:k_rows, :].astype(bf),
                       preferred_element_type=f32)

    # ---- head 3x3 (1->C) and skip 5x5 (1->S): ONE (C+S, 25) MXU dot --------
    stage(x_ref[0])                                    # (1, HW) input image
    k25 = im2col(1, _TAPS5)
    hs = im_dot(hsw_ref[...], k25) + fb_ref[0:C + S]   # (C+S, HW)
    h = hs[0:C]                                        # running activation
    s_pre = hs[C:C + S]                                # skip branch

    # ---- residual blocks: everything resident in VMEM / vregs --------------
    # TODO(synk): switch to lax.fori_loop over the stacked (NB, ...) weights
    # once n_resblocks grows beyond ~4 (vreg pressure); NB is tiny here.
    for bi in range(NB):
        b1 = bb_ref[bi, 0:E]
        b2 = bb_ref[bi, E:E + L]
        b3 = bb_ref[bi, E + L:E + L + C]
        t = jnp.dot(w1_ref[bi], h.astype(bf), preferred_element_type=f32) + b1
        t = jnp.maximum(t, 0.0)                                     # (E, HW)
        t = jnp.dot(w2_ref[bi], t.astype(bf), preferred_element_type=f32) + b2
        stage(t)                                                    # (L, HW)
        k9l = im2col(L, _TAPS3)
        # Single (C, 9L) @ (9L, HW) dot instead of 9 tiny K=L dots.
        h = im_dot(w3_ref[bi], k9l) + b3 + h                        # (C, HW)

    # ---- tail 3x3 (C->S): single (S, 9C) @ (9C, HW) dot ---------------------
    stage(h)
    k9c = im2col(C, _TAPS3)
    r_pre = im_dot(tw_ref[...], k9c) + fb_ref[C + S:C + 2 * S]      # (S, HW)

    # ---- single lane-dense (3S, HW) output slab [o; r; s] -------------------
    out_ref[0] = jnp.concatenate([r_pre + s_pre, r_pre, s_pre], axis=0)


# ---------------------------------------------------------------------------
# Wrapper
# ---------------------------------------------------------------------------
def _taps_last_matrix(w):
    """(KH, KW, Cin, Cout) -> (Cout, KH*KW*Cin); row k*Cin+ci of the kernel's
    im2col holds input channel ci of tap k, matching this column order."""
    kh, kw, ci, co = w.shape
    return jnp.transpose(w.reshape(kh * kw, ci, co),
                         (2, 0, 1)).reshape(co, kh * kw * ci)


def wdsr_forward(x_nchw, params, scale):
    """WDSR forward.  Returns (out, r, s) in NCHW, matching the PyTorch module."""
    B, cin, H, W = x_nchw.shape
    assert cin == 1
    C = params["head_b"].shape[0]
    blocks = params["blocks"]
    NB = len(blocks)
    assert NB >= 1
    E = blocks[0]["b1"].shape[0]
    L = blocks[0]["b2"].shape[0]
    S = int(scale)
    HW = H * W
    # Pad width of the flat staging buffer: lane-tile aligned, >= max tap shift.
    PAD = ((2 * W + 2 + 127) // 128) * 128

    # TODO(synk): fractional `scale` would need the cubic resize prefilter
    # (resize order=3); for integer scale it is the identity and is skipped.
    # TODO(synk): for large images add an H-tile "parallel" grid axis with halo
    # reads and set CompilerParams(vmem_limit_bytes=...) so per-step VMEM fits
    # v7x's 64 MiB and both TensorCores get work; at this size one whole image
    # per grid step is best.

    x_flat = x_nchw.reshape(B, 1, HW).astype(jnp.float32)

    # --- repack weights once into the kernel's im2col layouts ----------------
    head_mat = _taps_last_matrix(params["head_w"])                  # (C, 9)
    skip_mat = _taps_last_matrix(params["skip_w"])                  # (S, 25)
    cols = jnp.array([(di + 2) * 5 + (dj + 2) for (di, dj) in _TAPS3], jnp.int32)
    head25 = jnp.zeros((C, 25), jnp.float32).at[:, cols].set(head_mat)
    hs_w = jnp.concatenate([head25, skip_mat], axis=0).astype(_DOT_DTYPE)  # (C+S,25)
    tail_w = _taps_last_matrix(params["tail_w"]).astype(_DOT_DTYPE)        # (S,9C)
    w1 = jnp.stack([jnp.transpose(bp["w1"][0, 0]) for bp in blocks]
                   ).astype(_DOT_DTYPE)                                    # (NB,E,C)
    w2 = jnp.stack([jnp.transpose(bp["w2"][0, 0]) for bp in blocks]
                   ).astype(_DOT_DTYPE)                                    # (NB,L,E)
    w3 = jnp.stack([_taps_last_matrix(bp["w3"]) for bp in blocks]
                   ).astype(_DOT_DTYPE)                                    # (NB,C,9L)
    blk_b = jnp.stack([jnp.concatenate([bp["b1"], bp["b2"], bp["b3"]])
                       for bp in blocks]).reshape(NB, E + L + C, 1
                                                  ).astype(jnp.float32)
    fixed_b = jnp.concatenate([params["head_b"], params["skip_b"],
                               params["tail_b"]]).reshape(C + 2 * S, 1
                                                          ).astype(jnp.float32)

    def invariant(a):
        nd = a.ndim
        return pl.BlockSpec(a.shape, lambda i, _nd=nd: (0,) * _nd)

    kernel = functools.partial(_wdsr_kernel, H=H, W=W, C=C, E=E, L=L, S=S,
                               NB=NB, PAD=PAD)
    im_rows = max(25, 9 * L, 9 * C)

    pre = pl.pallas_call(
        kernel,
        out_shape=jax.ShapeDtypeStruct((B, 3 * S, HW), jnp.float32),
        grid=(B,),
        in_specs=[
            pl.BlockSpec((1, 1, HW), lambda i: (i, 0, 0)),
            invariant(hs_w), invariant(tail_w), invariant(fixed_b),
            invariant(w1), invariant(w2), invariant(w3), invariant(blk_b),
        ],
        out_specs=pl.BlockSpec((1, 3 * S, HW), lambda i: (i, 0, 0)),
        scratch_shapes=[
            pltpu.VMEM((max(C, L, 1), HW + 2 * PAD), jnp.float32),  # staging
            pltpu.VMEM((im_rows, HW), jnp.float32),                 # im2col
        ],
        compiler_params=pltpu.CompilerParams(
            dimension_semantics=("parallel",)),
    )(x_flat, hs_w, tail_w, fixed_b, w1, w2, w3, blk_b)

    o_pre = pre[:, 0:S]
    r_pre = pre[:, S:2 * S]
    s_pre = pre[:, 2 * S:3 * S]

    # pixel_shuffle (H-only upsample) + NCHW boundary: pure layout glue.
    def shuffle(p):  # (B, S, HW) -> (B, 1, H*S, W)
        return p.reshape(B, S, H, W).transpose(0, 2, 1, 3).reshape(
            B, 1, H * S, W)

    return shuffle(o_pre), shuffle(r_pre), shuffle(s_pre)


# ---------------------------------------------------------------------------
# Parameter init (weight_norm at init => effective weight == initialized v)
# ---------------------------------------------------------------------------
def _conv_init(key, kh, kw, cin, cout):
    kw_, kb_ = jax.random.split(key)
    fan_in = cin * kh * kw
    w = jax.random.normal(kw_, (kh, kw, cin, cout), jnp.float32) / jnp.sqrt(
        jnp.float32(fan_in))
    b = jax.random.normal(kb_, (cout,), jnp.float32) * 0.01
    return w, b


def init_wdsr_params(key, num_channels, n_resblocks, scale):
    C = num_channels
    expand = 4
    lin = int(C * 0.8)
    keys = jax.random.split(key, 3 + 3 * n_resblocks)
    params = {}
    params["head_w"], params["head_b"] = _conv_init(keys[0], 3, 3, 1, C)
    params["tail_w"], params["tail_b"] = _conv_init(keys[1], 3, 3, C, scale)
    params["skip_w"], params["skip_b"] = _conv_init(keys[2], 5, 5, 1, scale)
    blocks = []
    for i in range(n_resblocks):
        k1, k2, k3 = keys[3 + 3 * i:6 + 3 * i]
        w1, b1 = _conv_init(k1, 1, 1, C, C * expand)
        w2, b2 = _conv_init(k2, 1, 1, C * expand, lin)
        w3, b3 = _conv_init(k3, 3, 3, lin, C)
        blocks.append(dict(w1=w1, b1=b1, w2=w2, b2=b2, w3=w3, b3=b3))
    params["blocks"] = blocks
    return params


# ---------------------------------------------------------------------------
# Pure-JAX reference (XLA convs).  With operand_dtype=bf16 it applies the same
# operand rounding as the kernel's MXU dots (f32 accumulation), so it checks
# the layout/fusion without being masked by dtype error.
# ---------------------------------------------------------------------------
def wdsr_reference(x_nchw, params, scale, operand_dtype=jnp.float32):
    def cast(a):
        return a.astype(operand_dtype).astype(jnp.float32)

    def conv(x, w, b, pad):
        w_oihw = jnp.transpose(cast(w), (3, 2, 0, 1))
        y = lax.conv_general_dilated(
            cast(x), w_oihw, window_strides=(1, 1),
            padding=((pad, pad), (pad, pad)),
            dimension_numbers=("NCHW", "OIHW", "NCHW"),
            precision=lax.Precision.HIGHEST)
        return y + b.reshape(1, -1, 1, 1)

    def shuffle(y):  # (B, S, H, W) -> (B, 1, H*S, W)
        b, s, h, w = y.shape
        return y.reshape(b, 1, s, h, w).transpose(0, 1, 3, 2, 4).reshape(
            b, 1, h * s, w)

    s = shuffle(conv(x_nchw, params["skip_w"], params["skip_b"], 2))
    h = conv(x_nchw, params["head_w"], params["head_b"], 1)
    for bp in params["blocks"]:
        t = jnp.maximum(conv(h, bp["w1"], bp["b1"], 0), 0.0)
        t = conv(t, bp["w2"], bp["b2"], 0)
        h = conv(t, bp["w3"], bp["b3"], 1) + h
    r = shuffle(conv(h, params["tail_w"], params["tail_b"], 1))
    return r + s, r, s


# ---------------------------------------------------------------------------
if __name__ == "__main__":
    B, H, W = 2, 16, 16
    num_channels = 8
    n_resblocks = 2
    scale = 2

    key = jax.random.PRNGKey(0)
    k_params, k_x = jax.random.split(key)
    params = init_wdsr_params(k_params, num_channels, n_resblocks, scale)
    x = jax.random.normal(k_x, (B, 1, H, W), jnp.float32)  # NCHW like PyTorch

    fwd = jax.jit(functools.partial(wdsr_forward, scale=scale))
    out, r, s = fwd(x, params)
    jax.block_until_ready((out, r, s))

    assert out.shape == (B, 1, H * scale, W), out.shape
    assert r.shape == (B, 1, H * scale, W), r.shape
    assert s.shape == (B, 1, H * scale, W), s.shape
    assert bool(jnp.allclose(out, r + s, atol=1e-5))

    # Tight check vs. the matched-rounding (bf16 operand) reference.
    ref_m = wdsr_reference(x, params, scale, operand_dtype=_DOT_DTYPE)
    for got, ref in zip((out, r, s), ref_m):
        err = float(jnp.max(jnp.abs(got - ref)))
        assert err < 2e-2, f"mismatch vs matched-rounding reference: {err}"

    # Gross sanity bound vs. the PyTorch-matching pure-f32 reference (covers
    # the intentional bf16 quantization of the MXU dot operands).
    ref_f = wdsr_reference(x, params, scale, operand_dtype=jnp.float32)
    for got, ref in zip((out, r, s), ref_f):
        err = float(jnp.max(jnp.abs(got - ref)))
        assert err < 1.5e-1, f"mismatch vs f32 reference: {err}"

    print("KERNEL_OK")
</pallas_src>

<mosaic_0001>
module attributes {stable_mosaic.version = 11 : i64} {
  func.func @_wdsr_kernel(%arg0: i32, %arg1: memref<1x1x256xf32, #tpu.memory_space<vmem>>, %arg2: memref<10x25xbf16, #tpu.memory_space<vmem>>, %arg3: memref<2x72xbf16, #tpu.memory_space<vmem>>, %arg4: memref<12x1xf32, #tpu.memory_space<vmem>>, %arg5: memref<2x32x8xbf16, #tpu.memory_space<vmem>>, %arg6: memref<2x6x32xbf16, #tpu.memory_space<vmem>>, %arg7: memref<2x8x54xbf16, #tpu.memory_space<vmem>>, %arg8: memref<2x46x1xf32, #tpu.memory_space<vmem>>, %arg9: memref<1x6x256xf32, #tpu.memory_space<vmem>>, %arg10: memref<8x512xf32, #tpu.memory_space<vmem>>, %arg11: memref<72x256xf32, #tpu.memory_space<vmem>>) attributes {dimension_semantics = [#tpu.dimension_semantics<parallel>], iteration_bounds = array<i64: 2>, scalar_prefetch = 0 : i64, scratch_operands = 2 : i64, tpu.core_type = #tpu.core_type<tc>, window_params = [{transform_indices = @transform_0, window_bounds = array<i64: 1, 1, 256>}, {pipeline_mode = #tpu.pipeline_mode<synchronous>, transform_indices = @transform_1, window_bounds = array<i64: 10, 25>}, {pipeline_mode = #tpu.pipeline_mode<synchronous>, transform_indices = @transform_2, window_bounds = array<i64: 2, 72>}, {pipeline_mode = #tpu.pipeline_mode<synchronous>, transform_indices = @transform_3, window_bounds = array<i64: 12, 1>}, {pipeline_mode = #tpu.pipeline_mode<synchronous>, transform_indices = @transform_4, window_bounds = array<i64: 2, 32, 8>}, {pipeline_mode = #tpu.pipeline_mode<synchronous>, transform_indices = @transform_5, window_bounds = array<i64: 2, 6, 32>}, {pipeline_mode = #tpu.pipeline_mode<synchronous>, transform_indices = @transform_6, window_bounds = array<i64: 2, 8, 54>}, {pipeline_mode = #tpu.pipeline_mode<synchronous>, transform_indices = @transform_7, window_bounds = array<i64: 2, 46, 1>}, {transform_indices = @transform_8, window_bounds = array<i64: 1, 6, 256>}]} {
    %cst = arith.constant 0.000000e+00 : f32
    %0 = vector.broadcast %cst : f32 to vector<8x128xf32>
    %c0 = arith.constant 0 : index
    %c0_0 = arith.constant 0 : index
    %1 = vector.load %arg10[%c0, %c0_0] : memref<8x512xf32, #tpu.memory_space<vmem>>, vector<8x128xf32>
    tpu.vector_store %arg10[%c0, %c0_0], %0 {strides = array<i32>} : memref<8x512xf32, #tpu.memory_space<vmem>>, vector<8x128xf32>,
    %cst_1 = arith.constant 0.000000e+00 : f32
    %2 = vector.broadcast %cst_1 : f32 to vector<8x128xf32>
    %c0_2 = arith.constant 0 : index
    %c384 = arith.constant 384 : index
    %3 = vector.load %arg10[%c0_2, %c384] : memref<8x512xf32, #tpu.memory_space<vmem>>, vector<8x128xf32>
    tpu.vector_store %arg10[%c0_2, %c384], %2 {strides = array<i32>} : memref<8x512xf32, #tpu.memory_space<vmem>>, vector<8x128xf32>,
    %4 = tpu.iota {dimensions = array<i32: 1>} : vector<1x256xi32>
    %c16_i32 = arith.constant 16 : i32
    %c0_i32 = arith.constant 0 : i32
    %5 = arith.cmpi eq, %c16_i32, %c0_i32 : i32
    %c1_i32 = arith.constant 1 : i32
    %6 = arith.select %5, %c1_i32, %c16_i32 : i32
    %7 = vector.broadcast %6 : i32 to vector<1x256xi32>
    %8 = arith.remsi %4, %7 : vector<1x256xi32>
    %c0_i32_3 = arith.constant 0 : i32
    %9 = vector.broadcast %c0_i32_3 : i32 to vector<1x256xi32>
    %10 = arith.cmpi ne, %8, %9 : vector<1x256xi32>
    %c0_i32_4 = arith.constant 0 : i32
    %11 = vector.broadcast %c0_i32_4 : i32 to vector<1x256xi32>
    %12 = arith.cmpi slt, %8, %11 : vector<1x256xi32>
    %c0_i32_5 = arith.constant 0 : i32
    %13 = arith.cmpi slt, %6, %c0_i32_5 : i32
    %14 = vector.broadcast %13 : i1 to vector<1x256xi1>
    %15 = vector.broadcast %14 : vector<1x256xi1> to vector<1x256xi1>
    %16 = arith.xori %12, %15 : vector<1x256xi1>
    %17 = arith.andi %16, %10 : vector<1x256xi1>
    %18 = vector.broadcast %6 : i32 to vector<1x256xi32>
    %19 = arith.addi %8, %18 : vector<1x256xi32>
    %20 = arith.select %17, %19, %8 : vector<1x256xi1>, vector<1x256xi32>
    %c-2_i32 = arith.constant -2 : i32
    %21 = vector.broadcast %c-2_i32 : i32 to vector<1x256xi32>
    %22 = arith.addi %20, %21 : vector<1x256xi32>
    %c0_i32_6 = arith.constant 0 : i32
    %23 = vector.broadcast %c0_i32_6 : i32 to vector<1x256xi32>
    %24 = arith.cmpi sge, %22, %23 : vector<1x256xi32>
    %c-2_i32_7 = arith.constant -2 : i32
    %25 = vector.broadcast %c-2_i32_7 : i32 to vector<1x256xi32>
    %26 = arith.addi %20, %25 : vector<1x256xi32>
    %c16_i32_8 = arith.constant 16 : i32
    %27 = vector.broadcast %c16_i32_8 : i32 to vector<1x256xi32>
    %28 = arith.cmpi slt, %26, %27 : vector<1x256xi32>
    %29 = arith.andi %24, %28 : vector<1x256xi1>
    %c-1_i32 = arith.constant -1 : i32
    %30 = vector.broadcast %c-1_i32 : i32 to vector<1x256xi32>
    %31 = arith.addi %20, %30 : vector<1x256xi32>
    %c0_i32_9 = arith.constant 0 : i32
    %32 = vector.broadcast %c0_i32_9 : i32 to vector<1x256xi32>
    %33 = arith.cmpi sge, %31, %32 : vector<1x256xi32>
    %c-1_i32_10 = arith.constant -1 : i32
    %34 = vector.broadcast %c-1_i32_10 : i32 to vector<1x256xi32>
    %35 = arith.addi %20, %34 : vector<1x256xi32>
    %c16_i32_11 = arith.constant 16 : i32
    %36 = vector.broadcast %c16_i32_11 : i32 to vector<1x256xi32>
    %37 = arith.cmpi slt, %35, %36 : vector<1x256xi32>
    %38 = arith.andi %33, %37 : vector<1x256xi1>
    %c1_i32_12 = arith.constant 1 : i32
    %39 = vector.broadcast %c1_i32_12 : i32 to vector<1x256xi32>
    %40 = arith.addi %20, %39 : vector<1x256xi32>
    %c0_i32_13 = arith.constant 0 : i32
    %41 = vector.broadcast %c0_i32_13 : i32 to vector<1x256xi32>
    %42 = arith.cmpi sge, %40, %41 : vector<1x256xi32>
    %c1_i32_14 = arith.constant 1 : i32
    %43 = vector.broadcast %c1_i32_14 : i32 to vector<1x256xi32>
    %44 = arith.addi %20, %43 : vector<1x256xi32>
    %c16_i32_15 = arith.constant 16 : i32
    %45 = vector.broadcast %c16_i32_15 : i32 to vector<1x256xi32>
    %46 = arith.cmpi slt, %44, %45 : vector<1x256xi32>
    %47 = arith.andi %42, %46 : vector<1x256xi1>
    %c2_i32 = arith.constant 2 : i32
    %48 = vector.broadcast %c2_i32 : i32 to vector<1x256xi32>
    %49 = arith.addi %20, %48 : vector<1x256xi32>
    %c0_i32_16 = arith.constant 0 : i32
    %50 = vector.broadcast %c0_i32_16 : i32 to vector<1x256xi32>
    %51 = arith.cmpi sge, %49, %50 : vector<1x256xi32>
    %c2_i32_17 = arith.constant 2 : i32
    %52 = vector.broadcast %c2_i32_17 : i32 to vector<1x256xi32>
    %53 = arith.addi %20, %52 : vector<1x256xi32>
    %c16_i32_18 = arith.constant 16 : i32
    %54 = vector.broadcast %c16_i32_18 : i32 to vector<1x256xi32>
    %55 = arith.cmpi slt, %53, %54 : vector<1x256xi32>
    %56 = arith.andi %51, %55 : vector<1x256xi1>
    %c0_19 = arith.constant 0 : index
    %c0_20 = arith.constant 0 : index
    %c0_21 = arith.constant 0 : index
    %57 = vector.load %arg1[%c0_19, %c0_20, %c0_21] : memref<1x1x256xf32, #tpu.memory_space<vmem>>, vector<1x1x256xf32>
    %58 = vector.shape_cast %57 : vector<1x1x256xf32> to vector<1x256xf32>
    %c0_22 = arith.constant 0 : index
    %c128 = arith.constant 128 : index
    %59 = vector.load %arg10[%c0_22, %c128] : memref<8x512xf32, #tpu.memory_space<vmem>>, vector<1x256xf32>
    tpu.vector_store %arg10[%c0_22, %c128], %58 {strides = array<i32>} : memref<8x512xf32, #tpu.memory_space<vmem>>, vector<1x256xf32>,
    %c0_23 = arith.constant 0 : index
    %c94 = arith.constant 94 : index
    %60 = vector.load %arg10[%c0_23, %c94] : memref<8x512xf32, #tpu.memory_space<vmem>>, vector<1x256xf32>
    %cst_24 = arith.constant 0.000000e+00 : f32
    %61 = vector.broadcast %cst_24 : f32 to vector<1x256xf32>
    %62 = arith.select %29, %60, %61 : vector<1x256xi1>, vector<1x256xf32>
    %c0_25 = arith.constant 0 : index
    %c0_26 = arith.constant 0 : index
    %63 = vector.load %arg11[%c0_25, %c0_26] : memref<72x256xf32, #tpu.memory_space<vmem>>, vector<1x256xf32>
    tpu.vector_store %arg11[%c0_25, %c0_26], %62 {strides = array<i32>} : memref<72x256xf32, #tpu.memory_space<vmem>>, vector<1x256xf32>,
    %c0_27 = arith.constant 0 : index
    %c95 = arith.constant 95 : index
    %64 = vector.load %arg10[%c0_27, %c95] : memref<8x512xf32, #tpu.memory_space<vmem>>, vector<1x256xf32>
    %cst_28 = arith.constant 0.000000e+00 : f32
    %65 = vector.broadcast %cst_28 : f32 to vector<1x256xf32>
    %66 = arith.select %38, %64, %65 : vector<1x256xi1>, vector<1x256xf32>
    %c1 = arith.constant 1 : index
    %c0_29 = arith.constant 0 : index
    %67 = vector.load %arg11[%c1, %c0_29] : memref<72x256xf32, #tpu.memory_space<vmem>>, vector<1x256xf32>
    tpu.vector_store %arg11[%c1, %c0_29], %66 {strides = array<i32>} : memref<72x256xf32, #tpu.memory_space<vmem>>, vector<1x256xf32>,
    %c0_30 = arith.constant 0 : index
    %c96 = arith.constant 96 : index
    %68 = vector.load %arg10[%c0_30, %c96] : memref<8x512xf32, #tpu.memory_space<vmem>>, vector<1x256xf32>
    %c2 = arith.constant 2 : index
    %c0_31 = arith.constant 0 : index
    %69 = vector.load %arg11[%c2, %c0_31] : memref<72x256xf32, #tpu.memory_space<vmem>>, vector<1x256xf32>
    tpu.vector_store %arg11[%c2, %c0_31], %68 {strides = array<i32>} : memref<72x256xf32, #tpu.memory_space<vmem>>, vector<1x256xf32>,
    %c0_32 = arith.constant 0 : index
    %c97 = arith.constant 97 : index
    %70 = vector.load %arg10[%c0_32, %c97] : memref<8x512xf32, #tpu.memory_space<vmem>>, vector<1x256xf32>
    %cst_33 = arith.constant 0.000000e+00 : f32
    %71 = vector.broadcast %cst_33 : f32 to vector<1x256xf32>
    %72 = arith.select %47, %70, %71 : vector<1x256xi1>, vector<1x256xf32>
    %c3 = arith.constant 3 : index
    %c0_34 = arith.constant 0 : index
    %73 = vector.load %arg11[%c3, %c0_34] : memref<72x256xf32, #tpu.memory_space<vmem>>, vector<1x256xf32>
    tpu.vector_store %arg11[%c3, %c0_34], %72 {strides = array<i32>} : memref<72x256xf32, #tpu.memory_space<vmem>>, vector<1x256xf32>,
    %c0_35 = arith.constant 0 : index
    %c98 = arith.constant 98 : index
    %74 = vector.load %arg10[%c0_35, %c98] : memref<8x512xf32, #tpu.memory_space<vmem>>, vector<1x256xf32>
    %cst_36 = arith.constant 0.000000e+00 : f32
    %75 = vector.broadcast %cst_36 : f32 to vector<1x256xf32>
    %76 = arith.select %56, %74, %75 : vector<1x256xi1>, vector<1x256xf32>
    %c4 = arith.constant 4 : index
    %c0_37 = arith.constant 0 : index
    %77 = vector.load %arg11[%c4, %c0_37] : memref<72x256xf32, #tpu.memory_space<vmem>>, vector<1x256xf32>
    tpu.vector_store %arg11[%c4, %c0_37], %76 {strides = array<i32>} : memref<72x256xf32, #tpu.memory_space<vmem>>, vector<1x256xf32>,
    %c0_38 = arith.constant 0 : index
    %c110 = arith.constant 110 : index
    %78 = vector.load %arg10[%c0_38, %c110] : memref<8x512xf32, #tpu.memory_space<vmem>>, vector<1x256xf32>
    %cst_39 = arith.constant 0.000000e+00 : f32
    %79 = vector.broadcast %cst_39 : f32 to vector<1x256xf32>
    %80 = arith.select %29, %78, %79 : vector<1x256xi1>, vector<1x256xf32>
    %c5 = arith.constant 5 : index
    %c0_40 = arith.constant 0 : index
    %81 = vector.load %arg11[%c5, %c0_40] : memref<72x256xf32, #tpu.memory_space<vmem>>, vector<1x256xf32>
    tpu.vector_store %arg11[%c5, %c0_40], %80 {strides = array<i32>} : memref<72x256xf32, #tpu.memory_space<vmem>>, vector<1x256xf32>,
    %c0_41 = arith.constant 0 : index
    %c111 = arith.constant 111 : index
    %82 = vector.load %arg10[%c0_41, %c111] : memref<8x512xf32, #tpu.memory_space<vmem>>, vector<1x256xf32>
    %cst_42 = arith.constant 0.000000e+00 : f32
    %83 = vector.broadcast %cst_42 : f32 to vector<1x256xf32>
    %84 = arith.select %38, %82, %83 : vector<1x256xi1>, vector<1x256xf32>
    %c6 = arith.constant 6 : index
    %c0_43 = arith.constant 0 : index
    %85 = vector.load %arg11[%c6, %c0_43] : memref<72x256xf32, #tpu.memory_space<vmem>>, vector<1x256xf32>
    tpu.vector_store %arg11[%c6, %c0_43], %84 {strides = array<i32>} : memref<72x256xf32, #tpu.memory_space<vmem>>, vector<1x256xf32>,
    %c0_44 = arith.constant 0 : index
    %c112 = arith.constant 112 : index
    %86 = vector.load %arg10[%c0_44, %c112] : memref<8x512xf32, #tpu.memory_space<vmem>>, vector<1x256xf32>
    %c7 = arith.constant 7 : index
    %c0_45 = arith.constant 0 : index
    %87 = vector.load %arg11[%c7, %c0_45] : memref<72x256xf32, #tpu.memory_space<vmem>>, vector<1x256xf32>
    tpu.vector_store %arg11[%c7, %c0_45], %86 {strides = array<i32>} : memref<72x256xf32, #tpu.memory_space<vmem>>, vector<1x256xf32>,
    %c0_46 = arith.constant 0 : index
    %c113 = arith.constant 113 : index
    %88 = vector.load %arg10[%c0_46, %c113] : memref<8x512xf32, #tpu.memory_space<vmem>>, vector<1x256xf32>
    %cst_47 = arith.constant 0.000000e+00 : f32
    %89 = vector.broadcast %cst_47 : f32 to vector<1x256xf32>
    %90 = arith.select %47, %88, %89 : vector<1x256xi1>, vector<1x256xf32>
    %c8 = arith.constant 8 : index
    %c0_48 = arith.constant 0 : index
    %91 = vector.load %arg11[%c8, %c0_48] : memref<72x256xf32, #tpu.memory_space<vmem>>, vector<1x256xf32>
    tpu.vector_store %arg11[%c8, %c0_48], %90 {strides = array<i32>} : memref<72x256xf32, #tpu.memory_space<vmem>>, vector<1x256xf32>,
    %c0_49 = arith.constant 0 : index
    %c114 = arith.constant 114 : index
    %92 = vector.load %arg10[%c0_49, %c114] : memref<8x512xf32, #tpu.memory_space<vmem>>, vector<1x256xf32>
    %cst_50 = arith.constant 0.000000e+00 : f32
    %93 = vector.broadcast %cst_50 : f32 to vector<1x256xf32>
    %94 = arith.select %56, %92, %93 : vector<1x256xi1>, vector<1x256xf32>
    %c9 = arith.constant 9 : index
    %c0_51 = arith.constant 0 : index
    %95 = vector.load %arg11[%c9, %c0_51] : memref<72x256xf32, #tpu.memory_space<vmem>>, vector<1x256xf32>
    tpu.vector_store %arg11[%c9, %c0_51], %94 {strides = array<i32>} : memref<72x256xf32, #tpu.memory_space<vmem>>, vector<1x256xf32>,
    %c0_52 = arith.constant 0 : index
    %c126 = arith.constant 126 : index
    %96 = vector.load %arg10[%c0_52, %c126] : memref<8x512xf32, #tpu.memory_space<vmem>>, vector<1x256xf32>
    %cst_53 = arith.constant 0.000000e+00 : f32
    %97 = vector.broadcast %cst_53 : f32 to vector<1x256xf32>
    %98 = arith.select %29, %96, %97 : vector<1x256xi1>, vector<1x256xf32>
    %c10 = arith.constant 10 : index
    %c0_54 = arith.constant 0 : index
    %99 = vector.load %arg11[%c10, %c0_54] : memref<72x256xf32, #tpu.memory_space<vmem>>, vector<1x256xf32>
    tpu.vector_store %arg11[%c10, %c0_54], %98 {strides = array<i32>} : memref<72x256xf32, #tpu.memory_space<vmem>>, vector<1x256xf32>,
    %c0_55 = arith.constant 0 : index
    %c127 = arith.constant 127 : index
    %100 = vector.load %arg10[%c0_55, %c127] : memref<8x512xf32, #tpu.memory_space<vmem>>, vector<1x256xf32>
    %cst_56 = arith.constant 0.000000e+00 : f32
    %101 = vector.broadcast %cst_56 : f32 to vector<1x256xf32>
    %102 = arith.select %38, %100, %101 : vector<1x256xi1>, vector<1x256xf32>
    %c11 = arith.constant 11 : index
    %c0_57 = arith.constant 0 : index
    %103 = vector.load %arg11[%c11, %c0_57] : memref<72x256xf32, #tpu.memory_space<vmem>>, vector<1x256xf32>
    tpu.vector_store %arg11[%c11, %c0_57], %102 {strides = array<i32>} : memref<72x256xf32, #tpu.memory_space<vmem>>, vector<1x256xf32>,
    %c0_58 = arith.constant 0 : index
    %c128_59 = arith.constant 128 : index
    %104 = vector.load %arg10[%c0_58, %c128_59] : memref<8x512xf32, #tpu.memory_space<vmem>>, vector<1x256xf32>
    %c12 = arith.constant 12 : index
    %c0_60 = arith.constant 0 : index
    %105 = vector.load %arg11[%c12, %c0_60] : memref<72x256xf32, #tpu.memory_space<vmem>>, vector<1x256xf32>
    tpu.vector_store %arg11[%c12, %c0_60], %104 {strides = array<i32>} : memref<72x256xf32, #tpu.memory_space<vmem>>, vector<1x256xf32>,
    %c0_61 = arith.constant 0 : index
    %c129 = arith.constant 129 : index
    %106 = vector.load %arg10[%c0_61, %c129] : memref<8x512xf32, #tpu.memory_space<vmem>>, vector<1x256xf32>
    %cst_62 = arith.constant 0.000000e+00 : f32
    %107 = vector.broadcast %cst_62 : f32 to vector<1x256xf32>
    %108 = arith.select %47, %106, %107 : vector<1x256xi1>, vector<1x256xf32>
    %c13 = arith.constant 13 : index
    %c0_63 = arith.constant 0 : index
    %109 = vector.load %arg11[%c13, %c0_63] : memref<72x256xf32, #tpu.memory_space<vmem>>, vector<1x256xf32>
    tpu.vector_store %arg11[%c13, %c0_63], %108 {strides = array<i32>} : memref<72x256xf32, #tpu.memory_space<vmem>>, vector<1x256xf32>,
    %c0_64 = arith.constant 0 : index
    %c130 = arith.constant 130 : index
    %110 = vector.load %arg10[%c0_64, %c130] : memref<8x512xf32, #tpu.memory_space<vmem>>, vector<1x256xf32>
    %cst_65 = arith.constant 0.000000e+00 : f32
    %111 = vector.broadcast %cst_65 : f32 to vector<1x256xf32>
    %112 = arith.select %56, %110, %111 : vector<1x256xi1>, vector<1x256xf32>
    %c14 = arith.constant 14 : index
    %c0_66 = arith.constant 0 : index
    %113 = vector.load %arg11[%c14, %c0_66] : memref<72x256xf32, #tpu.memory_space<vmem>>, vector<1x256xf32>
    tpu.vector_store %arg11[%c14, %c0_66], %112 {strides = array<i32>} : memref<72x256xf32, #tpu.memory_space<vmem>>, vector<1x256xf32>,
    %c0_67 = arith.constant 0 : index
    %c142 = arith.constant 142 : index
    %114 = vector.load %arg10[%c0_67, %c142] : memref<8x512xf32, #tpu.memory_space<vmem>>, vector<1x256xf32>
    %cst_68 = arith.constant 0.000000e+00 : f32
    %115 = vector.broadcast %cst_68 : f32 to vector<1x256xf32>
    %116 = arith.select %29, %114, %115 : vector<1x256xi1>, vector<1x256xf32>
    %c15 = arith.constant 15 : index
    %c0_69 = arith.constant 0 : index
    %117 = vector.load %arg11[%c15, %c0_69] : memref<72x256xf32, #tpu.memory_space<vmem>>, vector<1x256xf32>
    tpu.vector_store %arg11[%c15, %c0_69], %116 {strides = array<i32>} : memref<72x256xf32, #tpu.memory_space<vmem>>, vector<1x256xf32>,
    %c0_70 = arith.constant 0 : index
    %c143 = arith.constant 143 : index
    %118 = vector.load %arg10[%c0_70, %c143] : memref<8x512xf32, #tpu.memory_space<vmem>>, vector<1x256xf32>
    %cst_71 = arith.constant 0.000000e+00 : f32
    %119 = vector.broadcast %cst_71 : f32 to vector<1x256xf32>
    %120 = arith.select %38, %118, %119 : vector<1x256xi1>, vector<1x256xf32>
    %c16 = arith.constant 16 : index
    %c0_72 = arith.constant 0 : index
    %121 = vector.load %arg11[%c16, %c0_72] : memref<72x256xf32, #tpu.memory_space<vmem>>, vector<1x256xf32>
    tpu.vector_store %arg11[%c16, %c0_72], %120 {strides = array<i32>} : memref<72x256xf32, #tpu.memory_space<vmem>>, vector<1x256xf32>,
    %c0_73 = arith.constant 0 : index
    %c144 = arith.constant 144 : index
    %122 = vector.load %arg10[%c0_73, %c144] : memref<8x512xf32, #tpu.memory_space<vmem>>, vector<1x256xf32>
    %c17 = arith.constant 17 : index
    %c0_74 = arith.constant 0 : index
    %123 = vector.load %arg11[%c17, %c0_74] : memref<72x256xf32, #tpu.memory_space<vmem>>, vector<1x256xf32>
    tpu.vector_store %arg11[%c17, %c0_74], %122 {strides = array<i32>} : memref<72x256xf32, #tpu.memory_space<vmem>>, vector<1x256xf32>,
    %c0_75 = arith.constant 0 : index
    %c145 = arith.constant 145 : index
    %124 = vector.load %arg10[%c0_75, %c145] : memref<8x512xf32, #tpu.memory_space<vmem>>, vector<1x256xf32>
    %cst_76 = arith.constant 0.000000e+00 : f32
    %125 = vector.broadcast %cst_76 : f32 to vector<1x256xf32>
    %126 = arith.select %47, %124, %125 : vector<1x256xi1>, vector<1x256xf32>
    %c18 = arith.constant 18 : index
    %c0_77 = arith.constant 0 : index
    %127 = vector.load %arg11[%c18, %c0_77] : memref<72x256xf32, #tpu.memory_space<vmem>>, vector<1x256xf32>
    tpu.vector_store %arg11[%c18, %c0_77], %126 {strides = array<i32>} : memref<72x256xf32, #tpu.memory_space<vmem>>, vector<1x256xf32>,
    %c0_78 = arith.constant 0 : index
    %c146 = arith.constant 146 : index
    %128 = vector.load %arg10[%c0_78, %c146] : memref<8x512xf32, #tpu.memory_space<vmem>>, vector<1x256xf32>
    %cst_79 = arith.constant 0.000000e+00 : f32
    %129 = vector.broadcast %cst_79 : f32 to vector<1x256xf32>
    %130 = arith.select %56, %128, %129 : vector<1x256xi1>, vector<1x256xf32>
    %c19 = arith.constant 19 : index
    %c0_80 = arith.constant 0 : index
    %131 = vector.load %arg11[%c19, %c0_80] : memref<72x256xf32, #tpu.memory_space<vmem>>, vector<1x256xf32>
    tpu.vector_store %arg11[%c19, %c0_80], %130 {strides = array<i32>} : memref<72x256xf32, #tpu.memory_space<vmem>>, vector<1x256xf32>,
    %c0_81 = arith.constant 0 : index
    %c158 = arith.constant 158 : index
    %132 = vector.load %arg10[%c0_81, %c158] : memref<8x512xf32, #tpu.memory_space<vmem>>, vector<1x256xf32>
    %cst_82 = arith.constant 0.000000e+00 : f32
    %133 = vector.broadcast %cst_82 : f32 to vector<1x256xf32>
    %134 = arith.select %29, %132, %133 : vector<1x256xi1>, vector<1x256xf32>
    %c20 = arith.constant 20 : index
    %c0_83 = arith.constant 0 : index
    %135 = vector.load %arg11[%c20, %c0_83] : memref<72x256xf32, #tpu.memory_space<vmem>>, vector<1x256xf32>
    tpu.vector_store %arg11[%c20, %c0_83], %134 {strides = array<i32>} : memref<72x256xf32, #tpu.memory_space<vmem>>, vector<1x256xf32>,
    %c0_84 = arith.constant 0 : index
    %c159 = arith.constant 159 : index
    %136 = vector.load %arg10[%c0_84, %c159] : memref<8x512xf32, #tpu.memory_space<vmem>>, vector<1x256xf32>
    %cst_85 = arith.constant 0.000000e+00 : f32
    %137 = vector.broadcast %cst_85 : f32 to vector<1x256xf32>
    %138 = arith.select %38, %136, %137 : vector<1x256xi1>, vector<1x256xf32>
    %c21 = arith.constant 21 : index
    %c0_86 = arith.constant 0 : index
    %139 = vector.load %arg11[%c21, %c0_86] : memref<72x256xf32, #tpu.memory_space<vmem>>, vector<1x256xf32>
    tpu.vector_store %arg11[%c21, %c0_86], %138 {strides = array<i32>} : memref<72x256xf32, #tpu.memory_space<vmem>>, vector<1x256xf32>,
    %c0_87 = arith.constant 0 : index
    %c160 = arith.constant 160 : index
    %140 = vector.load %arg10[%c0_87, %c160] : memref<8x512xf32, #tpu.memory_space<vmem>>, vector<1x256xf32>
    %c22 = arith.constant 22 : index
    %c0_88 = arith.constant 0 : index
    %141 = vector.load %arg11[%c22, %c0_88] : memref<72x256xf32, #tpu.memory_space<vmem>>, vector<1x256xf32>
    tpu.vector_store %arg11[%c22, %c0_88], %140 {strides = array<i32>} : memref<72x256xf32, #tpu.memory_space<vmem>>, vector<1x256xf32>,
    %c0_89 = arith.constant 0 : index
    %c161 = arith.constant 161 : index
    %142 = vector.load %arg10[%c0_89, %c161] : memref<8x512xf32, #tpu.memory_space<vmem>>, vector<1x256xf32>
    %cst_90 = arith.constant 0.000000e+00 : f32
    %143 = vector.broadcast %cst_90 : f32 to vector<1x256xf32>
    %144 = arith.select %47, %142, %143 : vector<1x256xi1>, vector<1x256xf32>
    %c23 = arith.constant 23 : index
    %c0_91 = arith.constant 0 : index
    %145 = vector.load %arg11[%c23, %c0_91] : memref<72x256xf32, #tpu.memory_space<vmem>>, vector<1x256xf32>
    tpu.vector_store %arg11[%c23, %c0_91], %144 {strides = array<i32>} : memref<72x256xf32, #tpu.memory_space<vmem>>, vector<1x256xf32>,
    %c0_92 = arith.constant 0 : index
    %c162 = arith.constant 162 : index
    %146 = vector.load %arg10[%c0_92, %c162] : memref<8x512xf32, #tpu.memory_space<vmem>>, vector<1x256xf32>
    %cst_93 = arith.constant 0.000000e+00 : f32
    %147 = vector.broadcast %cst_93 : f32 to vector<1x256xf32>
    %148 = arith.select %56, %146, %147 : vector<1x256xi1>, vector<1x256xf32>
    %c24 = arith.constant 24 : index
    %c0_94 = arith.constant 0 : index
    %149 = vector.load %arg11[%c24, %c0_94] : memref<72x256xf32, #tpu.memory_space<vmem>>, vector<1x256xf32>
    tpu.vector_store %arg11[%c24, %c0_94], %148 {strides = array<i32>} : memref<72x256xf32, #tpu.memory_space<vmem>>, vector<1x256xf32>,
    %c0_95 = arith.constant 0 : index
    %c0_96 = arith.constant 0 : index
    %150 = vector.load %arg2[%c0_95, %c0_96] : memref<10x25xbf16, #tpu.memory_space<vmem>>, vector<10x25xbf16>
    %c0_97 = arith.constant 0 : index
    %c0_98 = arith.constant 0 : index
    %151 = vector.load %arg11[%c0_97, %c0_98] : memref<72x256xf32, #tpu.memory_space<vmem>>, vector<25x256xf32>
    %152 = arith.truncf %151 : vector<25x256xf32> to vector<25x256xbf16>
    %cst_99 = arith.constant dense<0.000000e+00> : vector<10x256xf32>
    %153 = tpu.matmul %150, %152, %cst_99 {dimension_numbers = #tpu.dot_dimension_numbers<[1], [0], [0], [1], [0, 0, 1, 1], [], []>} : vector<10x25xbf16>, vector<25x256xbf16>, vector<10x256xf32> -> vector<10x256xf32>
    %c0_100 = arith.constant 0 : index
    %c0_101 = arith.constant 0 : index
    %154 = vector.load %arg4[%c0_100, %c0_101] : memref<12x1xf32, #tpu.memory_space<vmem>>, vector<10x1xf32>
    %155 = vector.broadcast %154 : vector<10x1xf32> to vector<10x256xf32>
    %156 = arith.addf %153, %155 : vector<10x256xf32>
    %157 = vector.extract_strided_slice %156 {offsets = [0, 0], sizes = [8, 256], strides = [1, 1]} : vector<10x256xf32> to vector<8x256xf32>
    %158 = vector.extract_strided_slice %156 {offsets = [8, 0], sizes = [2, 256], strides = [1, 1]} : vector<10x256xf32> to vector<2x256xf32>
    %c0_102 = arith.constant 0 : index
    %c0_103 = arith.constant 0 : index
    %c0_104 = arith.constant 0 : index
    %159 = vector.load %arg8[%c0_102, %c0_103, %c0_104] : memref<2x46x1xf32, #tpu.memory_space<vmem>>, vector<1x32x1xf32>
    %160 = vector.shape_cast %159 : vector<1x32x1xf32> to vector<32x1xf32>
    %c0_105 = arith.constant 0 : index
    %c32 = arith.constant 32 : index
    %c0_106 = arith.constant 0 : index
    %161 = vector.load %arg8[%c0_105, %c32, %c0_106] : memref<2x46x1xf32, #tpu.memory_space<vmem>>, vector<1x6x1xf32>
    %162 = vector.shape_cast %161 : vector<1x6x1xf32> to vector<6x1xf32>
    %c0_107 = arith.constant 0 : index
    %c38 = arith.constant 38 : index
    %c0_108 = arith.constant 0 : index
    %163 = vector.load %arg8[%c0_107, %c38, %c0_108] : memref<2x46x1xf32, #tpu.memory_space<vmem>>, vector<1x8x1xf32>
    %164 = vector.shape_cast %163 : vector<1x8x1xf32> to vector<8x1xf32>
    %c0_109 = arith.constant 0 : index
    %c0_110 = arith.constant 0 : index
    %c0_111 = arith.constant 0 : index
    %165 = vector.load %arg5[%c0_109, %c0_110, %c0_111] : memref<2x32x8xbf16, #tpu.memory_space<vmem>>, vector<1x32x8xbf16>
    %166 = vector.shape_cast %165 : vector<1x32x8xbf16> to vector<32x8xbf16>
    %167 = arith.truncf %157 : vector<8x256xf32> to vector<8x256xbf16>
    %cst_112 = arith.constant dense<0.000000e+00> : vector<32x256xf32>
    %168 = tpu.matmul %166, %167, %cst_112 {dimension_numbers = #tpu.dot_dimension_numbers<[1], [0], [0], [1], [0, 0, 1, 1], [], []>} : vector<32x8xbf16>, vector<8x256xbf16>, vector<32x256xf32> -> vector<32x256xf32>
    %169 = vector.broadcast %160 : vector<32x1xf32> to vector<32x256xf32>
    %170 = arith.addf %168, %169 : vector<32x256xf32>
    %cst_113 = arith.constant 0.000000e+00 : f32
    %171 = vector.broadcast %cst_113 : f32 to vector<32x256xf32>
    %172 = arith.maximumf %170, %171 : vector<32x256xf32>
    %c0_114 = arith.constant 0 : index
    %c0_115 = arith.constant 0 : index
    %c0_116 = arith.constant 0 : index
    %173 = vector.load %arg6[%c0_114, %c0_115, %c0_116] : memref<2x6x32xbf16, #tpu.memory_space<vmem>>, vector<1x6x32xbf16>
    %174 = vector.shape_cast %173 : vector<1x6x32xbf16> to vector<6x32xbf16>
    %175 = arith.truncf %172 : vector<32x256xf32> to vector<32x256xbf16>
    %cst_117 = arith.constant dense<0.000000e+00> : vector<6x256xf32>
    %176 = tpu.matmul %174, %175, %cst_117 {dimension_numbers = #tpu.dot_dimension_numbers<[1], [0], [0], [1], [0, 0, 1, 1], [], []>} : vector<6x32xbf16>, vector<32x256xbf16>, vector<6x256xf32> -> vector<6x256xf32>
    %177 = vector.broadcast %162 : vector<6x1xf32> to vector<6x256xf32>
    %178 = arith.addf %176, %177 : vector<6x256xf32>
    %c0_118 = arith.constant 0 : index
    %c128_119 = arith.constant 128 : index
    %179 = vector.load %arg10[%c0_118, %c128_119] : memref<8x512xf32, #tpu.memory_space<vmem>>, vector<6x256xf32>
    tpu.vector_store %arg10[%c0_118, %c128_119], %178 {strides = array<i32>} : memref<8x512xf32, #tpu.memory_space<vmem>>, vector<6x256xf32>,
    %c0_120 = arith.constant 0 : index
    %c111_121 = arith.constant 111 : index
    %180 = vector.load %arg10[%c0_120, %c111_121] : memref<8x512xf32, #tpu.memory_space<vmem>>, vector<6x256xf32>
    %cst_122 = arith.constant 0.000000e+00 : f32
    %181 = vector.shape_cast %38 : vector<1x256xi1> to vector<1x256xi1>
    %182 = vector.broadcast %181 : vector<1x256xi1> to vector<6x256xi1>
    %183 = vector.broadcast %cst_122 : f32 to vector<6x256xf32>
    %184 = arith.select %182, %180, %183 : vector<6x256xi1>, vector<6x256xf32>
    %c0_123 = arith.constant 0 : index
    %c0_124 = arith.constant 0 : index
    %185 = vector.load %arg11[%c0_123, %c0_124] : memref<72x256xf32, #tpu.memory_space<vmem>>, vector<6x256xf32>
    tpu.vector_store %arg11[%c0_123, %c0_124], %184 {strides = array<i32>} : memref<72x256xf32, #tpu.memory_space<vmem>>, vector<6x256xf32>,
    %c0_125 = arith.constant 0 : index
    %c112_126 = arith.constant 112 : index
    %186 = vector.load %arg10[%c0_125, %c112_126] : memref<8x512xf32, #tpu.memory_space<vmem>>, vector<6x256xf32>
    %c6_127 = arith.constant 6 : index
    %c0_128 = arith.constant 0 : index
    %187 = vector.load %arg11[%c6_127, %c0_128] : memref<72x256xf32, #tpu.memory_space<vmem>>, vector<6x256xf32>
    tpu.vector_store %arg11[%c6_127, %c0_128], %186 {strides = array<i32>} : memref<72x256xf32, #tpu.memory_space<vmem>>, vector<6x256xf32>,
    %c0_129 = arith.constant 0 : index
    %c113_130 = arith.constant 113 : index
    %188 = vector.load %arg10[%c0_129, %c113_130] : memref<8x512xf32, #tpu.memory_space<vmem>>, vector<6x256xf32>
    %cst_131 = arith.constant 0.000000e+00 : f32
    %189 = vector.shape_cast %47 : vector<1x256xi1> to vector<1x256xi1>
    %190 = vector.broadcast %189 : vector<1x256xi1> to vector<6x256xi1>
    %191 = vector.broadcast %cst_131 : f32 to vector<6x256xf32>
    %192 = arith.select %190, %188, %191 : vector<6x256xi1>, vector<6x256xf32>
    %c12_132 = arith.constant 12 : index
    %c0_133 = arith.constant 0 : index
    %193 = vector.load %arg11[%c12_132, %c0_133] : memref<72x256xf32, #tpu.memory_space<vmem>>, vector<6x256xf32>
    tpu.vector_store %arg11[%c12_132, %c0_133], %192 {strides = array<i32>} : memref<72x256xf32, #tpu.memory_space<vmem>>, vector<6x256xf32>,
    %c0_134 = arith.constant 0 : index
    %c127_135 = arith.constant 127 : index
    %194 = vector.load %arg10[%c0_134, %c127_135] : memref<8x512xf32, #tpu.memory_space<vmem>>, vector<6x256xf32>
    %cst_136 = arith.constant 0.000000e+00 : f32
    %195 = vector.shape_cast %38 : vector<1x256xi1> to vector<1x256xi1>
    %196 = vector.broadcast %195 : vector<1x256xi1> to vector<6x256xi1>
    %197 = vector.broadcast %cst_136 : f32 to vector<6x256xf32>
    %198 = arith.select %196, %194, %197 : vector<6x256xi1>, vector<6x256xf32>
    %c18_137 = arith.constant 18 : index
    %c0_138 = arith.constant 0 : index
    %199 = vector.load %arg11[%c18_137, %c0_138] : memref<72x256xf32, #tpu.memory_space<vmem>>, vector<6x256xf32>
    tpu.vector_store %arg11[%c18_137, %c0_138], %198 {strides = array<i32>} : memref<72x256xf32, #tpu.memory_space<vmem>>, vector<6x256xf32>,
    %c0_139 = arith.constant 0 : index
    %c128_140 = arith.constant 128 : index
    %200 = vector.load %arg10[%c0_139, %c128_140] : memref<8x512xf32, #tpu.memory_space<vmem>>, vector<6x256xf32>
    %c24_141 = arith.constant 24 : index
    %c0_142 = arith.constant 0 : index
    %201 = vector.load %arg11[%c24_141, %c0_142] : memref<72x256xf32, #tpu.memory_space<vmem>>, vector<6x256xf32>
    tpu.vector_store %arg11[%c24_141, %c0_142], %200 {strides = array<i32>} : memref<72x256xf32, #tpu.memory_space<vmem>>, vector<6x256xf32>,
    %c0_143 = arith.constant 0 : index
    %c129_144 = arith.constant 129 : index
    %202 = vector.load %arg10[%c0_143, %c129_144] : memref<8x512xf32, #tpu.memory_space<vmem>>, vector<6x256xf32>
    %cst_145 = arith.constant 0.000000e+00 : f32
    %203 = vector.shape_cast %47 : vector<1x256xi1> to vector<1x256xi1>
    %204 = vector.broadcast %203 : vector<1x256xi1> to vector<6x256xi1>
    %205 = vector.broadcast %cst_145 : f32 to vector<6x256xf32>
    %206 = arith.select %204, %202, %205 : vector<6x256xi1>, vector<6x256xf32>
    %c30 = arith.constant 30 : index
    %c0_146 = arith.constant 0 : index
    %207 = vector.load %arg11[%c30, %c0_146] : memref<72x256xf32, #tpu.memory_space<vmem>>, vector<6x256xf32>
    tpu.vector_store %arg11[%c30, %c0_146], %206 {strides = array<i32>} : memref<72x256xf32, #tpu.memory_space<vmem>>, vector<6x256xf32>,
    %c0_147 = arith.constant 0 : index
    %c143_148 = arith.constant 143 : index
    %208 = vector.load %arg10[%c0_147, %c143_148] : memref<8x512xf32, #tpu.memory_space<vmem>>, vector<6x256xf32>
    %cst_149 = arith.constant 0.000000e+00 : f32
    %209 = vector.shape_cast %38 : vector<1x256xi1> to vector<1x256xi1>
    %210 = vector.broadcast %209 : vector<1x256xi1> to vector<6x256xi1>
    %211 = vector.broadcast %cst_149 : f32 to vector<6x256xf32>
    %212 = arith.select %210, %208, %211 : vector<6x256xi1>, vector<6x256xf32>
    %c36 = arith.constant 36 : index
    %c0_150 = arith.constant 0 : index
    %213 = vector.load %arg11[%c36, %c0_150] : memref<72x256xf32, #tpu.memory_space<vmem>>, vector<6x256xf32>
    tpu.vector_store %arg11[%c36, %c0_150], %212 {strides = array<i32>} : memref<72x256xf32, #tpu.memory_space<vmem>>, vector<6x256xf32>,
    %c0_151 = arith.constant 0 : index
    %c144_152 = arith.constant 144 : index
    %214 = vector.load %arg10[%c0_151, %c144_152] : memref<8x512xf32, #tpu.memory_space<vmem>>, vector<6x256xf32>
    %c42 = arith.constant 42 : index
    %c0_153 = arith.constant 0 : index
    %215 = vector.load %arg11[%c42, %c0_153] : memref<72x256xf32, #tpu.memory_space<vmem>>, vector<6x256xf32>
    tpu.vector_store %arg11[%c42, %c0_153], %214 {strides = array<i32>} : memref<72x256xf32, #tpu.memory_space<vmem>>, vector<6x256xf32>,
    %c0_154 = arith.constant 0 : index
    %c145_155 = arith.constant 145 : index
    %216 = vector.load %arg10[%c0_154, %c145_155] : memref<8x512xf32, #tpu.memory_space<vmem>>, vector<6x256xf32>
    %cst_156 = arith.constant 0.000000e+00 : f32
    %217 = vector.shape_cast %47 : vector<1x256xi1> to vector<1x256xi1>
    %218 = vector.broadcast %217 : vector<1x256xi1> to vector<6x256xi1>
    %219 = vector.broadcast %cst_156 : f32 to vector<6x256xf32>
    %220 = arith.select %218, %216, %219 : vector<6x256xi1>, vector<6x256xf32>
    %c48 = arith.constant 48 : index
    %c0_157 = arith.constant 0 : index
    %221 = vector.load %arg11[%c48, %c0_157] : memref<72x256xf32, #tpu.memory_space<vmem>>, vector<6x256xf32>
    tpu.vector_store %arg11[%c48, %c0_157], %220 {strides = array<i32>} : memref<72x256xf32, #tpu.memory_space<vmem>>, vector<6x256xf32>,
    %c0_158 = arith.constant 0 : index
    %c0_159 = arith.constant 0 : index
    %c0_160 = arith.constant 0 : index
    %222 = vector.load %arg7[%c0_158, %c0_159, %c0_160] : memref<2x8x54xbf16, #tpu.memory_space<vmem>>, vector<1x8x54xbf16>
    %223 = vector.shape_cast %222 : vector<1x8x54xbf16> to vector<8x54xbf16>
    %c0_161 = arith.constant 0 : index
    %c0_162 = arith.constant 0 : index
    %224 = vector.load %arg11[%c0_161, %c0_162] : memref<72x256xf32, #tpu.memory_space<vmem>>, vector<54x256xf32>
    %225 = arith.truncf %224 : vector<54x256xf32> to vector<54x256xbf16>
    %cst_163 = arith.constant dense<0.000000e+00> : vector<8x256xf32>
    %226 = tpu.matmul %223, %225, %cst_163 {dimension_numbers = #tpu.dot_dimension_numbers<[1], [0], [0], [1], [0, 0, 1, 1], [], []>} : vector<8x54xbf16>, vector<54x256xbf16>, vector<8x256xf32> -> vector<8x256xf32>
    %227 = vector.broadcast %164 : vector<8x1xf32> to vector<8x256xf32>
    %228 = arith.addf %226, %227 : vector<8x256xf32>
    %229 = arith.addf %228, %157 : vector<8x256xf32>
    %c1_164 = arith.constant 1 : index
    %c0_165 = arith.constant 0 : index
    %c0_166 = arith.constant 0 : index
    %230 = vector.load %arg8[%c1_164, %c0_165, %c0_166] : memref<2x46x1xf32, #tpu.memory_space<vmem>>, vector<1x32x1xf32>
    %231 = vector.shape_cast %230 : vector<1x32x1xf32> to vector<32x1xf32>
    %c1_167 = arith.constant 1 : index
    %c32_168 = arith.constant 32 : index
    %c0_169 = arith.constant 0 : index
    %232 = vector.load %arg8[%c1_167, %c32_168, %c0_169] : memref<2x46x1xf32, #tpu.memory_space<vmem>>, vector<1x6x1xf32>
    %233 = vector.shape_cast %232 : vector<1x6x1xf32> to vector<6x1xf32>
    %c1_170 = arith.constant 1 : index
    %c38_171 = arith.constant 38 : index
    %c0_172 = arith.constant 0 : index
    %234 = vector.load %arg8[%c1_170, %c38_171, %c0_172] : memref<2x46x1xf32, #tpu.memory_space<vmem>>, vector<1x8x1xf32>
    %235 = vector.shape_cast %234 : vector<1x8x1xf32> to vector<8x1xf32>
    %c1_173 = arith.constant 1 : index
    %c0_174 = arith.constant 0 : index
    %c0_175 = arith.constant 0 : index
    %236 = vector.load %arg5[%c1_173, %c0_174, %c0_175] : memref<2x32x8xbf16, #tpu.memory_space<vmem>>, vector<1x32x8xbf16>
    %237 = vector.shape_cast %236 : vector<1x32x8xbf16> to vector<32x8xbf16>
    %238 = arith.truncf %229 : vector<8x256xf32> to vector<8x256xbf16>
    %cst_176 = arith.constant dense<0.000000e+00> : vector<32x256xf32>
    %239 = tpu.matmul %237, %238, %cst_176 {dimension_numbers = #tpu.dot_dimension_numbers<[1], [0], [0], [1], [0, 0, 1, 1], [], []>} : vector<32x8xbf16>, vector<8x256xbf16>, vector<32x256xf32> -> vector<32x256xf32>
    %240 = vector.broadcast %231 : vector<32x1xf32> to vector<32x256xf32>
    %241 = arith.addf %239, %240 : vector<32x256xf32>
    %cst_177 = arith.constant 0.000000e+00 : f32
    %242 = vector.broadcast %cst_177 : f32 to vector<32x256xf32>
    %243 = arith.maximumf %241, %242 : vector<32x256xf32>
    %c1_178 = arith.constant 1 : index
    %c0_179 = arith.constant 0 : index
    %c0_180 = arith.constant 0 : index
    %244 = vector.load %arg6[%c1_178, %c0_179, %c0_180] : memref<2x6x32xbf16, #tpu.memory_space<vmem>>, vector<1x6x32xbf16>
    %245 = vector.shape_cast %244 : vector<1x6x32xbf16> to vector<6x32xbf16>
    %246 = arith.truncf %243 : vector<32x256xf32> to vector<32x256xbf16>
    %cst_181 = arith.constant dense<0.000000e+00> : vector<6x256xf32>
    %247 = tpu.matmul %245, %246, %cst_181 {dimension_numbers = #tpu.dot_dimension_numbers<[1], [0], [0], [1], [0, 0, 1, 1], [], []>} : vector<6x32xbf16>, vector<32x256xbf16>, vector<6x256xf32> -> vector<6x256xf32>
    %248 = vector.broadcast %233 : vector<6x1xf32> to vector<6x256xf32>
    %249 = arith.addf %247, %248 : vector<6x256xf32>
    %c0_182 = arith.constant 0 : index
    %c128_183 = arith.constant 128 : index
    %250 = vector.load %arg10[%c0_182, %c128_183] : memref<8x512xf32, #tpu.memory_space<vmem>>, vector<6x256xf32>
    tpu.vector_store %arg10[%c0_182, %c128_183], %249 {strides = array<i32>} : memref<8x512xf32, #tpu.memory_space<vmem>>, vector<6x256xf32>,
    %c0_184 = arith.constant 0 : index
    %c111_185 = arith.constant 111 : index
    %251 = vector.load %arg10[%c0_184, %c111_185] : memref<8x512xf32, #tpu.memory_space<vmem>>, vector<6x256xf32>
    %cst_186 = arith.constant 0.000000e+00 : f32
    %252 = vector.shape_cast %38 : vector<1x256xi1> to vector<1x256xi1>
    %253 = vector.broadcast %252 : vector<1x256xi1> to vector<6x256xi1>
    %254 = vector.broadcast %cst_186 : f32 to vector<6x256xf32>
    %255 = arith.select %253, %251, %254 : vector<6x256xi1>, vector<6x256xf32>
    %c0_187 = arith.constant 0 : index
    %c0_188 = arith.constant 0 : index
    %256 = vector.load %arg11[%c0_187, %c0_188] : memref<72x256xf32, #tpu.memory_space<vmem>>, vector<6x256xf32>
    tpu.vector_store %arg11[%c0_187, %c0_188], %255 {strides = array<i32>} : memref<72x256xf32, #tpu.memory_space<vmem>>, vector<6x256xf32>,
    %c0_189 = arith.constant 0 : index
    %c112_190 = arith.constant 112 : index
    %257 = vector.load %arg10[%c0_189, %c112_190] : memref<8x512xf32, #tpu.memory_space<vmem>>, vector<6x256xf32>
    %c6_191 = arith.constant 6 : index
    %c0_192 = arith.constant 0 : index
    %258 = vector.load %arg11[%c6_191, %c0_192] : memref<72x256xf32, #tpu.memory_space<vmem>>, vector<6x256xf32>
    tpu.vector_store %arg11[%c6_191, %c0_192], %257 {strides = array<i32>} : memref<72x256xf32, #tpu.memory_space<vmem>>, vector<6x256xf32>,
    %c0_193 = arith.constant 0 : index
    %c113_194 = arith.constant 113 : index
    %259 = vector.load %arg10[%c0_193, %c113_194] : memref<8x512xf32, #tpu.memory_space<vmem>>, vector<6x256xf32>
    %cst_195 = arith.constant 0.000000e+00 : f32
    %260 = vector.shape_cast %47 : vector<1x256xi1> to vector<1x256xi1>
    %261 = vector.broadcast %260 : vector<1x256xi1> to vector<6x256xi1>
    %262 = vector.broadcast %cst_195 : f32 to vector<6x256xf32>
    %263 = arith.select %261, %259, %262 : vector<6x256xi1>, vector<6x256xf32>
    %c12_196 = arith.constant 12 : index
    %c0_197 = arith.constant 0 : index
    %264 = vector.load %arg11[%c12_196, %c0_197] : memref<72x256xf32, #tpu.memory_space<vmem>>, vector<6x256xf32>
    tpu.vector_store %arg11[%c12_196, %c0_197], %263 {strides = array<i32>} : memref<72x256xf32, #tpu.memory_space<vmem>>, vector<6x256xf32>,
    %c0_198 = arith.constant 0 : index
    %c127_199 = arith.constant 127 : index
    %265 = vector.load %arg10[%c0_198, %c127_199] : memref<8x512xf32, #tpu.memory_space<vmem>>, vector<6x256xf32>
    %cst_200 = arith.constant 0.000000e+00 : f32
    %266 = vector.shape_cast %38 : vector<1x256xi1> to vector<1x256xi1>
    %267 = vector.broadcast %266 : vector<1x256xi1> to vector<6x256xi1>
    %268 = vector.broadcast %cst_200 : f32 to vector<6x256xf32>
    %269 = arith.select %267, %265, %268 : vector<6x256xi1>, vector<6x256xf32>
    %c18_201 = arith.constant 18 : index
    %c0_202 = arith.constant 0 : index
    %270 = vector.load %arg11[%c18_201, %c0_202] : memref<72x256xf32, #tpu.memory_space<vmem>>, vector<6x256xf32>
    tpu.vector_store %arg11[%c18_201, %c0_202], %269 {strides = array<i32>} : memref<72x256xf32, #tpu.memory_space<vmem>>, vector<6x256xf32>,
    %c0_203 = arith.constant 0 : index
    %c128_204 = arith.constant 128 : index
    %271 = vector.load %arg10[%c0_203, %c128_204] : memref<8x512xf32, #tpu.memory_space<vmem>>, vector<6x256xf32>
    %c24_205 = arith.constant 24 : index
    %c0_206 = arith.constant 0 : index
    %272 = vector.load %arg11[%c24_205, %c0_206] : memref<72x256xf32, #tpu.memory_space<vmem>>, vector<6x256xf32>
    tpu.vector_store %arg11[%c24_205, %c0_206], %271 {strides = array<i32>} : memref<72x256xf32, #tpu.memory_space<vmem>>, vector<6x256xf32>,
    %c0_207 = arith.constant 0 : index
    %c129_208 = arith.constant 129 : index
    %273 = vector.load %arg10[%c0_207, %c129_208] : memref<8x512xf32, #tpu.memory_space<vmem>>, vector<6x256xf32>
    %cst_209 = arith.constant 0.000000e+00 : f32
    %274 = vector.shape_cast %47 : vector<1x256xi1> to vector<1x256xi1>
    %275 = vector.broadcast %274 : vector<1x256xi1> to vector<6x256xi1>
    %276 = vector.broadcast %cst_209 : f32 to vector<6x256xf32>
    %277 = arith.select %275, %273, %276 : vector<6x256xi1>, vector<6x256xf32>
    %c30_210 = arith.constant 30 : index
    %c0_211 = arith.constant 0 : index
    %278 = vector.load %arg11[%c30_210, %c0_211] : memref<72x256xf32, #tpu.memory_space<vmem>>, vector<6x256xf32>
    tpu.vector_store %arg11[%c30_210, %c0_211], %277 {strides = array<i32>} : memref<72x256xf32, #tpu.memory_space<vmem>>, vector<6x256xf32>,
    %c0_212 = arith.constant 0 : index
    %c143_213 = arith.constant 143 : index
    %279 = vector.load %arg10[%c0_212, %c143_213] : memref<8x512xf32, #tpu.memory_space<vmem>>, vector<6x256xf32>
    %cst_214 = arith.constant 0.000000e+00 : f32
    %280 = vector.shape_cast %38 : vector<1x256xi1> to vector<1x256xi1>
    %281 = vector.broadcast %280 : vector<1x256xi1> to vector<6x256xi1>
    %282 = vector.broadcast %cst_214 : f32 to vector<6x256xf32>
    %283 = arith.select %281, %279, %282 : vector<6x256xi1>, vector<6x256xf32>
    %c36_215 = arith.constant 36 : index
    %c0_216 = arith.constant 0 : index
    %284 = vector.load %arg11[%c36_215, %c0_216] : memref<72x256xf32, #tpu.memory_space<vmem>>, vector<6x256xf32>
    tpu.vector_store %arg11[%c36_215, %c0_216], %283 {strides = array<i32>} : memref<72x256xf32, #tpu.memory_space<vmem>>, vector<6x256xf32>,
    %c0_217 = arith.constant 0 : index
    %c144_218 = arith.constant 144 : index
    %285 = vector.load %arg10[%c0_217, %c144_218] : memref<8x512xf32, #tpu.memory_space<vmem>>, vector<6x256xf32>
    %c42_219 = arith.constant 42 : index
    %c0_220 = arith.constant 0 : index
    %286 = vector.load %arg11[%c42_219, %c0_220] : memref<72x256xf32, #tpu.memory_space<vmem>>, vector<6x256xf32>
    tpu.vector_store %arg11[%c42_219, %c0_220], %285 {strides = array<i32>} : memref<72x256xf32, #tpu.memory_space<vmem>>, vector<6x256xf32>,
    %c0_221 = arith.constant 0 : index
    %c145_222 = arith.constant 145 : index
    %287 = vector.load %arg10[%c0_221, %c145_222] : memref<8x512xf32, #tpu.memory_space<vmem>>, vector<6x256xf32>
    %cst_223 = arith.constant 0.000000e+00 : f32
    %288 = vector.shape_cast %47 : vector<1x256xi1> to vector<1x256xi1>
    %289 = vector.broadcast %288 : vector<1x256xi1> to vector<6x256xi1>
    %290 = vector.broadcast %cst_223 : f32 to vector<6x256xf32>
    %291 = arith.select %289, %287, %290 : vector<6x256xi1>, vector<6x256xf32>
    %c48_224 = arith.constant 48 : index
    %c0_225 = arith.constant 0 : index
    %292 = vector.load %arg11[%c48_224, %c0_225] : memref<72x256xf32, #tpu.memory_space<vmem>>, vector<6x256xf32>
    tpu.vector_store %arg11[%c48_224, %c0_225], %291 {strides = array<i32>} : memref<72x256xf32, #tpu.memory_space<vmem>>, vector<6x256xf32>,
    %c1_226 = arith.constant 1 : index
    %c0_227 = arith.constant 0 : index
    %c0_228 = arith.constant 0 : index
    %293 = vector.load %arg7[%c1_226, %c0_227, %c0_228] : memref<2x8x54xbf16, #tpu.memory_space<vmem>>, vector<1x8x54xbf16>
    %294 = vector.shape_cast %293 : vector<1x8x54xbf16> to vector<8x54xbf16>
    %c0_229 = arith.constant 0 : index
    %c0_230 = arith.constant 0 : index
    %295 = vector.load %arg11[%c0_229, %c0_230] : memref<72x256xf32, #tpu.memory_space<vmem>>, vector<54x256xf32>
    %296 = arith.truncf %295 : vector<54x256xf32> to vector<54x256xbf16>
    %cst_231 = arith.constant dense<0.000000e+00> : vector<8x256xf32>
    %297 = tpu.matmul %294, %296, %cst_231 {dimension_numbers = #tpu.dot_dimension_numbers<[1], [0], [0], [1], [0, 0, 1, 1], [], []>} : vector<8x54xbf16>, vector<54x256xbf16>, vector<8x256xf32> -> vector<8x256xf32>
    %298 = vector.broadcast %235 : vector<8x1xf32> to vector<8x256xf32>
    %299 = arith.addf %297, %298 : vector<8x256xf32>
    %300 = arith.addf %299, %229 : vector<8x256xf32>
    %c0_232 = arith.constant 0 : index
    %c128_233 = arith.constant 128 : index
    %301 = vector.load %arg10[%c0_232, %c128_233] : memref<8x512xf32, #tpu.memory_space<vmem>>, vector<8x256xf32>
    tpu.vector_store %arg10[%c0_232, %c128_233], %300 {strides = array<i32>} : memref<8x512xf32, #tpu.memory_space<vmem>>, vector<8x256xf32>,
    %c0_234 = arith.constant 0 : index
    %c111_235 = arith.constant 111 : index
    %302 = vector.load %arg10[%c0_234, %c111_235] : memref<8x512xf32, #tpu.memory_space<vmem>>, vector<8x256xf32>
    %cst_236 = arith.constant 0.000000e+00 : f32
    %303 = vector.shape_cast %38 : vector<1x256xi1> to vector<1x256xi1>
    %304 = vector.broadcast %303 : vector<1x256xi1> to vector<8x256xi1>
    %305 = vector.broadcast %cst_236 : f32 to vector<8x256xf32>
    %306 = arith.select %304, %302, %305 : vector<8x256xi1>, vector<8x256xf32>
    %c0_237 = arith.constant 0 : index
    %c0_238 = arith.constant 0 : index
    %307 = vector.load %arg11[%c0_237, %c0_238] : memref<72x256xf32, #tpu.memory_space<vmem>>, vector<8x256xf32>
    tpu.vector_store %arg11[%c0_237, %c0_238], %306 {strides = array<i32>} : memref<72x256xf32, #tpu.memory_space<vmem>>, vector<8x256xf32>,
    %c0_239 = arith.constant 0 : index
    %c112_240 = arith.constant 112 : index
    %308 = vector.load %arg10[%c0_239, %c112_240] : memref<8x512xf32, #tpu.memory_space<vmem>>, vector<8x256xf32>
    %c8_241 = arith.constant 8 : index
    %c0_242 = arith.constant 0 : index
    %309 = vector.load %arg11[%c8_241, %c0_242] : memref<72x256xf32, #tpu.memory_space<vmem>>, vector<8x256xf32>
    tpu.vector_store %arg11[%c8_241, %c0_242], %308 {strides = array<i32>} : memref<72x256xf32, #tpu.memory_space<vmem>>, vector<8x256xf32>,
    %c0_243 = arith.constant 0 : index
    %c113_244 = arith.constant 113 : index
    %310 = vector.load %arg10[%c0_243, %c113_244] : memref<8x512xf32, #tpu.memory_space<vmem>>, vector<8x256xf32>
    %cst_245 = arith.constant 0.000000e+00 : f32
    %311 = vector.shape_cast %47 : vector<1x256xi1> to vector<1x256xi1>
    %312 = vector.broadcast %311 : vector<1x256xi1> to vector<8x256xi1>
    %313 = vector.broadcast %cst_245 : f32 to vector<8x256xf32>
    %314 = arith.select %312, %310, %313 : vector<8x256xi1>, vector<8x256xf32>
    %c16_246 = arith.constant 16 : index
    %c0_247 = arith.constant 0 : index
    %315 = vector.load %arg11[%c16_246, %c0_247] : memref<72x256xf32, #tpu.memory_space<vmem>>, vector<8x256xf32>
    tpu.vector_store %arg11[%c16_246, %c0_247], %314 {strides = array<i32>} : memref<72x256xf32, #tpu.memory_space<vmem>>, vector<8x256xf32>,
    %c0_248 = arith.constant 0 : index
    %c127_249 = arith.constant 127 : index
    %316 = vector.load %arg10[%c0_248, %c127_249] : memref<8x512xf32, #tpu.memory_space<vmem>>, vector<8x256xf32>
    %cst_250 = arith.constant 0.000000e+00 : f32
    %317 = vector.shape_cast %38 : vector<1x256xi1> to vector<1x256xi1>
    %318 = vector.broadcast %317 : vector<1x256xi1> to vector<8x256xi1>
    %319 = vector.broadcast %cst_250 : f32 to vector<8x256xf32>
    %320 = arith.select %318, %316, %319 : vector<8x256xi1>, vector<8x256xf32>
    %c24_251 = arith.constant 24 : index
    %c0_252 = arith.constant 0 : index
    %321 = vector.load %arg11[%c24_251, %c0_252] : memref<72x256xf32, #tpu.memory_space<vmem>>, vector<8x256xf32>
    tpu.vector_store %arg11[%c24_251, %c0_252], %320 {strides = array<i32>} : memref<72x256xf32, #tpu.memory_space<vmem>>, vector<8x256xf32>,
    %c0_253 = arith.constant 0 : index
    %c128_254 = arith.constant 128 : index
    %322 = vector.load %arg10[%c0_253, %c128_254] : memref<8x512xf32, #tpu.memory_space<vmem>>, vector<8x256xf32>
    %c32_255 = arith.constant 32 : index
    %c0_256 = arith.constant 0 : index
    %323 = vector.load %arg11[%c32_255, %c0_256] : memref<72x256xf32, #tpu.memory_space<vmem>>, vector<8x256xf32>
    tpu.vector_store %arg11[%c32_255, %c0_256], %322 {strides = array<i32>} : memref<72x256xf32, #tpu.memory_space<vmem>>, vector<8x256xf32>,
    %c0_257 = arith.constant 0 : index
    %c129_258 = arith.constant 129 : index
    %324 = vector.load %arg10[%c0_257, %c129_258] : memref<8x512xf32, #tpu.memory_space<vmem>>, vector<8x256xf32>
    %cst_259 = arith.constant 0.000000e+00 : f32
    %325 = vector.shape_cast %47 : vector<1x256xi1> to vector<1x256xi1>
    %326 = vector.broadcast %325 : vector<1x256xi1> to vector<8x256xi1>
    %327 = vector.broadcast %cst_259 : f32 to vector<8x256xf32>
    %328 = arith.select %326, %324, %327 : vector<8x256xi1>, vector<8x256xf32>
    %c40 = arith.constant 40 : index
    %c0_260 = arith.constant 0 : index
    %329 = vector.load %arg11[%c40, %c0_260] : memref<72x256xf32, #tpu.memory_space<vmem>>, vector<8x256xf32>
    tpu.vector_store %arg11[%c40, %c0_260], %328 {strides = array<i32>} : memref<72x256xf32, #tpu.memory_space<vmem>>, vector<8x256xf32>,
    %c0_261 = arith.constant 0 : index
    %c143_262 = arith.constant 143 : index
    %330 = vector.load %arg10[%c0_261, %c143_262] : memref<8x512xf32, #tpu.memory_space<vmem>>, vector<8x256xf32>
    %cst_263 = arith.constant 0.000000e+00 : f32
    %331 = vector.shape_cast %38 : vector<1x256xi1> to vector<1x256xi1>
    %332 = vector.broadcast %331 : vector<1x256xi1> to vector<8x256xi1>
    %333 = vector.broadcast %cst_263 : f32 to vector<8x256xf32>
    %334 = arith.select %332, %330, %333 : vector<8x256xi1>, vector<8x256xf32>
    %c48_264 = arith.constant 48 : index
    %c0_265 = arith.constant 0 : index
    %335 = vector.load %arg11[%c48_264, %c0_265] : memref<72x256xf32, #tpu.memory_space<vmem>>, vector<8x256xf32>
    tpu.vector_store %arg11[%c48_264, %c0_265], %334 {strides = array<i32>} : memref<72x256xf32, #tpu.memory_space<vmem>>, vector<8x256xf32>,
    %c0_266 = arith.constant 0 : index
    %c144_267 = arith.constant 144 : index
    %336 = vector.load %arg10[%c0_266, %c144_267] : memref<8x512xf32, #tpu.memory_space<vmem>>, vector<8x256xf32>
    %c56 = arith.constant 56 : index
    %c0_268 = arith.constant 0 : index
    %337 = vector.load %arg11[%c56, %c0_268] : memref<72x256xf32, #tpu.memory_space<vmem>>, vector<8x256xf32>
    tpu.vector_store %arg11[%c56, %c0_268], %336 {strides = array<i32>} : memref<72x256xf32, #tpu.memory_space<vmem>>, vector<8x256xf32>,
    %c0_269 = arith.constant 0 : index
    %c145_270 = arith.constant 145 : index
    %338 = vector.load %arg10[%c0_269, %c145_270] : memref<8x512xf32, #tpu.memory_space<vmem>>, vector<8x256xf32>
    %cst_271 = arith.constant 0.000000e+00 : f32
    %339 = vector.shape_cast %47 : vector<1x256xi1> to vector<1x256xi1>
    %340 = vector.broadcast %339 : vector<1x256xi1> to vector<8x256xi1>
    %341 = vector.broadcast %cst_271 : f32 to vector<8x256xf32>
    %342 = arith.select %340, %338, %341 : vector<8x256xi1>, vector<8x256xf32>
    %c64 = arith.constant 64 : index
    %c0_272 = arith.constant 0 : index
    %343 = vector.load %arg11[%c64, %c0_272] : memref<72x256xf32, #tpu.memory_space<vmem>>, vector<8x256xf32>
    tpu.vector_store %arg11[%c64, %c0_272], %342 {strides = array<i32>} : memref<72x256xf32, #tpu.memory_space<vmem>>, vector<8x256xf32>,
    %c0_273 = arith.constant 0 : index
    %c0_274 = arith.constant 0 : index
    %344 = vector.load %arg3[%c0_273, %c0_274] : memref<2x72xbf16, #tpu.memory_space<vmem>>, vector<2x72xbf16>
    %c0_275 = arith.constant 0 : index
    %c0_276 = arith.constant 0 : index
    %345 = vector.load %arg11[%c0_275, %c0_276] : memref<72x256xf32, #tpu.memory_space<vmem>>, vector<72x256xf32>
    %346 = arith.truncf %345 : vector<72x256xf32> to vector<72x256xbf16>
    %cst_277 = arith.constant dense<0.000000e+00> : vector<2x256xf32>
    %347 = tpu.matmul %344, %346, %cst_277 {dimension_numbers = #tpu.dot_dimension_numbers<[1], [0], [0], [1], [0, 0, 1, 1], [], []>} : vector<2x72xbf16>, vector<72x256xbf16>, vector<2x256xf32> -> vector<2x256xf32>
    %c10_278 = arith.constant 10 : index
    %c0_279 = arith.constant 0 : index
    %348 = vector.load %arg4[%c10_278, %c0_279] : memref<12x1xf32, #tpu.memory_space<vmem>>, vector<2x1xf32>
    %349 = vector.broadcast %348 : vector<2x1xf32> to vector<2x256xf32>
    %350 = arith.addf %347, %349 : vector<2x256xf32>
    %351 = arith.addf %350, %158 : vector<2x256xf32>
    %352 = tpu.concatenate %351, %350, %158 in 0 : vector<2x256xf32>, vector<2x256xf32>, vector<2x256xf32> -> vector<6x256xf32>
    %c0_280 = arith.constant 0 : index
    %c0_281 = arith.constant 0 : index
    %c0_282 = arith.constant 0 : index
    %353 = vector.load %arg9[%c0_280, %c0_281, %c0_282] : memref<1x6x256xf32, #tpu.memory_space<vmem>>, vector<1x6x256xf32>
    %354 = vector.shape_cast %353 : vector<1x6x256xf32> to vector<6x256xf32>
    %355 = vector.shape_cast %352 : vector<6x256xf32> to vector<1x6x256xf32>
    tpu.vector_store %arg9[%c0_280, %c0_281, %c0_282], %355 {strides = array<i32>} : memref<1x6x256xf32, #tpu.memory_space<vmem>>, vector<1x6x256xf32>,
    return
  }
  func.func @transform_0(%arg0: i32) -> (i32, i32, i32) {
    %c0_i32 = arith.constant 0 : i32
    %c0_i32_0 = arith.constant 0 : i32
    %c0_i32_1 = arith.constant 0 : i32
    return %arg0, %c0_i32, %c0_i32_0 : i32, i32, i32
  }
  func.func @transform_1(%arg0: i32) -> (i32, i32) {
    %c0_i32 = arith.constant 0 : i32
    %c0_i32_0 = arith.constant 0 : i32
    %c0_i32_1 = arith.constant 0 : i32
    return %c0_i32, %c0_i32_0 : i32, i32
  }
  func.func @transform_2(%arg0: i32) -> (i32, i32) {
    %c0_i32 = arith.constant 0 : i32
    %c0_i32_0 = arith.constant 0 : i32
    %c0_i32_1 = arith.constant 0 : i32
    return %c0_i32, %c0_i32_0 : i32, i32
  }
  func.func @transform_3(%arg0: i32) -> (i32, i32) {
    %c0_i32 = arith.constant 0 : i32
    %c0_i32_0 = arith.constant 0 : i32
    %c0_i32_1 = arith.constant 0 : i32
    return %c0_i32, %c0_i32_0 : i32, i32
  }
  func.func @transform_4(%arg0: i32) -> (i32, i32, i32) {
    %c0_i32 = arith.constant 0 : i32
    %c0_i32_0 = arith.constant 0 : i32
    %c0_i32_1 = arith.constant 0 : i32
    %c0_i32_2 = arith.constant 0 : i32
    return %c0_i32, %c0_i32_0, %c0_i32_1 : i32, i32, i32
  }
  func.func @transform_5(%arg0: i32) -> (i32, i32, i32) {
    %c0_i32 = arith.constant 0 : i32
    %c0_i32_0 = arith.constant 0 : i32
    %c0_i32_1 = arith.constant 0 : i32
    %c0_i32_2 = arith.constant 0 : i32
    return %c0_i32, %c0_i32_0, %c0_i32_1 : i32, i32, i32
  }
  func.func @transform_6(%arg0: i32) -> (i32, i32, i32) {
    %c0_i32 = arith.constant 0 : i32
    %c0_i32_0 = arith.constant 0 : i32
    %c0_i32_1 = arith.constant 0 : i32
    %c0_i32_2 = arith.constant 0 : i32
    return %c0_i32, %c0_i32_0, %c0_i32_1 : i32, i32, i32
  }
  func.func @transform_7(%arg0: i32) -> (i32, i32, i32) {
    %c0_i32 = arith.constant 0 : i32
    %c0_i32_0 = arith.constant 0 : i32
    %c0_i32_1 = arith.constant 0 : i32
    %c0_i32_2 = arith.constant 0 : i32
    return %c0_i32, %c0_i32_0, %c0_i32_1 : i32, i32, i32
  }
  func.func @transform_8(%arg0: i32) -> (i32, i32, i32) {
    %c0_i32 = arith.constant 0 : i32
    %c0_i32_0 = arith.constant 0 : i32
    %c0_i32_1 = arith.constant 0 : i32
    return %arg0, %c0_i32, %c0_i32_0 : i32, i32, i32
  }
}

</mosaic_0001>

<llo_original>
// kernel: wdsr_forward.1
$region0: #{wdsr_forward.1}
  #allocation0 [shape = 'u32[]', space=smem, size = 0x4, offset = 0x4, fixed_abs, tag = 'smem constant byte address 0x4 - core index']
  #allocation1 [shape = 'u32[144,128]{1,0:T(1,128)}', space=vmem, size = 0x12000, scoped, tag = 'internal scratch']
  #allocation2 [shape = 'f32[8,512]{1,0:T(8,128)}', space=vmem, size = 0x4000, scoped, tag = 'scratch operand']
  #allocation3 [shape = 'f32[72,256]{1,0:T(8,128)}', space=vmem, size = 0x12000, scoped, tag = 'scratch operand']
  %s0 = inlined_call_operand.vmem [shape: f32[2,1,256], index: 0, kind: input, shape index: {}]
  %s1 = inlined_call_operand.vmem [shape: bf16[10,25], index: 1, kind: input, shape index: {}]
  %s2 = inlined_call_operand.vmem [shape: bf16[2,72], index: 2, kind: input, shape index: {}]
  %s3 = inlined_call_operand.vmem [shape: f32[12,1], index: 3, kind: input, shape index: {}]
  %s4 = inlined_call_operand.vmem [shape: bf16[2,32,8], index: 4, kind: input, shape index: {}]
  %s5 = inlined_call_operand.vmem [shape: bf16[2,6,32], index: 5, kind: input, shape index: {}]
  %s6 = inlined_call_operand.vmem [shape: bf16[2,8,54], index: 6, kind: input, shape index: {}]
  %s7 = inlined_call_operand.vmem [shape: f32[2,46,1], index: 7, kind: input, shape index: {}]
  %s8 = inlined_call_operand.vmem [shape: f32[2,6,256], index: 8, kind: output, shape index: {}]
  %s9 = sld [smem:[#allocation0]]
  $region65: #{wdsr_forward.1} parent=0
    _
  %s11 = ssub.s32 1, %s9
  %s12 = scalar_select 0, %s11, %s9
  loop: start=0, step=1, limit=4
  $region2: #{wdsr_forward.1} parent=0 // loop_pre_header
    _
  $region3: #{wdsr_forward.1} parent=0 // loop_header
    %s14 = sphi 0, %s18
    %p15 = scmp.ge.s32.totalorder %s14, 4
    %s24 = sphi 0, %s26
    %s27 = sphi 0, %s24
    %s28 = sphi 0, %s27
    %s44 = sphi 0, %s28
    %s48 = sphi 0, %s48
    %s50 = sphi 0, %s48
    %s51 = sphi 0, %s50
    %s65 = sphi 0, %s51
    %s69 = sphi 0, %s69
    %s71 = sphi 0, %s69
    %s72 = sphi 0, %s71
    %s86 = sphi 0, %s72
    %s90 = sphi 0, %s90
    %s92 = sphi 0, %s90
    %s93 = sphi 0, %s92
    %s107 = sphi 0, %s93
    %s111 = sphi 0, %s111
    %s113 = sphi 0, %s111
    %s114 = sphi 0, %s113
    %s128 = sphi 0, %s114
    %s132 = sphi 0, %s132
    %s134 = sphi 0, %s132
    %s135 = sphi 0, %s134
    %s149 = sphi 0, %s135
    %s153 = sphi 0, %s153
    %s155 = sphi 0, %s153
    %s156 = sphi 0, %s155
    %s170 = sphi 0, %s156
    %s174 = sphi 0, %s174
    %s176 = sphi 0, %s174
    %s177 = sphi 0, %s176
    %s191 = sphi 0, %s177
    %s197 = sphi 0, %s199
    %s200 = sphi 0, %s197
    %s201 = sphi 0, %s200
    %s217 = sphi 0, %s201
  $region4: #{wdsr_forward.1} parent=0 // loop_header_branch
    %17 = sbr.rel (%p15) target = $region8
  $region5: #{wdsr_forward.1} parent=0 // loop_body
    %s19 = ssub.s32 %s14, 1
    %s20 = ssub.s32 %s14, 2
    %s21 = sadd.s32 %s14, 1
    %s22 = ssub.s32 %s14, %s21
    %p23 = scmp.eq.s32.totalorder %s22, 0
    %s25 = sadd.s32 %s24, 1
    %s26 = scalar_select %p23, %s24, %s25
    %p29 = pneg %p23
    %p30 = scmp.eq.s32.totalorder %s14, 1
    %p31 = por %p29, %p30
    %p32 = scmp.ne.s32.totalorder %s24, %s27
    %p33 = scmp.eq.s32.totalorder %s14, 0
    %p34 = por %p32, %p33
    %p35 = scmp.ne.s32.totalorder %s24, %s27
    %p36 = scmp.eq.s32.totalorder %s19, 1
    %p37 = por %p35, %p36
    %p38 = scmp.ne.s32.totalorder %s27, %s28
    %p39 = scmp.eq.s32.totalorder %s19, 0
    %p40 = por %p38, %p39
    %p41 = scmp.ne.s32.totalorder %s27, %s28
    %p42 = scmp.eq.s32.totalorder %s20, 1
    %p43 = por %p41, %p42
    %p45 = scmp.ne.s32.totalorder %s28, %s44
    %p46 = scmp.eq.s32.totalorder %s20, 0
    %p47 = por %p45, %p46
    %s49 = sadd.s32 %s48, 1
    %p52 = scmp.eq.s32.totalorder %s14, 1
    %p53 = scmp.ne.s32.totalorder %s48, %s50
    %p54 = scmp.eq.s32.totalorder %s14, 0
    %p55 = por %p53, %p54
    %p56 = scmp.ne.s32.totalorder %s48, %s50
    %p57 = scmp.eq.s32.totalorder %s19, 1
    %p58 = por %p56, %p57
    %p59 = scmp.ne.s32.totalorder %s50, %s51
    %p60 = scmp.eq.s32.totalorder %s19, 0
    %p61 = por %p59, %p60
    %p62 = scmp.ne.s32.totalorder %s50, %s51
    %p63 = scmp.eq.s32.totalorder %s20, 1
    %p64 = por %p62, %p63
    %p66 = scmp.ne.s32.totalorder %s51, %s65
    %p67 = scmp.eq.s32.totalorder %s20, 0
    %p68 = por %p66, %p67
    %s70 = sadd.s32 %s69, 1
    %p73 = scmp.eq.s32.totalorder %s14, 1
    %p74 = scmp.ne.s32.totalorder %s69, %s71
    %p75 = scmp.eq.s32.totalorder %s14, 0
    %p76 = por %p74, %p75
    %p77 = scmp.ne.s32.totalorder %s69, %s71
    %p78 = scmp.eq.s32.totalorder %s19, 1
    %p79 = por %p77, %p78
    %p80 = scmp.ne.s32.totalorder %s71, %s72
    %p81 = scmp.eq.s32.totalorder %s19, 0
    %p82 = por %p80, %p81
    %p83 = scmp.ne.s32.totalorder %s71, %s72
    %p84 = scmp.eq.s32.totalorder %s20, 1
    %p85 = por %p83, %p84
    %p87 = scmp.ne.s32.totalorder %s72, %s86
    %p88 = scmp.eq.s32.totalorder %s20, 0
    %p89 = por %p87, %p88
    %s91 = sadd.s32 %s90, 1
    %p94 = scmp.eq.s32.totalorder %s14, 1
    %p95 = scmp.ne.s32.totalorder %s90, %s92
    %p96 = scmp.eq.s32.totalorder %s14, 0
    %p97 = por %p95, %p96
    %p98 = scmp.ne.s32.totalorder %s90, %s92
    %p99 = scmp.eq.s32.totalorder %s19, 1
    %p100 = por %p98, %p99
    %p101 = scmp.ne.s32.totalorder %s92, %s93
    %p102 = scmp.eq.s32.totalorder %s19, 0
    %p103 = por %p101, %p102
    %p104 = scmp.ne.s32.totalorder %s92, %s93
    %p105 = scmp.eq.s32.totalorder %s20, 1
    %p106 = por %p104, %p105
    %p108 = scmp.ne.s32.totalorder %s93, %s107
    %p109 = scmp.eq.s32.totalorder %s20, 0
    %p110 = por %p108, %p109
    %s112 = sadd.s32 %s111, 1
    %p115 = scmp.eq.s32.totalorder %s14, 1
    %p116 = scmp.ne.s32.totalorder %s111, %s113
    %p117 = scmp.eq.s32.totalorder %s14, 0
    %p118 = por %p116, %p117
    %p119 = scmp.ne.s32.totalorder %s111, %s113
    %p120 = scmp.eq.s32.totalorder %s19, 1
    %p121 = por %p119, %p120
    %p122 = scmp.ne.s32.totalorder %s113, %s114
    %p123 = scmp.eq.s32.totalorder %s19, 0
    %p124 = por %p122, %p123
    %p125 = scmp.ne.s32.totalorder %s113, %s114
    %p126 = scmp.eq.s32.totalorder %s20, 1
    %p127 = por %p125, %p126
    %p129 = scmp.ne.s32.totalorder %s114, %s128
    %p130 = scmp.eq.s32.totalorder %s20, 0
    %p131 = por %p129, %p130
    %s133 = sadd.s32 %s132, 1
    %p136 = scmp.eq.s32.totalorder %s14, 1
    %p137 = scmp.ne.s32.totalorder %s132, %s134
    %p138 = scmp.eq.s32.totalorder %s14, 0
    %p139 = por %p137, %p138
    %p140 = scmp.ne.s32.totalorder %s132, %s134
    %p141 = scmp.eq.s32.totalorder %s19, 1
    %p142 = por %p140, %p141
    %p143 = scmp.ne.s32.totalorder %s134, %s135
    %p144 = scmp.eq.s32.totalorder %s19, 0
    %p145 = por %p143, %p144
    %p146 = scmp.ne.s32.totalorder %s134, %s135
    %p147 = scmp.eq.s32.totalorder %s20, 1
    %p148 = por %p146, %p147
    %p150 = scmp.ne.s32.totalorder %s135, %s149
    %p151 = scmp.eq.s32.totalorder %s20, 0
    %p152 = por %p150, %p151
    %s154 = sadd.s32 %s153, 1
    %p157 = scmp.eq.s32.totalorder %s14, 1
    %p158 = scmp.ne.s32.totalorder %s153, %s155
    %p159 = scmp.eq.s32.totalorder %s14, 0
    %p160 = por %p158, %p159
    %p161 = scmp.ne.s32.totalorder %s153, %s155
    %p162 = scmp.eq.s32.totalorder %s19, 1
    %p163 = por %p161, %p162
    %p164 = scmp.ne.s32.totalorder %s155, %s156
    %p165 = scmp.eq.s32.totalorder %s19, 0
    %p166 = por %p164, %p165
    %p167 = scmp.ne.s32.totalorder %s155, %s156
    %p168 = scmp.eq.s32.totalorder %s20, 1
    %p169 = por %p167, %p168
    %p171 = scmp.ne.s32.totalorder %s156, %s170
    %p172 = scmp.eq.s32.totalorder %s20, 0
    %p173 = por %p171, %p172
    %s175 = sadd.s32 %s174, 1
    %p178 = scmp.eq.s32.totalorder %s14, 1
    %p179 = scmp.ne.s32.totalorder %s174, %s176
    %p180 = scmp.eq.s32.totalorder %s14, 0
    %p181 = por %p179, %p180
    %p182 = scmp.ne.s32.totalorder %s174, %s176
    %p183 = scmp.eq.s32.totalorder %s19, 1
    %p184 = por %p182, %p183
    %p185 = scmp.ne.s32.totalorder %s176, %s177
    %p186 = scmp.eq.s32.totalorder %s19, 0
    %p187 = por %p185, %p186
    %p188 = scmp.ne.s32.totalorder %s176, %s177
    %p189 = scmp.eq.s32.totalorder %s20, 1
    %p190 = por %p188, %p189
    %p192 = scmp.ne.s32.totalorder %s177, %s191
    %p193 = scmp.eq.s32.totalorder %s20, 0
    %p194 = por %p192, %p193
    %s195 = ssub.s32 %s14, %s21
    %p196 = scmp.eq.s32.totalorder %s195, 0
    %s198 = sadd.s32 %s197, 1
    %s199 = scalar_select %p196, %s197, %s198
    %p202 = pneg %p196
    %p203 = scmp.eq.s32.totalorder %s14, 1
    %p204 = por %p202, %p203
    %p205 = scmp.ne.s32.totalorder %s197, %s200
    %p206 = scmp.eq.s32.totalorder %s14, 0
    %p207 = por %p205, %p206
    %p208 = scmp.ne.s32.totalorder %s197, %s200
    %p209 = scmp.eq.s32.totalorder %s19, 1
    %p210 = por %p208, %p209
    %p211 = scmp.ne.s32.totalorder %s200, %s201
    %p212 = scmp.eq.s32.totalorder %s19, 0
    %p213 = por %p211, %p212
    %p214 = scmp.ne.s32.totalorder %s200, %s201
    %p215 = scmp.eq.s32.totalorder %s20, 1
    %p216 = por %p214, %p215
    %p218 = scmp.ne.s32.totalorder %s201, %s217
    %p219 = scmp.eq.s32.totalorder %s20, 0
    %p220 = por %p218, %p219
    %p221 = scmp.le.s32.totalorder 1, %s14
    %p222 = scmp.lt.s32.totalorder %s14, 3
    %p223 = pnand %p221, %p222
    %p224 = pneg %p223
    // Predicated region
    $region9: #{wdsr_forward.1} parent=5 // pred_check
      _
    $region10: #{wdsr_forward.1} parent=5 // pred_check_branch
      %226 = sbr.rel (%p223) target = $region12
    $region11: #{wdsr_forward.1} parent=5 // pred_region
      %s227 = ssub.s32 %s14, 1
      // Predicated region
      $region13: #{wdsr_forward.1} parent=11 // pred_check
        %p228 = pneg %p61
      $region14: #{wdsr_forward.1} parent=11 // pred_check_branch
        %230 = sbr.rel (%p228) target = $region16
      $region15: #{wdsr_forward.1} parent=11 // pred_region
        _
      $region16: #{wdsr_forward.1} parent=11 // pred_fallthru
        _
      // Predicated region
      $region17: #{wdsr_forward.1} parent=11 // pred_check
        %p231 = pneg %p82
      $region18: #{wdsr_forward.1} parent=11 // pred_check_branch
        %233 = sbr.rel (%p231) target = $region20
      $region19: #{wdsr_forward.1} parent=11 // pred_region
        _
      $region20: #{wdsr_forward.1} parent=11 // pred_fallthru
        _
      // Predicated region
      $region21: #{wdsr_forward.1} parent=11 // pred_check
        %p234 = pneg %p103
      $region22: #{wdsr_forward.1} parent=11 // pred_check_branch
        %236 = sbr.rel (%p234) target = $region24
      $region23: #{wdsr_forward.1} parent=11 // pred_region
        _
      $region24: #{wdsr_forward.1} parent=11 // pred_fallthru
        _
      // Predicated region
      $region25: #{wdsr_forward.1} parent=11 // pred_check
        %p237 = pneg %p124
      $region26: #{wdsr_forward.1} parent=11 // pred_check_branch
        %239 = sbr.rel (%p237) target = $region28
      $region27: #{wdsr_forward.1} parent=11 // pred_region
        _
      $region28: #{wdsr_forward.1} parent=11 // pred_fallthru
        _
      // Predicated region
      $region29: #{wdsr_forward.1} parent=11 // pred_check
        %p240 = pneg %p145
      $region30: #{wdsr_forward.1} parent=11 // pred_check_branch
        %242 = sbr.rel (%p240) target = $region32
      $region31: #{wdsr_forward.1} parent=11 // pred_region
        _
      $region32: #{wdsr_forward.1} parent=11 // pred_fallthru
        _
      // Predicated region
      $region33: #{wdsr_forward.1} parent=11 // pred_check
        %p243 = pneg %p166
      $region34: #{wdsr_forward.1} parent=11 // pred_check_branch
        %245 = sbr.rel (%p243) target = $region36
      $region35: #{wdsr_forward.1} parent=11 // pred_region
        _
      $region36: #{wdsr_forward.1} parent=11 // pred_fallthru
        _
      // Predicated region
      $region37: #{wdsr_forward.1} parent=11 // pred_check
        %p246 = pneg %p187
      $region38: #{wdsr_forward.1} parent=11 // pred_check_branch
        %248 = sbr.rel (%p246) target = $region40
      $region39: #{wdsr_forward.1} parent=11 // pred_region
        _
      $region40: #{wdsr_forward.1} parent=11 // pred_fallthru
        _
    $region12: #{wdsr_forward.1} parent=5 // pred_fallthru
      _
    %p249 = scmp.lt.s32.totalorder %s14, 2
    // Predicated region
    $region41: #{wdsr_forward.1} parent=5 // pred_check
      %p250 = pneg %p249
    $region42: #{wdsr_forward.1} parent=5 // pred_check_branch
      %252 = sbr.rel (%p250) target = $region44
    $region43: #{wdsr_forward.1} parent=5 // pred_region
      // Predicated region
      $region45: #{wdsr_forward.1} parent=43 // pred_check
        %p253 = pneg %p34
      $region46: #{wdsr_forward.1} parent=43 // pred_check_branch
        %255 = sbr.rel (%p253) target = $region48
      $region47: #{wdsr_forward.1} parent=43 // pred_region
        %p256 = scmp.lt.s32.totalorder %s14, 1
        %s257 = scalar_select %p256, %s14, 1
        %s258 = smul.addr %s257, 2
        %s259 = scalar_lea.vmem %s0, %s258
      $region48: #{wdsr_forward.1} parent=43 // pred_fallthru
        _
    $region44: #{wdsr_forward.1} parent=5 // pred_fallthru
      _
    %p260 = scmp.le.s32.totalorder 1, %s14
    %p261 = scmp.lt.s32.totalorder %s14, 3
    %p262 = pnand %p260, %p261
    %p263 = pneg %p262
    // Predicated region
    $region49: #{wdsr_forward.1} parent=5 // pred_check
      _
    $region50: #{wdsr_forward.1} parent=5 // pred_check_branch
      %265 = sbr.rel (%p262) target = $region52
    $region51: #{wdsr_forward.1} parent=5 // pred_region
      %s266 = ssub.s32 %s14, 1
      %p267 = scmp.lt.s32.totalorder %s19, 1
      %s268 = scalar_select %p267, %s19, 1
      %s269 = smul.addr %s268, 2
      %s270 = scalar_lea.vmem %s0, %s269
      %p271 = pneg %p40
      %p272 = pneg %p37
      %p273 = pneg %p61
      %p274 = pneg %p58
      %p275 = pneg %p82
      %p276 = pneg %p79
      %p277 = pneg %p103
      %p278 = pneg %p100
      %p279 = pneg %p124
      %p280 = pneg %p121
      %p281 = pneg %p145
      %p282 = pneg %p142
      %p283 = pneg %p166
      %p284 = pneg %p163
      %p285 = pneg %p187
      %p286 = pneg %p184
      %p287 = pneg %p213
      %p288 = pneg %p210
      %p289 = scmp.lt.s32.totalorder %s19, 1
      %s290 = scalar_select %p289, %s19, 1
      %s291 = smul.addr %s290, 2
      %s292 = smul.addr %s291, 8
      %s293 = scalar_lea.vmem %s8, %s292
      %p294 = scmp.lt.s32.totalorder %s19, 1
      %s295 = scalar_select %p294, %s19, 1
      %s296 = smul.addr %s295, 2
      %s297 = scalar_lea.vmem %s0, %s296
      %p298 = scmp.lt.s32.totalorder %s19, 1
      %s299 = scalar_select %p298, %s19, 1
      %s300 = smul.addr %s299, 2
      %s301 = smul.addr %s300, 8
      %s302 = scalar_lea.vmem %s8, %s301
      %304 = vst [vmem:[#allocation2] sm:$0xff] 0.0
      %305 = vst [vmem:[#allocation2 + $0x18] sm:$0xff] 0.0
      %v306 = vlaneseq
      %v307 = vand.u32 %v306, 127
      %v308 = vadd.s32 %v307, 128
      %vm309 = vcmp.lt.s32.totalorder %v307, 0
      %v310 = vsub.s32 0, %v307
      %v311 = vsel %vm309, %v310, %v307
      %v312 = vshrl.u32 %v311, 4
      %v313 = vand.u32 %v311, 15
      %v314 = vsub.s32 0, %v313
      %v315 = vsel %vm309, %v314, %v313
      %vm316 = vcmp.lt.s32.totalorder %v308, 0
      %v317 = vsub.s32 0, %v308
      %v318 = vsel %vm316, %v317, %v308
      %v319 = vshrl.u32 %v318, 4
      %v320 = vand.u32 %v318, 15
      %v321 = vsub.s32 0, %v320
      %v322 = vsel %vm316, %v321, %v320
      %vm323 = vcmp.ne.s32.totalorder %v315, 0
      %vm324 = vcmp.ne.s32.totalorder %v322, 0
      %vm325 = vcmp.lt.s32.totalorder %v315, 0
      %vm326 = vcmp.lt.s32.totalorder %v322, 0
      %vm327 = vmand %vm325, %vm323
      %vm328 = vmand %vm326, %vm324
      %v329 = vadd.s32 %v315, 16
      %v330 = vadd.s32 %v322, 16
      %v331 = vsel %vm327, %v329, %v315
      %v332 = vsel %vm328, %v330, %v322
      %v333 = vadd.s32 %v331, 4294967294
      %v334 = vadd.s32 %v332, 4294967294
      %vm335 = vcmp.ge.s32.totalorder %v333, 0
      %vm336 = vcmp.ge.s32.totalorder %v334, 0
      %vm337 = vcmp.lt.s32.totalorder %v333, 16
      %vm338 = vcmp.lt.s32.totalorder %v334, 16
      %vm339 = vmand %vm335, %vm337
      %vm340 = vmand %vm336, %vm338
      %v341 = vadd.s32 %v331, 4294967295
      %v342 = vadd.s32 %v332, 4294967295
      %vm343 = vcmp.ge.s32.totalorder %v341, 0
      %vm344 = vcmp.ge.s32.totalorder %v342, 0
      %vm345 = vcmp.lt.s32.totalorder %v341, 16
      %vm346 = vcmp.lt.s32.totalorder %v342, 16
      %vm347 = vmand %vm343, %vm345
      %vm348 = vmand %vm344, %vm346
      %v349 = vadd.s32 %v331, 1
      %v350 = vadd.s32 %v332, 1
      %vm351 = vcmp.ge.s32.totalorder %v349, 0
      %vm352 = vcmp.ge.s32.totalorder %v350, 0
      %vm353 = vcmp.lt.s32.totalorder %v349, 16
      %vm354 = vcmp.lt.s32.totalorder %v350, 16
      %vm355 = vmand %vm351, %vm353
      %vm356 = vmand %vm352, %vm354
      %v357 = vadd.s32 %v331, 2
      %v358 = vadd.s32 %v332, 2
      %vm359 = vcmp.ge.s32.totalorder %v357, 0
      %vm360 = vcmp.ge.s32.totalorder %v358, 0
      %vm361 = vcmp.lt.s32.totalorder %v357, 16
      %vm362 = vcmp.lt.s32.totalorder %v358, 16
      %vm363 = vmand %vm359, %vm361
      %vm364 = vmand %vm360, %vm362
      %v365 = vld [vmem:[%s297] sm:$0x3]
      %v366 = vlaneseq
      %vm367 = vcmp.ge.s32.totalorder %v366, 0
      %vm368 = vcmp.lt.s32.totalorder %v366, 256
      %vm369 = vmand %vm367, %vm368
      %s370 = scalar_lea.vmem [#allocation2], 8
      %371 = vst.msk [vmem:[%s370] ss:$8 sm:$0x3] %vm369, %v365
      %372 = vst.msk [vmem:[%s370] ss:$8 sm:$0x0] %vm369, %v365
      %v373 = vld [vmem:[#allocation2] ss:$8 sm:$0x7]
      %v375 = vlaneseq
      %v376 = vshrl.u32 %v375, 7
      %v377 = vsub.s32 0, %v376
      %v378 = vrot.slane %v373, %v377
      %v379 = vlaneseq
      %v380 = vshrl.u32 %v379, 7
      %v381 = vsub.s32 1, %v380
      %v382 = vrot.slane %v373, %v381
      %v383 = vlaneseq
      %v384 = vshrl.u32 %v383, 7
      %v385 = vsub.s32 2, %v384
      %v386 = vrot.slane %v373, %v385
      %387 = vrot.lane.b32.xlu0 %v378, 34
      %v388 = vpop.permute.xlu0 %387
      %389 = vrot.lane.b32.xlu0 %v382, 34
      %v390 = vpop.permute.xlu0 %389
      %391 = vrot.lane.b32.xlu0 %v386, 34
      %v392 = vpop.permute.xlu0 %391
      %vm393 = vcmask 277504
      %v394 = vsel %vm393, %v388, %v390
      %v395 = vsel %vm393, %v390, %v392
      %v398 = vsel %vm339, %v394, 0.0
      %v399 = vsel %vm340, %v395, 0.0
      %v402 = vcombine.low %v398, %v399
      %v404 = vunpack.c.l.s4 1966171168
      %v405 = vunpack.c.0.s8 %v404
      %v406 = vlaneseq
      %v407 = vshrl.u32 %v406, 7
      %v408 = vsub.s32 %v405, %v407
      %v409 = vrot.slane %v402, %v408
      %v411 = vunpack.c.l.s4 1966171168
      %v412 = vunpack.c.0.s8 %v411
      %v413 = vlaneseq
      %v414 = vshrl.u32 %v413, 7
      %v415 = vsub.s32 %v412, %v414
      %v416 = vrot.slane %v409, %v415
      %418 = vst.msk [vmem:[#allocation3] ss:$8 sm:$0x3] %vm369, %v416
      %419 = vst.msk [vmem:[#allocation3] ss:$8 sm:$0x0] %vm369, %v416
      %v420 = vld [vmem:[#allocation2] ss:$8 sm:$0x7]
      %v422 = vlaneseq
      %v423 = vshrl.u32 %v422, 7
      %v424 = vsub.s32 0, %v423
      %v425 = vrot.slane %v420, %v424
      %v426 = vlaneseq
      %v427 = vshrl.u32 %v426, 7
      %v428 = vsub.s32 1, %v427
      %v429 = vrot.slane %v420, %v428
      %v430 = vlaneseq
      %v431 = vshrl.u32 %v430, 7
      %v432 = vsub.s32 2, %v431
      %v433 = vrot.slane %v420, %v432
      %434 = vrot.lane.b32.xlu0 %v425, 33
      %v435 = vpop.permute.xlu0 %434
      %436 = vrot.lane.b32.xlu0 %v429, 33
      %v437 = vpop.permute.xlu0 %436
      %438 = vrot.lane.b32.xlu0 %v433, 33
      %v439 = vpop.permute.xlu0 %438
      %vm440 = vcmask 269312
      %v441 = vsel %vm440, %v435, %v437
      %v442 = vsel %vm440, %v437, %v439
      %v445 = vsel %vm347, %v441, 0.0
      %v446 = vsel %vm348, %v442, 0.0
      %v449 = vcombine.low %v445, %v446
      %v451 = vunpack.c.l.s4 1966171168
      %v452 = vunpack.c.0.s8 %v451
      %v453 = vlaneseq
      %v454 = vshrl.u32 %v453, 7
      %v455 = vsub.s32 %v452, %v454
      %v456 = vrot.slane %v449, %v455
      %v458 = vunpack.c.l.s4 1966171168
      %v459 = vunpack.c.0.s8 %v458
      %v460 = vlaneseq
      %v461 = vshrl.u32 %v460, 7
      %v462 = vsub.s32 %v459, %v461
      %v463 = vrot.slane %v456, %v462
      %s465 = scalar_lea.vmem [#allocation3], 1
      %466 = vst.msk [vmem:[%s465] ss:$8 sm:$0x3] %vm369, %v463
      %467 = vst.msk [vmem:[%s465] ss:$8 sm:$0x0] %vm369, %v463
      %v468 = vld [vmem:[#allocation2] ss:$8 sm:$0x7]
      %470 = vrot.lane.b32.xlu0 %v468, 32
      %v471 = vpop.permute.xlu0 %470
      %v472 = vrot.slane %v471, 1
      %vm473 = vcmask 261120
      %v474 = vsel %vm473, %v471, %v472
      %s476 = scalar_lea.vmem [#allocation3], 2
      %477 = vst.msk [vmem:[%s476] ss:$8 sm:$0x3] %vm369, %v474
      %478 = vst.msk [vmem:[%s476] ss:$8 sm:$0x0] %vm369, %v474
      %v479 = vld [vmem:[#allocation2] ss:$8 sm:$0x7]
      %v481 = vlaneseq
      %v482 = vshrl.u32 %v481, 7
      %v483 = vsub.s32 0, %v482
      %v484 = vrot.slane %v479, %v483
      %v485 = vlaneseq
      %v486 = vshrl.u32 %v485, 7
      %v487 = vsub.s32 1, %v486
      %v488 = vrot.slane %v479, %v487
      %v489 = vlaneseq
      %v490 = vshrl.u32 %v489, 7
      %v491 = vsub.s32 2, %v490
      %v492 = vrot.slane %v479, %v491
      %493 = vrot.lane.b32.xlu0 %v484, 31
      %v494 = vpop.permute.xlu0 %493
      %495 = vrot.lane.b32.xlu0 %v488, 31
      %v496 = vpop.permute.xlu0 %495
      %497 = vrot.lane.b32.xlu0 %v492, 31
      %v498 = vpop.permute.xlu0 %497
      %vm499 = vcmask 252928
      %v500 = vsel %vm499, %v494, %v496
      %v501 = vsel %vm499, %v496, %v498
      %v504 = vsel %vm355, %v500, 0.0
      %v505 = vsel %vm356, %v501, 0.0
      %v508 = vcombine.low %v504, %v505
      %v510 = vunpack.c.l.s4 1966171168
      %v511 = vunpack.c.0.s8 %v510
      %v512 = vlaneseq
      %v513 = vshrl.u32 %v512, 7
      %v514 = vsub.s32 %v511, %v513
      %v515 = vrot.slane %v508, %v514
      %v517 = vunpack.c.l.s4 1966171168
      %v518 = vunpack.c.0.s8 %v517
      %v519 = vlaneseq
      %v520 = vshrl.u32 %v519, 7
      %v521 = vsub.s32 %v518, %v520
      %v522 = vrot.slane %v515, %v521
      %s524 = scalar_lea.vmem [#allocation3], 3
      %525 = vst.msk [vmem:[%s524] ss:$8 sm:$0x3] %vm369, %v522
      %526 = vst.msk [vmem:[%s524] ss:$8 sm:$0x0] %vm369, %v522
      %v527 = vld [vmem:[#allocation2] ss:$8 sm:$0x7]
      %v529 = vlaneseq
      %v530 = vshrl.u32 %v529, 7
      %v531 = vsub.s32 0, %v530
      %v532 = vrot.slane %v527, %v531
      %v533 = vlaneseq
      %v534 = vshrl.u32 %v533, 7
      %v535 = vsub.s32 1, %v534
      %v536 = vrot.slane %v527, %v535
      %v537 = vlaneseq
      %v538 = vshrl.u32 %v537, 7
      %v539 = vsub.s32 2, %v538
      %v540 = vrot.slane %v527, %v539
      %541 = vrot.lane.b32.xlu0 %v532, 30
      %v542 = vpop.permute.xlu0 %541
      %543 = vrot.lane.b32.xlu0 %v536, 30
      %v544 = vpop.permute.xlu0 %543
      %545 = vrot.lane.b32.xlu0 %v540, 30
      %v546 = vpop.permute.xlu0 %545
      %vm547 = vcmask 244736
      %v548 = vsel %vm547, %v542, %v544
      %v549 = vsel %vm547, %v544, %v546
      %v552 = vsel %vm363, %v548, 0.0
      %v553 = vsel %vm364, %v549, 0.0
      %v556 = vcombine.low %v552, %v553
      %v558 = vunpack.c.l.s4 1966171168
      %v559 = vunpack.c.0.s8 %v558
      %v560 = vlaneseq
      %v561 = vshrl.u32 %v560, 7
      %v562 = vsub.s32 %v559, %v561
      %v563 = vrot.slane %v556, %v562
      %v565 = vunpack.c.l.s4 1966171168
      %v566 = vunpack.c.0.s8 %v565
      %v567 = vlaneseq
      %v568 = vshrl.u32 %v567, 7
      %v569 = vsub.s32 %v566, %v568
      %v570 = vrot.slane %v563, %v569
      %s572 = scalar_lea.vmem [#allocation3], 4
      %573 = vst.msk [vmem:[%s572] ss:$8 sm:$0x3] %vm369, %v570
      %574 = vst.msk [vmem:[%s572] ss:$8 sm:$0x0] %vm369, %v570
      %v575 = vld [vmem:[#allocation2] ss:$8 sm:$0x7]
      %v577 = vlaneseq
      %v578 = vshrl.u32 %v577, 7
      %v579 = vsub.s32 0, %v578
      %v580 = vrot.slane %v575, %v579
      %v581 = vlaneseq
      %v582 = vshrl.u32 %v581, 7
      %v583 = vsub.s32 1, %v582
      %v584 = vrot.slane %v575, %v583
      %v585 = vlaneseq
      %v586 = vshrl.u32 %v585, 7
      %v587 = vsub.s32 2, %v586
      %v588 = vrot.slane %v575, %v587
      %589 = vrot.lane.b32.xlu0 %v580, 18
      %v590 = vpop.permute.xlu0 %589
      %591 = vrot.lane.b32.xlu0 %v584, 18
      %v592 = vpop.permute.xlu0 %591
      %593 = vrot.lane.b32.xlu0 %v588, 18
      %v594 = vpop.permute.xlu0 %593
      %vm595 = vcmask 146432
      %v596 = vsel %vm595, %v590, %v592
      %v597 = vsel %vm595, %v592, %v594
      %v600 = vsel %vm339, %v596, 0.0
      %v601 = vsel %vm340, %v597, 0.0
      %v604 = vcombine.low %v600, %v601
      %v606 = vunpack.c.l.s4 1966171168
      %v607 = vunpack.c.0.s8 %v606
      %v608 = vlaneseq
      %v609 = vshrl.u32 %v608, 7
      %v610 = vsub.s32 %v607, %v609
      %v611 = vrot.slane %v604, %v610
      %v613 = vunpack.c.l.s4 1966171168
      %v614 = vunpack.c.0.s8 %v613
      %v615 = vlaneseq
      %v616 = vshrl.u32 %v615, 7
      %v617 = vsub.s32 %v614, %v616
      %v618 = vrot.slane %v611, %v617
      %s620 = scalar_lea.vmem [#allocation3], 5
      %621 = vst.msk [vmem:[%s620] ss:$8 sm:$0x3] %vm369, %v618
      %622 = vst.msk [vmem:[%s620] ss:$8 sm:$0x0] %vm369, %v618
      %v623 = vld [vmem:[#allocation2] ss:$8 sm:$0x7]
      %v625 = vlaneseq
      %v626 = vshrl.u32 %v625, 7
      %v627 = vsub.s32 0, %v626
      %v628 = vrot.slane %v623, %v627
      %v629 = vlaneseq
      %v630 = vshrl.u32 %v629, 7
      %v631 = vsub.s32 1, %v630
      %v632 = vrot.slane %v623, %v631
      %v633 = vlaneseq
      %v634 = vshrl.u32 %v633, 7
      %v635 = vsub.s32 2, %v634
      %v636 = vrot.slane %v623, %v635
      %637 = vrot.lane.b32.xlu0 %v628, 17
      %v638 = vpop.permute.xlu0 %637
      %639 = vrot.lane.b32.xlu0 %v632, 17
      %v640 = vpop.permute.xlu0 %639
      %641 = vrot.lane.b32.xlu0 %v636, 17
      %v642 = vpop.permute.xlu0 %641
      %vm643 = vcmask 138240
      %v644 = vsel %vm643, %v638, %v640
      %v645 = vsel %vm643, %v640, %v642
      %v648 = vsel %vm347, %v644, 0.0
      %v649 = vsel %vm348, %v645, 0.0
      %v652 = vcombine.low %v648, %v649
      %v654 = vunpack.c.l.s4 1966171168
      %v655 = vunpack.c.0.s8 %v654
      %v656 = vlaneseq
      %v657 = vshrl.u32 %v656, 7
      %v658 = vsub.s32 %v655, %v657
      %v659 = vrot.slane %v652, %v658
      %v661 = vunpack.c.l.s4 1966171168
      %v662 = vunpack.c.0.s8 %v661
      %v663 = vlaneseq
      %v664 = vshrl.u32 %v663, 7
      %v665 = vsub.s32 %v662, %v664
      %v666 = vrot.slane %v659, %v665
      %s668 = scalar_lea.vmem [#allocation3], 6
      %669 = vst.msk [vmem:[%s668] ss:$8 sm:$0x3] %vm369, %v666
      %670 = vst.msk [vmem:[%s668] ss:$8 sm:$0x0] %vm369, %v666
      %v671 = vld [vmem:[#allocation2] ss:$8 sm:$0x7]
      %673 = vrot.lane.b32.xlu0 %v671, 16
      %v674 = vpop.permute.xlu0 %673
      %v675 = vrot.slane %v674, 1
      %vm676 = vcmask 130048
      %v677 = vsel %vm676, %v674, %v675
      %s679 = scalar_lea.vmem [#allocation3], 7
      %680 = vst.msk [vmem:[%s679] ss:$8 sm:$0x3] %vm369, %v677
      %681 = vst.msk [vmem:[%s679] ss:$8 sm:$0x0] %vm369, %v677
      %v682 = vld [vmem:[#allocation2] ss:$8 sm:$0x7]
      %v684 = vlaneseq
      %v685 = vshrl.u32 %v684, 7
      %v686 = vsub.s32 0, %v685
      %v687 = vrot.slane %v682, %v686
      %v688 = vlaneseq
      %v689 = vshrl.u32 %v688, 7
      %v690 = vsub.s32 1, %v689
      %v691 = vrot.slane %v682, %v690
      %v692 = vlaneseq
      %v693 = vshrl.u32 %v692, 7
      %v694 = vsub.s32 2, %v693
      %v695 = vrot.slane %v682, %v694
      %696 = vrot.lane.b32.xlu0 %v687, 15
      %v697 = vpop.permute.xlu0 %696
      %698 = vrot.lane.b32.xlu0 %v691, 15
      %v699 = vpop.permute.xlu0 %698
      %700 = vrot.lane.b32.xlu0 %v695, 15
      %v701 = vpop.permute.xlu0 %700
      %vm702 = vcmask 121856
      %v703 = vsel %vm702, %v697, %v699
      %v704 = vsel %vm702, %v699, %v701
      %v707 = vsel %vm355, %v703, 0.0
      %v708 = vsel %vm356, %v704, 0.0
      %v711 = vcombine.low %v707, %v708
      %v713 = vunpack.c.l.s4 1966171168
      %v714 = vunpack.c.0.s8 %v713
      %v715 = vlaneseq
      %v716 = vshrl.u32 %v715, 7
      %v717 = vsub.s32 %v714, %v716
      %v718 = vrot.slane %v711, %v717
      %v720 = vunpack.c.l.s4 1966171168
      %v721 = vunpack.c.0.s8 %v720
      %v722 = vlaneseq
      %v723 = vshrl.u32 %v722, 7
      %v724 = vsub.s32 %v721, %v723
      %v725 = vrot.slane %v718, %v724
      %s727 = scalar_lea.vmem [#allocation3], 16
      %728 = vst.msk [vmem:[%s727] ss:$8 sm:$0x3] %vm369, %v725
      %729 = vst.msk [vmem:[%s727] ss:$8 sm:$0x0] %vm369, %v725
      %v730 = vld [vmem:[#allocation2] ss:$8 sm:$0x7]
      %v732 = vlaneseq
      %v733 = vshrl.u32 %v732, 7
      %v734 = vsub.s32 0, %v733
      %v735 = vrot.slane %v730, %v734
      %v736 = vlaneseq
      %v737 = vshrl.u32 %v736, 7
      %v738 = vsub.s32 1, %v737
      %v739 = vrot.slane %v730, %v738
      %v740 = vlaneseq
      %v741 = vshrl.u32 %v740, 7
      %v742 = vsub.s32 2, %v741
      %v743 = vrot.slane %v730, %v742
      %744 = vrot.lane.b32.xlu0 %v735, 14
      %v745 = vpop.permute.xlu0 %744
      %746 = vrot.lane.b32.xlu0 %v739, 14
      %v747 = vpop.permute.xlu0 %746
      %748 = vrot.lane.b32.xlu0 %v743, 14
      %v749 = vpop.permute.xlu0 %748
      %vm750 = vcmask 113664
      %v751 = vsel %vm750, %v745, %v747
      %v752 = vsel %vm750, %v747, %v749
      %v755 = vsel %vm363, %v751, 0.0
      %v756 = vsel %vm364, %v752, 0.0
      %v759 = vcombine.low %v755, %v756
      %v761 = vunpack.c.l.s4 1966171168
      %v762 = vunpack.c.0.s8 %v761
      %v763 = vlaneseq
      %v764 = vshrl.u32 %v763, 7
      %v765 = vsub.s32 %v762, %v764
      %v766 = vrot.slane %v759, %v765
      %v768 = vunpack.c.l.s4 1966171168
      %v769 = vunpack.c.0.s8 %v768
      %v770 = vlaneseq
      %v771 = vshrl.u32 %v770, 7
      %v772 = vsub.s32 %v769, %v771
      %v773 = vrot.slane %v766, %v772
      %s775 = scalar_lea.vmem [#allocation3], 17
      %776 = vst.msk [vmem:[%s775] ss:$8 sm:$0x3] %vm369, %v773
      %777 = vst.msk [vmem:[%s775] ss:$8 sm:$0x0] %vm369, %v773
      %v778 = vld [vmem:[#allocation2] ss:$8 sm:$0x7]
      %v780 = vlaneseq
      %v781 = vshrl.u32 %v780, 7
      %v782 = vsub.s32 0, %v781
      %v783 = vrot.slane %v778, %v782
      %v784 = vlaneseq
      %v785 = vshrl.u32 %v784, 7
      %v786 = vsub.s32 1, %v785
      %v787 = vrot.slane %v778, %v786
      %v788 = vlaneseq
      %v789 = vshrl.u32 %v788, 7
      %v790 = vsub.s32 2, %v789
      %v791 = vrot.slane %v778, %v790
      %792 = vrot.lane.b32.xlu0 %v783, 2
      %v793 = vpop.permute.xlu0 %792
      %794 = vrot.lane.b32.xlu0 %v787, 2
      %v795 = vpop.permute.xlu0 %794
      %796 = vrot.lane.b32.xlu0 %v791, 2
      %v797 = vpop.permute.xlu0 %796
      %vm798 = vcmask 15360
      %v799 = vsel %vm798, %v793, %v795
      %v800 = vsel %vm798, %v795, %v797
      %v803 = vsel %vm339, %v799, 0.0
      %v804 = vsel %vm340, %v800, 0.0
      %v807 = vcombine.low %v803, %v804
      %v809 = vunpack.c.l.s4 1966171168
      %v810 = vunpack.c.0.s8 %v809
      %v811 = vlaneseq
      %v812 = vshrl.u32 %v811, 7
      %v813 = vsub.s32 %v810, %v812
      %v814 = vrot.slane %v807, %v813
      %v816 = vunpack.c.l.s4 1966171168
      %v817 = vunpack.c.0.s8 %v816
      %v818 = vlaneseq
      %v819 = vshrl.u32 %v818, 7
      %v820 = vsub.s32 %v817, %v819
      %v821 = vrot.slane %v814, %v820
      %s823 = scalar_lea.vmem [#allocation3], 18
      %824 = vst.msk [vmem:[%s823] ss:$8 sm:$0x3] %vm369, %v821
      %825 = vst.msk [vmem:[%s823] ss:$8 sm:$0x0] %vm369, %v821
      %v826 = vld [vmem:[#allocation2] ss:$8 sm:$0x7]
      %v828 = vlaneseq
      %v829 = vshrl.u32 %v828, 7
      %v830 = vsub.s32 0, %v829
      %v831 = vrot.slane %v826, %v830
      %v832 = vlaneseq
      %v833 = vshrl.u32 %v832, 7
      %v834 = vsub.s32 1, %v833
      %v835 = vrot.slane %v826, %v834
      %v836 = vlaneseq
      %v837 = vshrl.u32 %v836, 7
      %v838 = vsub.s32 2, %v837
      %v839 = vrot.slane %v826, %v838
      %840 = vrot.lane.b32.xlu0 %v831, 1
      %v841 = vpop.permute.xlu0 %840
      %842 = vrot.lane.b32.xlu0 %v835, 1
      %v843 = vpop.permute.xlu0 %842
      %844 = vrot.lane.b32.xlu0 %v839, 1
      %v845 = vpop.permute.xlu0 %844
      %vm846 = vcmask 7168
      %v847 = vsel %vm846, %v841, %v843
      %v848 = vsel %vm846, %v843, %v845
      %v851 = vsel %vm347, %v847, 0.0
      %v852 = vsel %vm348, %v848, 0.0
      %v855 = vcombine.low %v851, %v852
      %v857 = vunpack.c.l.s4 1966171168
      %v858 = vunpack.c.0.s8 %v857
      %v859 = vlaneseq
      %v860 = vshrl.u32 %v859, 7
      %v861 = vsub.s32 %v858, %v860
      %v862 = vrot.slane %v855, %v861
      %v864 = vunpack.c.l.s4 1966171168
      %v865 = vunpack.c.0.s8 %v864
      %v866 = vlaneseq
      %v867 = vshrl.u32 %v866, 7
      %v868 = vsub.s32 %v865, %v867
      %v869 = vrot.slane %v862, %v868
      %s871 = scalar_lea.vmem [#allocation3], 19
      %872 = vst.msk [vmem:[%s871] ss:$8 sm:$0x3] %vm369, %v869
      %873 = vst.msk [vmem:[%s871] ss:$8 sm:$0x0] %vm369, %v869
      %v874 = vld [vmem:[%s370] ss:$8 sm:$0x3]
      %s875 = scalar_lea.vmem [#allocation3], 20
      %876 = vst.msk [vmem:[%s875] ss:$8 sm:$0x3] %vm369, %v874
      %877 = vst.msk [vmem:[%s875] ss:$8 sm:$0x0] %vm369, %v874
      %s878 = scalar_lea.vmem [#allocation2], 8
      %v879 = vld [vmem:[%s878] ss:$8 sm:$0x7]
      %v881 = vlaneseq
      %v882 = vshrl.u32 %v881, 7
      %v883 = vsub.s32 0, %v882
      %v884 = vrot.slane %v879, %v883
      %v885 = vlaneseq
      %v886 = vshrl.u32 %v885, 7
      %v887 = vsub.s32 1, %v886
      %v888 = vrot.slane %v879, %v887
      %v889 = vlaneseq
      %v890 = vshrl.u32 %v889, 7
      %v891 = vsub.s32 2, %v890
      %v892 = vrot.slane %v879, %v891
      %893 = vrot.lane.b32.xlu0 %v884, 127
      %v894 = vpop.permute.xlu0 %893
      %895 = vrot.lane.b32.xlu0 %v888, 127
      %v896 = vpop.permute.xlu0 %895
      %897 = vrot.lane.b32.xlu0 %v892, 127
      %v898 = vpop.permute.xlu0 %897
      %vm899 = vcmask 1039360
      %v900 = vsel %vm899, %v894, %v896
      %v901 = vsel %vm899, %v896, %v898
      %v904 = vsel %vm355, %v900, 0.0
      %v905 = vsel %vm356, %v901, 0.0
      %v908 = vcombine.low %v904, %v905
      %v910 = vunpack.c.l.s4 1966171168
      %v911 = vunpack.c.0.s8 %v910
      %v912 = vlaneseq
      %v913 = vshrl.u32 %v912, 7
      %v914 = vsub.s32 %v911, %v913
      %v915 = vrot.slane %v908, %v914
      %v917 = vunpack.c.l.s4 1966171168
      %v918 = vunpack.c.0.s8 %v917
      %v919 = vlaneseq
      %v920 = vshrl.u32 %v919, 7
      %v921 = vsub.s32 %v918, %v920
      %v922 = vrot.slane %v915, %v921
      %s924 = scalar_lea.vmem [#allocation3], 21
      %925 = vst.msk [vmem:[%s924] ss:$8 sm:$0x3] %vm369, %v922
      %926 = vst.msk [vmem:[%s924] ss:$8 sm:$0x0] %vm369, %v922
      %v927 = vld [vmem:[%s878] ss:$8 sm:$0x7]
      %v929 = vlaneseq
      %v930 = vshrl.u32 %v929, 7
      %v931 = vsub.s32 0, %v930
      %v932 = vrot.slane %v927, %v931
      %v933 = vlaneseq
      %v934 = vshrl.u32 %v933, 7
      %v935 = vsub.s32 1, %v934
      %v936 = vrot.slane %v927, %v935
      %v937 = vlaneseq
      %v938 = vshrl.u32 %v937, 7
      %v939 = vsub.s32 2, %v938
      %v940 = vrot.slane %v927, %v939
      %941 = vrot.lane.b32.xlu0 %v932, 126
      %v942 = vpop.permute.xlu0 %941
      %943 = vrot.lane.b32.xlu0 %v936, 126
      %v944 = vpop.permute.xlu0 %943
      %945 = vrot.lane.b32.xlu0 %v940, 126
      %v946 = vpop.permute.xlu0 %945
      %vm947 = vcmask 1031168
      %v948 = vsel %vm947, %v942, %v944
      %v949 = vsel %vm947, %v944, %v946
      %v952 = vsel %vm363, %v948, 0.0
      %v953 = vsel %vm364, %v949, 0.0
      %v956 = vcombine.low %v952, %v953
      %v958 = vunpack.c.l.s4 1966171168
      %v959 = vunpack.c.0.s8 %v958
      %v960 = vlaneseq
      %v961 = vshrl.u32 %v960, 7
      %v962 = vsub.s32 %v959, %v961
      %v963 = vrot.slane %v956, %v962
      %v965 = vunpack.c.l.s4 1966171168
      %v966 = vunpack.c.0.s8 %v965
      %v967 = vlaneseq
      %v968 = vshrl.u32 %v967, 7
      %v969 = vsub.s32 %v966, %v968
      %v970 = vrot.slane %v963, %v969
      %s972 = scalar_lea.vmem [#allocation3], 22
      %973 = vst.msk [vmem:[%s972] ss:$8 sm:$0x3] %vm369, %v970
      %974 = vst.msk [vmem:[%s972] ss:$8 sm:$0x0] %vm369, %v970
      %v975 = vld [vmem:[%s878] ss:$8 sm:$0x7]
      %v977 = vlaneseq
      %v978 = vshrl.u32 %v977, 7
      %v979 = vsub.s32 0, %v978
      %v980 = vrot.slane %v975, %v979
      %v981 = vlaneseq
      %v982 = vshrl.u32 %v981, 7
      %v983 = vsub.s32 1, %v982
      %v984 = vrot.slane %v975, %v983
      %v985 = vlaneseq
      %v986 = vshrl.u32 %v985, 7
      %v987 = vsub.s32 2, %v986
      %v988 = vrot.slane %v975, %v987
      %989 = vrot.lane.b32.xlu0 %v980, 114
      %v990 = vpop.permute.xlu0 %989
      %991 = vrot.lane.b32.xlu0 %v984, 114
      %v992 = vpop.permute.xlu0 %991
      %993 = vrot.lane.b32.xlu0 %v988, 114
      %v994 = vpop.permute.xlu0 %993
      %vm995 = vcmask 932864
      %v996 = vsel %vm995, %v990, %v992
      %v997 = vsel %vm995, %v992, %v994
      %v1000 = vsel %vm339, %v996, 0.0
      %v1001 = vsel %vm340, %v997, 0.0
      %v1004 = vcombine.low %v1000, %v1001
      %v1006 = vunpack.c.l.s4 1966171168
      %v1007 = vunpack.c.0.s8 %v1006
      %v1008 = vlaneseq
      %v1009 = vshrl.u32 %v1008, 7
      %v1010 = vsub.s32 %v1007, %v1009
      %v1011 = vrot.slane %v1004, %v1010
      %v1013 = vunpack.c.l.s4 1966171168
      %v1014 = vunpack.c.0.s8 %v1013
      %v1015 = vlaneseq
      %v1016 = vshrl.u32 %v1015, 7
      %v1017 = vsub.s32 %v1014, %v1016
      %v1018 = vrot.slane %v1011, %v1017
      %s1020 = scalar_lea.vmem [#allocation3], 23
      %1021 = vst.msk [vmem:[%s1020] ss:$8 sm:$0x3] %vm369, %v1018
      %1022 = vst.msk [vmem:[%s1020] ss:$8 sm:$0x0] %vm369, %v1018
      %v1023 = vld [vmem:[%s878] ss:$8 sm:$0x7]
      %v1025 = vlaneseq
      %v1026 = vshrl.u32 %v1025, 7
      %v1027 = vsub.s32 0, %v1026
      %v1028 = vrot.slane %v1023, %v1027
      %v1029 = vlaneseq
      %v1030 = vshrl.u32 %v1029, 7
      %v1031 = vsub.s32 1, %v1030
      %v1032 = vrot.slane %v1023, %v1031
      %v1033 = vlaneseq
      %v1034 = vshrl.u32 %v1033, 7
      %v1035 = vsub.s32 2, %v1034
      %v1036 = vrot.slane %v1023, %v1035
      %1037 = vrot.lane.b32.xlu0 %v1028, 113
      %v1038 = vpop.permute.xlu0 %1037
      %1039 = vrot.lane.b32.xlu0 %v1032, 113
      %v1040 = vpop.permute.xlu0 %1039
      %1041 = vrot.lane.b32.xlu0 %v1036, 113
      %v1042 = vpop.permute.xlu0 %1041
      %vm1043 = vcmask 924672
      %v1044 = vsel %vm1043, %v1038, %v1040
      %v1045 = vsel %vm1043, %v1040, %v1042
      %v1048 = vsel %vm347, %v1044, 0.0
      %v1049 = vsel %vm348, %v1045, 0.0
      %v1052 = vcombine.low %v1048, %v1049
      %v1054 = vunpack.c.l.s4 1966171168
      %v1055 = vunpack.c.0.s8 %v1054
      %v1056 = vlaneseq
      %v1057 = vshrl.u32 %v1056, 7
      %v1058 = vsub.s32 %v1055, %v1057
      %v1059 = vrot.slane %v1052, %v1058
      %v1061 = vunpack.c.l.s4 1966171168
      %v1062 = vunpack.c.0.s8 %v1061
      %v1063 = vlaneseq
      %v1064 = vshrl.u32 %v1063, 7
      %v1065 = vsub.s32 %v1062, %v1064
      %v1066 = vrot.slane %v1059, %v1065
      %s1068 = scalar_lea.vmem [#allocation3], 32
      %1069 = vst.msk [vmem:[%s1068] ss:$8 sm:$0x3] %vm369, %v1066
      %1070 = vst.msk [vmem:[%s1068] ss:$8 sm:$0x0] %vm369, %v1066
      %v1071 = vld [vmem:[%s878] ss:$8 sm:$0x7]
      %1073 = vrot.lane.b32.xlu0 %v1071, 112
      %v1074 = vpop.permute.xlu0 %1073
      %v1075 = vrot.slane %v1074, 1
      %vm1076 = vcmask 916480
      %v1077 = vsel %vm1076, %v1074, %v1075
      %s1079 = scalar_lea.vmem [#allocation3], 33
      %1080 = vst.msk [vmem:[%s1079] ss:$8 sm:$0x3] %vm369, %v1077
      %1081 = vst.msk [vmem:[%s1079] ss:$8 sm:$0x0] %vm369, %v1077
      %v1082 = vld [vmem:[%s878] ss:$8 sm:$0x7]
      %v1084 = vlaneseq
      %v1085 = vshrl.u32 %v1084, 7
      %v1086 = vsub.s32 0, %v1085
      %v1087 = vrot.slane %v1082, %v1086
      %v1088 = vlaneseq
      %v1089 = vshrl.u32 %v1088, 7
      %v1090 = vsub.s32 1, %v1089
      %v1091 = vrot.slane %v1082, %v1090
      %v1092 = vlaneseq
      %v1093 = vshrl.u32 %v1092, 7
      %v1094 = vsub.s32 2, %v1093
      %v1095 = vrot.slane %v1082, %v1094
      %1096 = vrot.lane.b32.xlu0 %v1087, 111
      %v1097 = vpop.permute.xlu0 %1096
      %1098 = vrot.lane.b32.xlu0 %v1091, 111
      %v1099 = vpop.permute.xlu0 %1098
      %1100 = vrot.lane.b32.xlu0 %v1095, 111
      %v1101 = vpop.permute.xlu0 %1100
      %vm1102 = vcmask 908288
      %v1103 = vsel %vm1102, %v1097, %v1099
      %v1104 = vsel %vm1102, %v1099, %v1101
      %v1107 = vsel %vm355, %v1103, 0.0
      %v1108 = vsel %vm356, %v1104, 0.0
      %v1111 = vcombine.low %v1107, %v1108
      %v1113 = vunpack.c.l.s4 1966171168
      %v1114 = vunpack.c.0.s8 %v1113
      %v1115 = vlaneseq
      %v1116 = vshrl.u32 %v1115, 7
      %v1117 = vsub.s32 %v1114, %v1116
      %v1118 = vrot.slane %v1111, %v1117
      %v1120 = vunpack.c.l.s4 1966171168
      %v1121 = vunpack.c.0.s8 %v1120
      %v1122 = vlaneseq
      %v1123 = vshrl.u32 %v1122, 7
      %v1124 = vsub.s32 %v1121, %v1123
      %v1125 = vrot.slane %v1118, %v1124
      %s1127 = scalar_lea.vmem [#allocation3], 34
      %1128 = vst.msk [vmem:[%s1127] ss:$8 sm:$0x3] %vm369, %v1125
      %1129 = vst.msk [vmem:[%s1127] ss:$8 sm:$0x0] %vm369, %v1125
      %v1130 = vld [vmem:[%s878] ss:$8 sm:$0x7]
      %v1132 = vlaneseq
      %v1133 = vshrl.u32 %v1132, 7
      %v1134 = vsub.s32 0, %v1133
      %v1135 = vrot.slane %v1130, %v1134
      %v1136 = vlaneseq
      %v1137 = vshrl.u32 %v1136, 7
      %v1138 = vsub.s32 1, %v1137
      %v1139 = vrot.slane %v1130, %v1138
      %v1140 = vlaneseq
      %v1141 = vshrl.u32 %v1140, 7
      %v1142 = vsub.s32 2, %v1141
      %v1143 = vrot.slane %v1130, %v1142
      %1144 = vrot.lane.b32.xlu0 %v1135, 110
      %v1145 = vpop.permute.xlu0 %1144
      %1146 = vrot.lane.b32.xlu0 %v1139, 110
      %v1147 = vpop.permute.xlu0 %1146
      %1148 = vrot.lane.b32.xlu0 %v1143, 110
      %v1149 = vpop.permute.xlu0 %1148
      %vm1150 = vcmask 900096
      %v1151 = vsel %vm1150, %v1145, %v1147
      %v1152 = vsel %vm1150, %v1147, %v1149
      %v1155 = vsel %vm363, %v1151, 0.0
      %v1156 = vsel %vm364, %v1152, 0.0
      %v1159 = vcombine.low %v1155, %v1156
      %v1161 = vunpack.c.l.s4 1966171168
      %v1162 = vunpack.c.0.s8 %v1161
      %v1163 = vlaneseq
      %v1164 = vshrl.u32 %v1163, 7
      %v1165 = vsub.s32 %v1162, %v1164
      %v1166 = vrot.slane %v1159, %v1165
      %v1168 = vunpack.c.l.s4 1966171168
      %v1169 = vunpack.c.0.s8 %v1168
      %v1170 = vlaneseq
      %v1171 = vshrl.u32 %v1170, 7
      %v1172 = vsub.s32 %v1169, %v1171
      %v1173 = vrot.slane %v1166, %v1172
      %s1175 = scalar_lea.vmem [#allocation3], 35
      %1176 = vst.msk [vmem:[%s1175] ss:$8 sm:$0x3] %vm369, %v1173
      %1177 = vst.msk [vmem:[%s1175] ss:$8 sm:$0x0] %vm369, %v1173
      %v1178 = vld [vmem:[%s878] ss:$8 sm:$0x7]
      %v1180 = vlaneseq
      %v1181 = vshrl.u32 %v1180, 7
      %v1182 = vsub.s32 0, %v1181
      %v1183 = vrot.slane %v1178, %v1182
      %v1184 = vlaneseq
      %v1185 = vshrl.u32 %v1184, 7
      %v1186 = vsub.s32 1, %v1185
      %v1187 = vrot.slane %v1178, %v1186
      %v1188 = vlaneseq
      %v1189 = vshrl.u32 %v1188, 7
      %v1190 = vsub.s32 2, %v1189
      %v1191 = vrot.slane %v1178, %v1190
      %1192 = vrot.lane.b32.xlu0 %v1183, 98
      %v1193 = vpop.permute.xlu0 %1192
      %1194 = vrot.lane.b32.xlu0 %v1187, 98
      %v1195 = vpop.permute.xlu0 %1194
      %1196 = vrot.lane.b32.xlu0 %v1191, 98
      %v1197 = vpop.permute.xlu0 %1196
      %vm1198 = vcmask 801792
      %v1199 = vsel %vm1198, %v1193, %v1195
      %v1200 = vsel %vm1198, %v1195, %v1197
      %v1203 = vsel %vm339, %v1199, 0.0
      %v1204 = vsel %vm340, %v1200, 0.0
      %v1207 = vcombine.low %v1203, %v1204
      %v1209 = vunpack.c.l.s4 1966171168
      %v1210 = vunpack.c.0.s8 %v1209
      %v1211 = vlaneseq
      %v1212 = vshrl.u32 %v1211, 7
      %v1213 = vsub.s32 %v1210, %v1212
      %v1214 = vrot.slane %v1207, %v1213
      %v1216 = vunpack.c.l.s4 1966171168
      %v1217 = vunpack.c.0.s8 %v1216
      %v1218 = vlaneseq
      %v1219 = vshrl.u32 %v1218, 7
      %v1220 = vsub.s32 %v1217, %v1219
      %v1221 = vrot.slane %v1214, %v1220
      %s1223 = scalar_lea.vmem [#allocation3], 36
      %1224 = vst.msk [vmem:[%s1223] ss:$8 sm:$0x3] %vm369, %v1221
      %1225 = vst.msk [vmem:[%s1223] ss:$8 sm:$0x0] %vm369, %v1221
      %v1226 = vld [vmem:[%s878] ss:$8 sm:$0x7]
      %v1228 = vlaneseq
      %v1229 = vshrl.u32 %v1228, 7
      %v1230 = vsub.s32 0, %v1229
      %v1231 = vrot.slane %v1226, %v1230
      %v1232 = vlaneseq
      %v1233 = vshrl.u32 %v1232, 7
      %v1234 = vsub.s32 1, %v1233
      %v1235 = vrot.slane %v1226, %v1234
      %v1236 = vlaneseq
      %v1237 = vshrl.u32 %v1236, 7
      %v1238 = vsub.s32 2, %v1237
      %v1239 = vrot.slane %v1226, %v1238
      %1240 = vrot.lane.b32.xlu0 %v1231, 97
      %v1241 = vpop.permute.xlu0 %1240
      %1242 = vrot.lane.b32.xlu0 %v1235, 97
      %v1243 = vpop.permute.xlu0 %1242
      %1244 = vrot.lane.b32.xlu0 %v1239, 97
      %v1245 = vpop.permute.xlu0 %1244
      %vm1246 = vcmask 793600
      %v1247 = vsel %vm1246, %v1241, %v1243
      %v1248 = vsel %vm1246, %v1243, %v1245
      %v1251 = vsel %vm347, %v1247, 0.0
      %v1252 = vsel %vm348, %v1248, 0.0
      %v1255 = vcombine.low %v1251, %v1252
      %v1257 = vunpack.c.l.s4 1966171168
      %v1258 = vunpack.c.0.s8 %v1257
      %v1259 = vlaneseq
      %v1260 = vshrl.u32 %v1259, 7
      %v1261 = vsub.s32 %v1258, %v1260
      %v1262 = vrot.slane %v1255, %v1261
      %v1264 = vunpack.c.l.s4 1966171168
      %v1265 = vunpack.c.0.s8 %v1264
      %v1266 = vlaneseq
      %v1267 = vshrl.u32 %v1266, 7
      %v1268 = vsub.s32 %v1265, %v1267
      %v1269 = vrot.slane %v1262, %v1268
      %s1271 = scalar_lea.vmem [#allocation3], 37
      %1272 = vst.msk [vmem:[%s1271] ss:$8 sm:$0x3] %vm369, %v1269
      %1273 = vst.msk [vmem:[%s1271] ss:$8 sm:$0x0] %vm369, %v1269
      %v1274 = vld [vmem:[%s878] ss:$8 sm:$0x7]
      %1276 = vrot.lane.b32.xlu0 %v1274, 96
      %v1277 = vpop.permute.xlu0 %1276
      %v1278 = vrot.slane %v1277, 1
      %vm1279 = vcmask 785408
      %v1280 = vsel %vm1279, %v1277, %v1278
      %s1282 = scalar_lea.vmem [#allocation3], 38
      %1283 = vst.msk [vmem:[%s1282] ss:$8 sm:$0x3] %vm369, %v1280
      %1284 = vst.msk [vmem:[%s1282] ss:$8 sm:$0x0] %vm369, %v1280
      %v1285 = vld [vmem:[%s878] ss:$8 sm:$0x7]
      %v1287 = vlaneseq
      %v1288 = vshrl.u32 %v1287, 7
      %v1289 = vsub.s32 0, %v1288
      %v1290 = vrot.slane %v1285, %v1289
      %v1291 = vlaneseq
      %v1292 = vshrl.u32 %v1291, 7
      %v1293 = vsub.s32 1, %v1292
      %v1294 = vrot.slane %v1285, %v1293
      %v1295 = vlaneseq
      %v1296 = vshrl.u32 %v1295, 7
      %v1297 = vsub.s32 2, %v1296
      %v1298 = vrot.slane %v1285, %v1297
      %1299 = vrot.lane.b32.xlu0 %v1290, 95
      %v1300 = vpop.permute.xlu0 %1299
      %1301 = vrot.lane.b32.xlu0 %v1294, 95
      %v1302 = vpop.permute.xlu0 %1301
      %1303 = vrot.lane.b32.xlu0 %v1298, 95
      %v1304 = vpop.permute.xlu0 %1303
      %vm1305 = vcmask 777216
      %v1306 = vsel %vm1305, %v1300, %v1302
      %v1307 = vsel %vm1305, %v1302, %v1304
      %v1310 = vsel %vm355, %v1306, 0.0
      %v1311 = vsel %vm356, %v1307, 0.0
      %v1314 = vcombine.low %v1310, %v1311
      %v1316 = vunpack.c.l.s4 1966171168
      %v1317 = vunpack.c.0.s8 %v1316
      %v1318 = vlaneseq
      %v1319 = vshrl.u32 %v1318, 7
      %v1320 = vsub.s32 %v1317, %v1319
      %v1321 = vrot.slane %v1314, %v1320
      %v1323 = vunpack.c.l.s4 1966171168
      %v1324 = vunpack.c.0.s8 %v1323
      %v1325 = vlaneseq
      %v1326 = vshrl.u32 %v1325, 7
      %v1327 = vsub.s32 %v1324, %v1326
      %v1328 = vrot.slane %v1321, %v1327
      %s1330 = scalar_lea.vmem [#allocation3], 39
      %1331 = vst.msk [vmem:[%s1330] ss:$8 sm:$0x3] %vm369, %v1328
      %1332 = vst.msk [vmem:[%s1330] ss:$8 sm:$0x0] %vm369, %v1328
      %v1333 = vld [vmem:[%s878] ss:$8 sm:$0x7]
      %v1335 = vlaneseq
      %v1336 = vshrl.u32 %v1335, 7
      %v1337 = vsub.s32 0, %v1336
      %v1338 = vrot.slane %v1333, %v1337
      %v1339 = vlaneseq
      %v1340 = vshrl.u32 %v1339, 7
      %v1341 = vsub.s32 1, %v1340
      %v1342 = vrot.slane %v1333, %v1341
      %v1343 = vlaneseq
      %v1344 = vshrl.u32 %v1343, 7
      %v1345 = vsub.s32 2, %v1344
      %v1346 = vrot.slane %v1333, %v1345
      %1347 = vrot.lane.b32.xlu0 %v1338, 94
      %v1348 = vpop.permute.xlu0 %1347
      %1349 = vrot.lane.b32.xlu0 %v1342, 94
      %v1350 = vpop.permute.xlu0 %1349
      %1351 = vrot.lane.b32.xlu0 %v1346, 94
      %v1352 = vpop.permute.xlu0 %1351
      %vm1353 = vcmask 769024
      %v1354 = vsel %vm1353, %v1348, %v1350
      %v1355 = vsel %vm1353, %v1350, %v1352
      %v1358 = vsel %vm363, %v1354, 0.0
      %v1359 = vsel %vm364, %v1355, 0.0
      %v1362 = vcombine.low %v1358, %v1359
      %v1364 = vunpack.c.l.s4 1966171168
      %v1365 = vunpack.c.0.s8 %v1364
      %v1366 = vlaneseq
      %v1367 = vshrl.u32 %v1366, 7
      %v1368 = vsub.s32 %v1365, %v1367
      %v1369 = vrot.slane %v1362, %v1368
      %v1371 = vunpack.c.l.s4 1966171168
      %v1372 = vunpack.c.0.s8 %v1371
      %v1373 = vlaneseq
      %v1374 = vshrl.u32 %v1373, 7
      %v1375 = vsub.s32 %v1372, %v1374
      %v1376 = vrot.slane %v1369, %v1375
      %s1378 = scalar_lea.vmem [#allocation3], 48
      %1379 = vst.msk [vmem:[%s1378] ss:$8 sm:$0x3] %vm369, %v1376
      %1380 = vst.msk [vmem:[%s1378] ss:$8 sm:$0x0] %vm369, %v1376
      %v1381 = vld [vmem:[%s1] sm:$0xf]
      %v1382 = vld [vmem:[%s1 + $0x4] sm:$0x1]
      %v1383 = vld [vmem:[#allocation3] sm:$0xff]
      %v1384 = vld [vmem:[#allocation3 + $0x8] sm:$0xff]
      %v1385 = vld [vmem:[#allocation3 + $0x10] sm:$0xff]
      %v1386 = vld [vmem:[#allocation3 + $0x18] sm:$0xff]
      %v1387 = vld [vmem:[#allocation3 + $0x20] sm:$0xff]
      %v1388 = vld [vmem:[#allocation3 + $0x28] sm:$0xff]
      %v1389 = vld [vmem:[#allocation3 + $0x30] sm:$0x1]
      %v1390 = vld [vmem:[#allocation3 + $0x38] sm:$0x1]
      %v1391 = vpack.c.bf16 %v1385, %v1383
      %v1392 = vpack.c.bf16 %v1386, %v1384
      %v1393 = vpack.c.bf16 %v1389, %v1387
      %v1394 = vpack.c.bf16 %v1390, %v1388
      %v1395 = vld [vmem:[%s3] sm:$0xff]
      %v1396 = vld [vmem:[%s3 + $0x8] sm:$0x3]
      %1398 = vset.pattern.permute.xlu0 0
      %1399 = vperm.xlu0 %1398, %v1395
      %v1400 = vpop.permute.xlu0 %1399
      %1403 = vset.pattern.permute.xlu0 0
      %1404 = vperm.xlu0 %1403, %v1396
      %v1405 = vpop.permute.xlu0 %1404
      %v1409 = vunpack.c.l.b16 %v1381
      %v1410 = vunpack.c.l.b16 %v1382
      %v1411 = vpack.c.b16 %v1410, %v1409
      %vm1412 = vcmask 203776
      %v1414 = vsel %vm1412, %v1411, 0
      %vm1416 = vcmask 1043456
      %vm1417 = vcmask 1044480
      %v1418 = vsel %vm1416, 4294967295, 65535
      %v1419 = vsel %vm1417, %v1418, 0
      %v1421 = vand.u32 %v1393, %v1419
      %v1424 = vand.u32 %v1394, %v1419
      %1426 = vmatprep.subr.bf16.mxu0 0
      %1427 = vmatpush1.bf16.msra.mxu0 0
      %1428 = vmatprep.subr.bf16.mxu0 0
      %1429 = vmatpush1.bf16.msra.mxu0 0
      %1430 = vmatprep.subr.bf16.mxu0 0
      %1431 = vmatpush1.bf16.msra.mxu0 0
      %1432 = vmatprep.subr.bf16.mxu0 0
      %1433 = vmatpush1.bf16.msra.mxu0 0
      %1434 = vmatprep.subr.bf16.mxu0 0
      %1435 = vmatpush1.bf16.msra.mxu0 0
      %1436 = vmatprep.subr.bf16.mxu0 0
      %1437 = vmatpush1.bf16.msra.mxu0 0
      %1438 = vmatprep.subr.bf16.mxu0 %v1424
      %1439 = vmatpush1.bf16.msra.mxu0 %v1421
      %1440 = vmatprep.subr.bf16.mxu0 %v1392
      %1441 = vmatpush1.bf16.msra.mxu0 %v1391
      %1442 = vmatprep.subr.bf16.mxu0 0
      %1443 = vmatpush2.bf16.msra.mxu0 0
      %1444 = vmatprep.subr.bf16.mxu0 0
      %1445 = vmatpush2.bf16.msra.mxu0 0
      %1446 = vmatprep.subr.bf16.mxu0 0
      %1447 = vmatpush2.bf16.msra.mxu0 0
      %1448 = vmatprep.subr.bf16.mxu0 0
      %1449 = vmatpush2.bf16.msra.mxu0 0
      %1450 = vmatprep.subr.bf16.mxu0 0
      %1451 = vmatpush2.bf16.msra.mxu0 0
      %1452 = vmatprep.subr.bf16.mxu0 0
      %1453 = vmatpush2.bf16.msra.mxu0 0
      %1454 = vmatprep.subr.bf16.mxu0 0
      %1455 = vmatpush2.bf16.msra.mxu0 0
      %1456 = vmatprep.subr.bf16.mxu0 0
      %1457 = vmatpush2.bf16.msra.mxu0 0
      %1458 = vmatprep.mubr.bf16.mxu0 0
      %1459 = vmatmul.mubr.bf16.gmra.mxu0 %v1414
      %v1460 = vpop.f32.mrf.mxu0
      %v1461 = vadd.f32 %v1400, %v1460
      %v1462 = vpop.f32.mrf.mxu0
      %v1463 = vadd.f32 %v1400, %v1462
      %v1464 = vpop.f32.mrf.mxu0
      %v1465 = vadd.f32 %v1405, %v1464
      %v1466 = vpop.f32.mrf.mxu0
      %v1467 = vadd.f32 %v1405, %v1466
      %1468 = vdwg.mxu0
      %v1469 = vld [vmem:[%s7] sm:$0xff]
      %v1470 = vld [vmem:[%s7 + $0x8] sm:$0xff]
      %v1471 = vld [vmem:[%s7 + $0x10] sm:$0xff]
      %v1472 = vld [vmem:[%s7 + $0x18] sm:$0xff]
      %v1473 = vld [vmem:[%s7 + $0x20] sm:$0x3f]
      %v1474 = vld [vmem:[%s7 + $0x26] sm:$0xff]
      %v1475 = vld [vmem:[%s4] sm:$0xf]
      %v1476 = vld [vmem:[%s4 + $0x4] sm:$0xf]
      %v1477 = vld [vmem:[%s4 + $0x8] sm:$0xf]
      %v1478 = vld [vmem:[%s4 + $0xc] sm:$0xf]
      %v1479 = vpack.c.bf16 %v1461, %v1461
      %v1480 = vpack.c.bf16 %v1463, %v1463
      %1482 = vset.pattern.permute.xlu0 0
      %1483 = vperm.xlu0 %1482, %v1469
      %v1484 = vpop.permute.xlu0 %1483
      %1487 = vset.pattern.permute.xlu0 0
      %1488 = vperm.xlu0 %1487, %v1470
      %v1489 = vpop.permute.xlu0 %1488
      %1492 = vset.pattern.permute.xlu0 0
      %1493 = vperm.xlu0 %1492, %v1471
      %v1494 = vpop.permute.xlu0 %1493
      %1497 = vset.pattern.permute.xlu0 0
      %1498 = vperm.xlu0 %1497, %v1472
      %v1499 = vpop.permute.xlu0 %1498
      %v1505 = vunpack.c.l.b16 %v1475
      %v1506 = vunpack.c.l.b16 %v1476
      %v1507 = vunpack.c.l.b16 %v1477
      %v1508 = vunpack.c.l.b16 %v1478
      %v1509 = vpack.c.b16 %v1506, %v1505
      %v1510 = vpack.c.b16 %v1508, %v1507
      %vm1511 = vcmask 64512
      %v1513 = vsel %vm1511, %v1509, 0
      %v1516 = vsel %vm1511, %v1510, 0
      %v1519 = vsel %vm1416, %v1479, 0
      %v1522 = vsel %vm1416, %v1480, 0
      %1524 = vmatprep.subr.bf16.mxu0 0
      %1525 = vmatpush1.bf16.msra.mxu0 0
      %1526 = vmatprep.subr.bf16.mxu0 0
      %1527 = vmatpush1.bf16.msra.mxu0 0
      %1528 = vmatprep.subr.bf16.mxu0 0
      %1529 = vmatpush1.bf16.msra.mxu0 0
      %1530 = vmatprep.subr.bf16.mxu0 0
      %1531 = vmatpush1.bf16.msra.mxu0 0
      %1532 = vmatprep.subr.bf16.mxu0 0
      %1533 = vmatpush1.bf16.msra.mxu0 0
      %1534 = vmatprep.subr.bf16.mxu0 0
      %1535 = vmatpush1.bf16.msra.mxu0 0
      %1536 = vmatprep.subr.bf16.mxu0 0
      %1537 = vmatpush1.bf16.msra.mxu0 0
      %1538 = vmatprep.subr.bf16.mxu0 %v1522
      %1539 = vmatpush1.bf16.msra.mxu0 %v1519
      %1540 = vmatprep.subr.bf16.mxu0 0
      %1541 = vmatpush2.bf16.msra.mxu0 0
      %1542 = vmatprep.subr.bf16.mxu0 0
      %1543 = vmatpush2.bf16.msra.mxu0 0
      %1544 = vmatprep.subr.bf16.mxu0 0
      %1545 = vmatpush2.bf16.msra.mxu0 0
      %1546 = vmatprep.subr.bf16.mxu0 0
      %1547 = vmatpush2.bf16.msra.mxu0 0
      %1548 = vmatprep.subr.bf16.mxu0 0
      %1549 = vmatpush2.bf16.msra.mxu0 0
      %1550 = vmatprep.subr.bf16.mxu0 0
      %1551 = vmatpush2.bf16.msra.mxu0 0
      %1552 = vmatprep.subr.bf16.mxu0 0
      %1553 = vmatpush2.bf16.msra.mxu0 0
      %1554 = vmatprep.subr.bf16.mxu0 0
      %1555 = vmatpush2.bf16.msra.mxu0 0
      %1556 = vmatprep.mubr.bf16.mxu0 0
      %1557 = vmatmul.mubr.bf16.gmra.mxu0 %v1513
      %v1558 = vpop.f32.mrf.mxu0
      %v1559 = vadd.f32 %v1484, %v1558
      %v1560 = vpop.f32.mrf.mxu0
      %v1561 = vadd.f32 %v1484, %v1560
      %v1562 = vpop.f32.mrf.mxu0
      %v1563 = vadd.f32 %v1489, %v1562
      %v1564 = vpop.f32.mrf.mxu0
      %v1565 = vadd.f32 %v1489, %v1564
      %1566 = vmatprep.mubr.bf16.mxu0 0
      %1567 = vmatmul.mubr.bf16.gmra.mxu0 %v1516
      %v1568 = vpop.f32.mrf.mxu0
      %v1569 = vadd.f32 %v1494, %v1568
      %v1570 = vpop.f32.mrf.mxu0
      %v1571 = vadd.f32 %v1494, %v1570
      %v1572 = vpop.f32.mrf.mxu0
      %v1573 = vadd.f32 %v1499, %v1572
      %v1574 = vpop.f32.mrf.mxu0
      %v1575 = vadd.f32 %v1499, %v1574
      %1576 = vdwg.mxu0
      %v1577 = vmax.f32 %v1559, 0.0
      %v1578 = vmax.f32 %v1561, 0.0
      %v1579 = vmax.f32 %v1563, 0.0
      %v1580 = vmax.f32 %v1565, 0.0
      %v1581 = vmax.f32 %v1569, 0.0
      %v1582 = vmax.f32 %v1571, 0.0
      %v1583 = vmax.f32 %v1573, 0.0
      %v1584 = vmax.f32 %v1575, 0.0
      %v1585 = vld [vmem:[%s5] sm:$0x7]
      %v1586 = vpack.c.bf16 %v1579, %v1577
      %v1587 = vpack.c.bf16 %v1580, %v1578
      %v1588 = vpack.c.bf16 %v1583, %v1581
      %v1589 = vpack.c.bf16 %v1584, %v1582
      %1591 = vset.pattern.permute.xlu0 0
      %1592 = vperm.xlu0 %1591, %v1473
      %v1593 = vpop.permute.xlu0 %1592
      %v1596 = vsel %vm473, %v1585, 0
      %1598 = vmatprep.subr.bf16.mxu0 0
      %1599 = vmatpush1.bf16.msra.mxu0 0
      %1600 = vmatprep.subr.bf16.mxu0 0
      %1601 = vmatpush1.bf16.msra.mxu0 0
      %1602 = vmatprep.subr.bf16.mxu0 0
      %1603 = vmatpush1.bf16.msra.mxu0 0
      %1604 = vmatprep.subr.bf16.mxu0 0
      %1605 = vmatpush1.bf16.msra.mxu0 0
      %1606 = vmatprep.subr.bf16.mxu0 0
      %1607 = vmatpush1.bf16.msra.mxu0 0
      %1608 = vmatprep.subr.bf16.mxu0 0
      %1609 = vmatpush1.bf16.msra.mxu0 0
      %1610 = vmatprep.subr.bf16.mxu0 %v1589
      %1611 = vmatpush1.bf16.msra.mxu0 %v1588
      %1612 = vmatprep.subr.bf16.mxu0 %v1587
      %1613 = vmatpush1.bf16.msra.mxu0 %v1586
      %1614 = vmatprep.subr.bf16.mxu0 0
      %1615 = vmatpush2.bf16.msra.mxu0 0
      %1616 = vmatprep.subr.bf16.mxu0 0
      %1617 = vmatpush2.bf16.msra.mxu0 0
      %1618 = vmatprep.subr.bf16.mxu0 0
      %1619 = vmatpush2.bf16.msra.mxu0 0
      %1620 = vmatprep.subr.bf16.mxu0 0
      %1621 = vmatpush2.bf16.msra.mxu0 0
      %1622 = vmatprep.subr.bf16.mxu0 0
      %1623 = vmatpush2.bf16.msra.mxu0 0
      %1624 = vmatprep.subr.bf16.mxu0 0
      %1625 = vmatpush2.bf16.msra.mxu0 0
      %1626 = vmatprep.subr.bf16.mxu0 0
      %1627 = vmatpush2.bf16.msra.mxu0 0
      %1628 = vmatprep.subr.bf16.mxu0 0
      %1629 = vmatpush2.bf16.msra.mxu0 0
      %1630 = vmatprep.mubr.bf16.mxu0 0
      %1631 = vmatmul.mubr.bf16.gmra.mxu0 %v1596
      %v1632 = vpop.f32.mrf.mxu0
      %v1633 = vadd.f32 %v1593, %v1632
      %v1634 = vpop.f32.mrf.mxu0
      %v1635 = vadd.f32 %v1593, %v1634
      %v1636 = vpop.f32.mrf.mxu0
      %v1637 = vpop.f32.mrf.mxu0
      %1638 = vdwg.mxu0
      %1639 = vst [vmem:[#allocation2 + $0x8] sm:$0x3f] %v1633
      %1640 = vst [vmem:[#allocation2 + $0x10] sm:$0x3f] %v1635
      %v1641 = vld [vmem:[#allocation2] sm:$0x3f]
      %v1642 = vld [vmem:[#allocation2 + $0x8] sm:$0x3f]
      %v1643 = vld [vmem:[#allocation2 + $0x10] sm:$0x3f]
      %v1644 = vsel %vm347, 1, 0
      %v1645 = vsel %vm348, 1, 0
      %vm1646 = vcmp.eq.s32.totalorder %v1644, 1
      %vm1647 = vcmp.eq.s32.totalorder %v1645, 1
      %1651 = vrot.lane.b32.xlu0 %v1641, 17
      %v1652 = vpop.permute.xlu0 %1651
      %1653 = vrot.lane.b32.xlu0 %v1642, 17
      %v1654 = vpop.permute.xlu0 %1653
      %1655 = vrot.lane.b32.xlu0 %v1643, 17
      %v1656 = vpop.permute.xlu0 %1655
      %v1657 = vsel %vm643, %v1652, %v1654
      %v1658 = vsel %vm643, %v1654, %v1656
      %v1661 = vsel %vm1646, %v1657, 0.0
      %v1662 = vsel %vm1647, %v1658, 0.0
      %1663 = vst [vmem:[#allocation3] sm:$0x3f] %v1661
      %1664 = vst [vmem:[#allocation3 + $0x8] sm:$0x3f] %v1662
      %v1665 = vld [vmem:[#allocation2] sm:$0x3f]
      %v1666 = vld [vmem:[#allocation2 + $0x8] sm:$0x3f]
      %v1667 = vld [vmem:[#allocation2 + $0x10] sm:$0x3f]
      %v1671 = vrot.slane %v1665, 2
      %v1672 = vrot.slane %v1666, 2
      %v1673 = vrot.slane %v1667, 2
      %1674 = vrot.lane.b32.xlu0 %v1671, 16
      %v1675 = vpop.permute.xlu0 %1674
      %1676 = vrot.lane.b32.xlu0 %v1672, 16
      %v1677 = vpop.permute.xlu0 %1676
      %1678 = vrot.lane.b32.xlu0 %v1673, 16
      %v1679 = vpop.permute.xlu0 %1678
      %v1680 = vsel %vm676, %v1675, %v1677
      %v1681 = vsel %vm676, %v1677, %v1679
      %1684 = vst [vmem:[#allocation3] sm:$0xc0] %v1680
      %1685 = vst [vmem:[#allocation3 + $0x8] sm:$0xc0] %v1681
      %1686 = vst [vmem:[#allocation3 + $0x10] sm:$0xf] %v1680
      %1687 = vst [vmem:[#allocation3 + $0x18] sm:$0xf] %v1681
      %v1688 = vld [vmem:[#allocation2] sm:$0x3f]
      %v1689 = vld [vmem:[#allocation2 + $0x8] sm:$0x3f]
      %v1690 = vld [vmem:[#allocation2 + $0x10] sm:$0x3f]
      %v1691 = vsel %vm355, 1, 0
      %v1692 = vsel %vm356, 1, 0
      %vm1693 = vcmp.eq.s32.totalorder %v1691, 1
      %vm1694 = vcmp.eq.s32.totalorder %v1692, 1
      %1698 = vrot.lane.b32.xlu0 %v1688, 15
      %v1699 = vpop.permute.xlu0 %1698
      %1700 = vrot.lane.b32.xlu0 %v1689, 15
      %v1701 = vpop.permute.xlu0 %1700
      %1702 = vrot.lane.b32.xlu0 %v1690, 15
      %v1703 = vpop.permute.xlu0 %1702
      %v1704 = vsel %vm702, %v1699, %v1701
      %v1705 = vsel %vm702, %v1701, %v1703
      %v1708 = vsel %vm1693, %v1704, 0.0
      %v1709 = vsel %vm1694, %v1705, 0.0
      %v1712 = vrot.slane %v1708, 4
      %v1713 = vrot.slane %v1709, 4
      %1716 = vst [vmem:[#allocation3 + $0x10] sm:$0xf0] %v1712
      %1717 = vst [vmem:[#allocation3 + $0x18] sm:$0xf0] %v1713
      %1718 = vst [vmem:[#allocation3 + $0x20] sm:$0x3] %v1712
      %1719 = vst [vmem:[#allocation3 + $0x28] sm:$0x3] %v1713
      %v1720 = vld [vmem:[#allocation2] sm:$0x3f]
      %v1721 = vld [vmem:[#allocation2 + $0x8] sm:$0x3f]
      %v1722 = vld [vmem:[#allocation2 + $0x10] sm:$0x3f]
      %1726 = vrot.lane.b32.xlu0 %v1720, 1
      %v1727 = vpop.permute.xlu0 %1726
      %1728 = vrot.lane.b32.xlu0 %v1721, 1
      %v1729 = vpop.permute.xlu0 %1728
      %1730 = vrot.lane.b32.xlu0 %v1722, 1
      %v1731 = vpop.permute.xlu0 %1730
      %v1732 = vsel %vm846, %v1727, %v1729
      %v1733 = vsel %vm846, %v1729, %v1731
      %v1736 = vsel %vm1646, %v1732, 0.0
      %v1737 = vsel %vm1647, %v1733, 0.0
      %v1740 = vrot.slane %v1736, 6
      %v1741 = vrot.slane %v1737, 6
      %1744 = vst [vmem:[#allocation3 + $0x20] sm:$0xfc] %v1740
      %1745 = vst [vmem:[#allocation3 + $0x28] sm:$0xfc] %v1741
      %v1746 = vld [vmem:[#allocation2 + $0x8] sm:$0x3f]
      %v1747 = vld [vmem:[#allocation2 + $0x10] sm:$0x3f]
      %1748 = vst [vmem:[#allocation3 + $0x30] sm:$0x3f] %v1746
      %1749 = vst [vmem:[#allocation3 + $0x38] sm:$0x3f] %v1747
      %v1750 = vld [vmem:[#allocation2 + $0x8] sm:$0x3f]
      %v1751 = vld [vmem:[#allocation2 + $0x10] sm:$0x3f]
      %v1752 = vld [vmem:[#allocation2 + $0x18] sm:$0x3f]
      %1756 = vrot.lane.b32.xlu0 %v1750, 127
      %v1757 = vpop.permute.xlu0 %1756
      %1758 = vrot.lane.b32.xlu0 %v1751, 127
      %v1759 = vpop.permute.xlu0 %1758
      %1760 = vrot.lane.b32.xlu0 %v1752, 127
      %v1761 = vpop.permute.xlu0 %1760
      %v1762 = vsel %vm899, %v1757, %v1759
      %v1763 = vsel %vm899, %v1759, %v1761
      %v1766 = vsel %vm1693, %v1762, 0.0
      %v1767 = vsel %vm1694, %v1763, 0.0
      %v1770 = vrot.slane %v1766, 2
      %v1771 = vrot.slane %v1767, 2
      %1774 = vst [vmem:[#allocation3 + $0x30] sm:$0xc0] %v1770
      %1775 = vst [vmem:[#allocation3 + $0x38] sm:$0xc0] %v1771
      %1776 = vst [vmem:[#allocation3 + $0x40] sm:$0xf] %v1770
      %1777 = vst [vmem:[#allocation3 + $0x48] sm:$0xf] %v1771
      %v1778 = vld [vmem:[#allocation2 + $0x8] sm:$0x3f]
      %v1779 = vld [vmem:[#allocation2 + $0x10] sm:$0x3f]
      %v1780 = vld [vmem:[#allocation2 + $0x18] sm:$0x3f]
      %1784 = vrot.lane.b32.xlu0 %v1778, 113
      %v1785 = vpop.permute.xlu0 %1784
      %1786 = vrot.lane.b32.xlu0 %v1779, 113
      %v1787 = vpop.permute.xlu0 %1786
      %1788 = vrot.lane.b32.xlu0 %v1780, 113
      %v1789 = vpop.permute.xlu0 %1788
      %v1790 = vsel %vm1043, %v1785, %v1787
      %v1791 = vsel %vm1043, %v1787, %v1789
      %v1794 = vsel %vm1646, %v1790, 0.0
      %v1795 = vsel %vm1647, %v1791, 0.0
      %v1798 = vrot.slane %v1794, 4
      %v1799 = vrot.slane %v1795, 4
      %1802 = vst [vmem:[#allocation3 + $0x40] sm:$0xf0] %v1798
      %1803 = vst [vmem:[#allocation3 + $0x48] sm:$0xf0] %v1799
      %1804 = vst [vmem:[#allocation3 + $0x50] sm:$0x3] %v1798
      %1805 = vst [vmem:[#allocation3 + $0x58] sm:$0x3] %v1799
      %v1806 = vld [vmem:[#allocation2 + $0x8] sm:$0x3f]
      %v1807 = vld [vmem:[#allocation2 + $0x10] sm:$0x3f]
      %v1808 = vld [vmem:[#allocation2 + $0x18] sm:$0x3f]
      %v1812 = vrot.slane %v1806, 6
      %v1813 = vrot.slane %v1807, 6
      %v1814 = vrot.slane %v1808, 6
      %1815 = vrot.lane.b32.xlu0 %v1812, 112
      %v1816 = vpop.permute.xlu0 %1815
      %1817 = vrot.lane.b32.xlu0 %v1813, 112
      %v1818 = vpop.permute.xlu0 %1817
      %1819 = vrot.lane.b32.xlu0 %v1814, 112
      %v1820 = vpop.permute.xlu0 %1819
      %v1821 = vsel %vm1076, %v1816, %v1818
      %v1822 = vsel %vm1076, %v1818, %v1820
      %1825 = vst [vmem:[#allocation3 + $0x50] sm:$0xfc] %v1821
      %1826 = vst [vmem:[#allocation3 + $0x58] sm:$0xfc] %v1822
      %v1827 = vld [vmem:[#allocation2 + $0x8] sm:$0x3f]
      %v1828 = vld [vmem:[#allocation2 + $0x10] sm:$0x3f]
      %v1829 = vld [vmem:[#allocation2 + $0x18] sm:$0x3f]
      %1833 = vrot.lane.b32.xlu0 %v1827, 111
      %v1834 = vpop.permute.xlu0 %1833
      %1835 = vrot.lane.b32.xlu0 %v1828, 111
      %v1836 = vpop.permute.xlu0 %1835
      %1837 = vrot.lane.b32.xlu0 %v1829, 111
      %v1838 = vpop.permute.xlu0 %1837
      %v1839 = vsel %vm1102, %v1834, %v1836
      %v1840 = vsel %vm1102, %v1836, %v1838
      %v1843 = vsel %vm1693, %v1839, 0.0
      %v1844 = vsel %vm1694, %v1840, 0.0
      %1845 = vst [vmem:[#allocation3 + $0x60] sm:$0x3f] %v1843
      %1846 = vst [vmem:[#allocation3 + $0x68] sm:$0x3f] %v1844
      %v1847 = vld [vmem:[%s6] sm:$0xf]
      %v1848 = vld [vmem:[#allocation3] sm:$0xff]
      %v1849 = vld [vmem:[#allocation3 + $0x8] sm:$0xff]
      %v1850 = vld [vmem:[#allocation3 + $0x10] sm:$0xff]
      %v1851 = vld [vmem:[#allocation3 + $0x18] sm:$0xff]
      %v1852 = vld [vmem:[#allocation3 + $0x20] sm:$0xff]
      %v1853 = vld [vmem:[#allocation3 + $0x28] sm:$0xff]
      %v1854 = vld [vmem:[#allocation3 + $0x30] sm:$0xff]
      %v1855 = vld [vmem:[#allocation3 + $0x38] sm:$0xff]
      %v1856 = vld [vmem:[#allocation3 + $0x40] sm:$0xff]
      %v1857 = vld [vmem:[#allocation3 + $0x48] sm:$0xff]
      %v1858 = vld [vmem:[#allocation3 + $0x50] sm:$0xff]
      %v1859 = vld [vmem:[#allocation3 + $0x58] sm:$0xff]
      %v1860 = vld [vmem:[#allocation3 + $0x60] sm:$0x3f]
      %v1861 = vld [vmem:[#allocation3 + $0x68] sm:$0x3f]
      %v1862 = vpack.c.bf16 %v1850, %v1848
      %v1863 = vpack.c.bf16 %v1851, %v1849
      %v1864 = vpack.c.bf16 %v1854, %v1852
      %v1865 = vpack.c.bf16 %v1855, %v1853
      %v1866 = vpack.c.bf16 %v1858, %v1856
      %v1867 = vpack.c.bf16 %v1859, %v1857
      %v1868 = vpack.c.bf16 %v1860, %v1860
      %v1869 = vpack.c.bf16 %v1861, %v1861
      %1871 = vset.pattern.permute.xlu0 0
      %1872 = vperm.xlu0 %1871, %v1474
      %v1873 = vpop.permute.xlu0 %1872
      %vm1875 = vcmask 441344
      %v1877 = vsel %vm1875, %v1847, 0
      %vm1879 = vcmask 1042432
      %v1881 = vsel %vm1879, %v1868, 0
      %v1884 = vsel %vm1879, %v1869, 0
      %1886 = vmatprep.subr.bf16.mxu0 0
      %1887 = vmatpush1.bf16.msra.mxu0 0
      %1888 = vmatprep.subr.bf16.mxu0 0
      %1889 = vmatpush1.bf16.msra.mxu0 0
      %1890 = vmatprep.subr.bf16.mxu0 0
      %1891 = vmatpush1.bf16.msra.mxu0 0
      %1892 = vmatprep.subr.bf16.mxu0 0
      %1893 = vmatpush1.bf16.msra.mxu0 0
      %1894 = vmatprep.subr.bf16.mxu0 %v1884
      %1895 = vmatpush1.bf16.msra.mxu0 %v1881
      %1896 = vmatprep.subr.bf16.mxu0 %v1867
      %1897 = vmatpush1.bf16.msra.mxu0 %v1866
      %1898 = vmatprep.subr.bf16.mxu0 %v1865
      %1899 = vmatpush1.bf16.msra.mxu0 %v1864
      %1900 = vmatprep.subr.bf16.mxu0 %v1863
      %1901 = vmatpush1.bf16.msra.mxu0 %v1862
      %1902 = vmatprep.subr.bf16.mxu0 0
      %1903 = vmatpush2.bf16.msra.mxu0 0
      %1904 = vmatprep.subr.bf16.mxu0 0
      %1905 = vmatpush2.bf16.msra.mxu0 0
      %1906 = vmatprep.subr.bf16.mxu0 0
      %1907 = vmatpush2.bf16.msra.mxu0 0
      %1908 = vmatprep.subr.bf16.mxu0 0
      %1909 = vmatpush2.bf16.msra.mxu0 0
      %1910 = vmatprep.subr.bf16.mxu0 0
      %1911 = vmatpush2.bf16.msra.mxu0 0
      %1912 = vmatprep.subr.bf16.mxu0 0
      %1913 = vmatpush2.bf16.msra.mxu0 0
      %1914 = vmatprep.subr.bf16.mxu0 0
      %1915 = vmatpush2.bf16.msra.mxu0 0
      %1916 = vmatprep.subr.bf16.mxu0 0
      %1917 = vmatpush2.bf16.msra.mxu0 0
      %1918 = vmatprep.mubr.bf16.mxu0 0
      %1919 = vmatmul.mubr.bf16.gmra.mxu0 %v1877
      %v1920 = vpop.f32.mrf.mxu0
      %v1921 = vadd.f32 %v1873, %v1920
      %v1922 = vpop.f32.mrf.mxu0
      %v1923 = vadd.f32 %v1873, %v1922
      %v1924 = vpop.f32.mrf.mxu0
      %v1925 = vpop.f32.mrf.mxu0
      %1926 = vdwg.mxu0
      %v1927 = vadd.f32 %v1921, %v1461
      %v1928 = vadd.f32 %v1923, %v1463
      %s1929 = scalar_lea.vmem %s7, 48
      %v1930 = vld [vmem:[%s1929] sm:$0xff]
      %v1931 = vld [vmem:[%s1929 + $0x8] sm:$0xff]
      %v1932 = vld [vmem:[%s1929 + $0x10] sm:$0xff]
      %v1933 = vld [vmem:[%s1929 + $0x18] sm:$0xff]
      %v1934 = vld [vmem:[%s1929 + $0x20] sm:$0x3f]
      %v1935 = vld [vmem:[%s1929 + $0x26] sm:$0xff]
      %s1936 = scalar_lea.vmem %s4, 16
      %v1937 = vld [vmem:[%s1936] sm:$0xf]
      %v1938 = vld [vmem:[%s1936 + $0x4] sm:$0xf]
      %v1939 = vld [vmem:[%s1936 + $0x8] sm:$0xf]
      %v1940 = vld [vmem:[%s1936 + $0xc] sm:$0xf]
      %v1941 = vpack.c.bf16 %v1927, %v1927
      %v1942 = vpack.c.bf16 %v1928, %v1928
      %1944 = vset.pattern.permute.xlu0 0
      %1945 = vperm.xlu0 %1944, %v1930
      %v1946 = vpop.permute.xlu0 %1945
      %1949 = vset.pattern.permute.xlu0 0
      %1950 = vperm.xlu0 %1949, %v1931
      %v1951 = vpop.permute.xlu0 %1950
      %1954 = vset.pattern.permute.xlu0 0
      %1955 = vperm.xlu0 %1954, %v1932
      %v1956 = vpop.permute.xlu0 %1955
      %1959 = vset.pattern.permute.xlu0 0
      %1960 = vperm.xlu0 %1959, %v1933
      %v1961 = vpop.permute.xlu0 %1960
      %v1967 = vunpack.c.l.b16 %v1937
      %v1968 = vunpack.c.l.b16 %v1938
      %v1969 = vunpack.c.l.b16 %v1939
      %v1970 = vunpack.c.l.b16 %v1940
      %v1971 = vpack.c.b16 %v1968, %v1967
      %v1972 = vpack.c.b16 %v1970, %v1969
      %v1974 = vsel %vm1511, %v1971, 0
      %v1977 = vsel %vm1511, %v1972, 0
      %v1980 = vsel %vm1416, %v1941, 0
      %v1983 = vsel %vm1416, %v1942, 0
      %1985 = vmatprep.subr.bf16.mxu0 0
      %1986 = vmatpush1.bf16.msra.mxu0 0
      %1987 = vmatprep.subr.bf16.mxu0 0
      %1988 = vmatpush1.bf16.msra.mxu0 0
      %1989 = vmatprep.subr.bf16.mxu0 0
      %1990 = vmatpush1.bf16.msra.mxu0 0
      %1991 = vmatprep.subr.bf16.mxu0 0
      %1992 = vmatpush1.bf16.msra.mxu0 0
      %1993 = vmatprep.subr.bf16.mxu0 0
      %1994 = vmatpush1.bf16.msra.mxu0 0
      %1995 = vmatprep.subr.bf16.mxu0 0
      %1996 = vmatpush1.bf16.msra.mxu0 0
      %1997 = vmatprep.subr.bf16.mxu0 0
      %1998 = vmatpush1.bf16.msra.mxu0 0
      %1999 = vmatprep.subr.bf16.mxu0 %v1983
      %2000 = vmatpush1.bf16.msra.mxu0 %v1980
      %2001 = vmatprep.subr.bf16.mxu0 0
      %2002 = vmatpush2.bf16.msra.mxu0 0
      %2003 = vmatprep.subr.bf16.mxu0 0
      %2004 = vmatpush2.bf16.msra.mxu0 0
      %2005 = vmatprep.subr.bf16.mxu0 0
      %2006 = vmatpush2.bf16.msra.mxu0 0
      %2007 = vmatprep.subr.bf16.mxu0 0
      %2008 = vmatpush2.bf16.msra.mxu0 0
      %2009 = vmatprep.subr.bf16.mxu0 0
      %2010 = vmatpush2.bf16.msra.mxu0 0
      %2011 = vmatprep.subr.bf16.mxu0 0
      %2012 = vmatpush2.bf16.msra.mxu0 0
      %2013 = vmatprep.subr.bf16.mxu0 0
      %2014 = vmatpush2.bf16.msra.mxu0 0
      %2015 = vmatprep.subr.bf16.mxu0 0
      %2016 = vmatpush2.bf16.msra.mxu0 0
      %2017 = vmatprep.mubr.bf16.mxu0 0
      %2018 = vmatmul.mubr.bf16.gmra.mxu0 %v1974
      %v2019 = vpop.f32.mrf.mxu0
      %v2020 = vadd.f32 %v1946, %v2019
      %v2021 = vpop.f32.mrf.mxu0
      %v2022 = vadd.f32 %v1946, %v2021
      %v2023 = vpop.f32.mrf.mxu0
      %v2024 = vadd.f32 %v1951, %v2023
      %v2025 = vpop.f32.mrf.mxu0
      %v2026 = vadd.f32 %v1951, %v2025
      %2027 = vmatprep.mubr.bf16.mxu0 0
      %2028 = vmatmul.mubr.bf16.gmra.mxu0 %v1977
      %v2029 = vpop.f32.mrf.mxu0
      %v2030 = vadd.f32 %v1956, %v2029
      %v2031 = vpop.f32.mrf.mxu0
      %v2032 = vadd.f32 %v1956, %v2031
      %v2033 = vpop.f32.mrf.mxu0
      %v2034 = vadd.f32 %v1961, %v2033
      %v2035 = vpop.f32.mrf.mxu0
      %v2036 = vadd.f32 %v1961, %v2035
      %2037 = vdwg.mxu0
      %v2038 = vmax.f32 %v2020, 0.0
      %v2039 = vmax.f32 %v2022, 0.0
      %v2040 = vmax.f32 %v2024, 0.0
      %v2041 = vmax.f32 %v2026, 0.0
      %v2042 = vmax.f32 %v2030, 0.0
      %v2043 = vmax.f32 %v2032, 0.0
      %v2044 = vmax.f32 %v2034, 0.0
      %v2045 = vmax.f32 %v2036, 0.0
      %s2046 = scalar_lea.vmem %s5, 4
      %v2047 = vld [vmem:[%s2046] sm:$0x7]
      %v2048 = vpack.c.bf16 %v2040, %v2038
      %v2049 = vpack.c.bf16 %v2041, %v2039
      %v2050 = vpack.c.bf16 %v2044, %v2042
      %v2051 = vpack.c.bf16 %v2045, %v2043
      %2053 = vset.pattern.permute.xlu0 0
      %2054 = vperm.xlu0 %2053, %v1934
      %v2055 = vpop.permute.xlu0 %2054
      %v2058 = vsel %vm473, %v2047, 0
      %2060 = vmatprep.subr.bf16.mxu0 0
      %2061 = vmatpush1.bf16.msra.mxu0 0
      %2062 = vmatprep.subr.bf16.mxu0 0
      %2063 = vmatpush1.bf16.msra.mxu0 0
      %2064 = vmatprep.subr.bf16.mxu0 0
      %2065 = vmatpush1.bf16.msra.mxu0 0
      %2066 = vmatprep.subr.bf16.mxu0 0
      %2067 = vmatpush1.bf16.msra.mxu0 0
      %2068 = vmatprep.subr.bf16.mxu0 0
      %2069 = vmatpush1.bf16.msra.mxu0 0
      %2070 = vmatprep.subr.bf16.mxu0 0
      %2071 = vmatpush1.bf16.msra.mxu0 0
      %2072 = vmatprep.subr.bf16.mxu0 %v2051
      %2073 = vmatpush1.bf16.msra.mxu0 %v2050
      %2074 = vmatprep.subr.bf16.mxu0 %v2049
      %2075 = vmatpush1.bf16.msra.mxu0 %v2048
      %2076 = vmatprep.subr.bf16.mxu0 0
      %2077 = vmatpush2.bf16.msra.mxu0 0
      %2078 = vmatprep.subr.bf16.mxu0 0
      %2079 = vmatpush2.bf16.msra.mxu0 0
      %2080 = vmatprep.subr.bf16.mxu0 0
      %2081 = vmatpush2.bf16.msra.mxu0 0
      %2082 = vmatprep.subr.bf16.mxu0 0
      %2083 = vmatpush2.bf16.msra.mxu0 0
      %2084 = vmatprep.subr.bf16.mxu0 0
      %2085 = vmatpush2.bf16.msra.mxu0 0
      %2086 = vmatprep.subr.bf16.mxu0 0
      %2087 = vmatpush2.bf16.msra.mxu0 0
      %2088 = vmatprep.subr.bf16.mxu0 0
      %2089 = vmatpush2.bf16.msra.mxu0 0
      %2090 = vmatprep.subr.bf16.mxu0 0
      %2091 = vmatpush2.bf16.msra.mxu0 0
      %2092 = vmatprep.mubr.bf16.mxu0 0
      %2093 = vmatmul.mubr.bf16.gmra.mxu0 %v2058
      %v2094 = vpop.f32.mrf.mxu0
      %v2095 = vadd.f32 %v2055, %v2094
      %v2096 = vpop.f32.mrf.mxu0
      %v2097 = vadd.f32 %v2055, %v2096
      %v2098 = vpop.f32.mrf.mxu0
      %v2099 = vpop.f32.mrf.mxu0
      %2100 = vdwg.mxu0
      %2101 = vst [vmem:[#allocation2 + $0x8] sm:$0x3f] %v2095
      %2102 = vst [vmem:[#allocation2 + $0x10] sm:$0x3f] %v2097
      %v2103 = vld [vmem:[#allocation2] sm:$0x3f]
      %v2104 = vld [vmem:[#allocation2 + $0x8] sm:$0x3f]
      %v2105 = vld [vmem:[#allocation2 + $0x10] sm:$0x3f]
      %2109 = vrot.lane.b32.xlu0 %v2103, 17
      %v2110 = vpop.permute.xlu0 %2109
      %2111 = vrot.lane.b32.xlu0 %v2104, 17
      %v2112 = vpop.permute.xlu0 %2111
      %2113 = vrot.lane.b32.xlu0 %v2105, 17
      %v2114 = vpop.permute.xlu0 %2113
      %v2115 = vsel %vm643, %v2110, %v2112
      %v2116 = vsel %vm643, %v2112, %v2114
      %v2119 = vsel %vm1646, %v2115, 0.0
      %v2120 = vsel %vm1647, %v2116, 0.0
      %2121 = vst [vmem:[#allocation3] sm:$0x3f] %v2119
      %2122 = vst [vmem:[#allocation3 + $0x8] sm:$0x3f] %v2120
      %v2123 = vld [vmem:[#allocation2] sm:$0x3f]
      %v2124 = vld [vmem:[#allocation2 + $0x8] sm:$0x3f]
      %v2125 = vld [vmem:[#allocation2 + $0x10] sm:$0x3f]
      %v2129 = vrot.slane %v2123, 2
      %v2130 = vrot.slane %v2124, 2
      %v2131 = vrot.slane %v2125, 2
      %2132 = vrot.lane.b32.xlu0 %v2129, 16
      %v2133 = vpop.permute.xlu0 %2132
      %2134 = vrot.lane.b32.xlu0 %v2130, 16
      %v2135 = vpop.permute.xlu0 %2134
      %2136 = vrot.lane.b32.xlu0 %v2131, 16
      %v2137 = vpop.permute.xlu0 %2136
      %v2138 = vsel %vm676, %v2133, %v2135
      %v2139 = vsel %vm676, %v2135, %v2137
      %2142 = vst [vmem:[#allocation3] sm:$0xc0] %v2138
      %2143 = vst [vmem:[#allocation3 + $0x8] sm:$0xc0] %v2139
      %2144 = vst [vmem:[#allocation3 + $0x10] sm:$0xf] %v2138
      %2145 = vst [vmem:[#allocation3 + $0x18] sm:$0xf] %v2139
      %v2146 = vld [vmem:[#allocation2] sm:$0x3f]
      %v2147 = vld [vmem:[#allocation2 + $0x8] sm:$0x3f]
      %v2148 = vld [vmem:[#allocation2 + $0x10] sm:$0x3f]
      %2152 = vrot.lane.b32.xlu0 %v2146, 15
      %v2153 = vpop.permute.xlu0 %2152
      %2154 = vrot.lane.b32.xlu0 %v2147, 15
      %v2155 = vpop.permute.xlu0 %2154
      %2156 = vrot.lane.b32.xlu0 %v2148, 15
      %v2157 = vpop.permute.xlu0 %2156
      %v2158 = vsel %vm702, %v2153, %v2155
      %v2159 = vsel %vm702, %v2155, %v2157
      %v2162 = vsel %vm1693, %v2158, 0.0
      %v2163 = vsel %vm1694, %v2159, 0.0
      %v2166 = vrot.slane %v2162, 4
      %v2167 = vrot.slane %v2163, 4
      %2170 = vst [vmem:[#allocation3 + $0x10] sm:$0xf0] %v2166
      %2171 = vst [vmem:[#allocation3 + $0x18] sm:$0xf0] %v2167
      %2172 = vst [vmem:[#allocation3 + $0x20] sm:$0x3] %v2166
      %2173 = vst [vmem:[#allocation3 + $0x28] sm:$0x3] %v2167
      %v2174 = vld [vmem:[#allocation2] sm:$0x3f]
      %v2175 = vld [vmem:[#allocation2 + $0x8] sm:$0x3f]
      %v2176 = vld [vmem:[#allocation2 + $0x10] sm:$0x3f]
      %2180 = vrot.lane.b32.xlu0 %v2174, 1
      %v2181 = vpop.permute.xlu0 %2180
      %2182 = vrot.lane.b32.xlu0 %v2175, 1
      %v2183 = vpop.permute.xlu0 %2182
      %2184 = vrot.lane.b32.xlu0 %v2176, 1
      %v2185 = vpop.permute.xlu0 %2184
      %v2186 = vsel %vm846, %v2181, %v2183
      %v2187 = vsel %vm846, %v2183, %v2185
      %v2190 = vsel %vm1646, %v2186, 0.0
      %v2191 = vsel %vm1647, %v2187, 0.0
      %v2194 = vrot.slane %v2190, 6
      %v2195 = vrot.slane %v2191, 6
      %2198 = vst [vmem:[#allocation3 + $0x20] sm:$0xfc] %v2194
      %2199 = vst [vmem:[#allocation3 + $0x28] sm:$0xfc] %v2195
      %v2200 = vld [vmem:[#allocation2 + $0x8] sm:$0x3f]
      %v2201 = vld [vmem:[#allocation2 + $0x10] sm:$0x3f]
      %2202 = vst [vmem:[#allocation3 + $0x30] sm:$0x3f] %v2200
      %2203 = vst [vmem:[#allocation3 + $0x38] sm:$0x3f] %v2201
      %v2204 = vld [vmem:[#allocation2 + $0x8] sm:$0x3f]
      %v2205 = vld [vmem:[#allocation2 + $0x10] sm:$0x3f]
      %v2206 = vld [vmem:[#allocation2 + $0x18] sm:$0x3f]
      %2210 = vrot.lane.b32.xlu0 %v2204, 127
      %v2211 = vpop.permute.xlu0 %2210
      %2212 = vrot.lane.b32.xlu0 %v2205, 127
      %v2213 = vpop.permute.xlu0 %2212
      %2214 = vrot.lane.b32.xlu0 %v2206, 127
      %v2215 = vpop.permute.xlu0 %2214
      %v2216 = vsel %vm899, %v2211, %v2213
      %v2217 = vsel %vm899, %v2213, %v2215
      %v2220 = vsel %vm1693, %v2216, 0.0
      %v2221 = vsel %vm1694, %v2217, 0.0
      %v2224 = vrot.slane %v2220, 2
      %v2225 = vrot.slane %v2221, 2
      %2228 = vst [vmem:[#allocation3 + $0x30] sm:$0xc0] %v2224
      %2229 = vst [vmem:[#allocation3 + $0x38] sm:$0xc0] %v2225
      %2230 = vst [vmem:[#allocation3 + $0x40] sm:$0xf] %v2224
      %2231 = vst [vmem:[#allocation3 + $0x48] sm:$0xf] %v2225
      %v2232 = vld [vmem:[#allocation2 + $0x8] sm:$0x3f]
      %v2233 = vld [vmem:[#allocation2 + $0x10] sm:$0x3f]
      %v2234 = vld [vmem:[#allocation2 + $0x18] sm:$0x3f]
      %2238 = vrot.lane.b32.xlu0 %v2232, 113
      %v2239 = vpop.permute.xlu0 %2238
      %2240 = vrot.lane.b32.xlu0 %v2233, 113
      %v2241 = vpop.permute.xlu0 %2240
      %2242 = vrot.lane.b32.xlu0 %v2234, 113
      %v2243 = vpop.permute.xlu0 %2242
      %v2244 = vsel %vm1043, %v2239, %v2241
      %v2245 = vsel %vm1043, %v2241, %v2243
      %v2248 = vsel %vm1646, %v2244, 0.0
      %v2249 = vsel %vm1647, %v2245, 0.0
      %v2252 = vrot.slane %v2248, 4
      %v2253 = vrot.slane %v2249, 4
      %2256 = vst [vmem:[#allocation3 + $0x40] sm:$0xf0] %v2252
      %2257 = vst [vmem:[#allocation3 + $0x48] sm:$0xf0] %v2253
      %2258 = vst [vmem:[#allocation3 + $0x50] sm:$0x3] %v2252
      %2259 = vst [vmem:[#allocation3 + $0x58] sm:$0x3] %v2253
      %v2260 = vld [vmem:[#allocation2 + $0x8] sm:$0x3f]
      %v2261 = vld [vmem:[#allocation2 + $0x10] sm:$0x3f]
      %v2262 = vld [vmem:[#allocation2 + $0x18] sm:$0x3f]
      %v2266 = vrot.slane %v2260, 6
      %v2267 = vrot.slane %v2261, 6
      %v2268 = vrot.slane %v2262, 6
      %2269 = vrot.lane.b32.xlu0 %v2266, 112
      %v2270 = vpop.permute.xlu0 %2269
      %2271 = vrot.lane.b32.xlu0 %v2267, 112
      %v2272 = vpop.permute.xlu0 %2271
      %2273 = vrot.lane.b32.xlu0 %v2268, 112
      %v2274 = vpop.permute.xlu0 %2273
      %v2275 = vsel %vm1076, %v2270, %v2272
      %v2276 = vsel %vm1076, %v2272, %v2274
      %2279 = vst [vmem:[#allocation3 + $0x50] sm:$0xfc] %v2275
      %2280 = vst [vmem:[#allocation3 + $0x58] sm:$0xfc] %v2276
      %v2281 = vld [vmem:[#allocation2 + $0x8] sm:$0x3f]
      %v2282 = vld [vmem:[#allocation2 + $0x10] sm:$0x3f]
      %v2283 = vld [vmem:[#allocation2 + $0x18] sm:$0x3f]
      %2287 = vrot.lane.b32.xlu0 %v2281, 111
      %v2288 = vpop.permute.xlu0 %2287
      %2289 = vrot.lane.b32.xlu0 %v2282, 111
      %v2290 = vpop.permute.xlu0 %2289
      %2291 = vrot.lane.b32.xlu0 %v2283, 111
      %v2292 = vpop.permute.xlu0 %2291
      %v2293 = vsel %vm1102, %v2288, %v2290
      %v2294 = vsel %vm1102, %v2290, %v2292
      %v2297 = vsel %vm1693, %v2293, 0.0
      %v2298 = vsel %vm1694, %v2294, 0.0
      %2299 = vst [vmem:[#allocation3 + $0x60] sm:$0x3f] %v2297
      %2300 = vst [vmem:[#allocation3 + $0x68] sm:$0x3f] %v2298
      %s2301 = scalar_lea.vmem %s6, 4
      %v2302 = vld [vmem:[%s2301] sm:$0xf]
      %v2303 = vld [vmem:[#allocation3] sm:$0xff]
      %v2304 = vld [vmem:[#allocation3 + $0x8] sm:$0xff]
      %v2305 = vld [vmem:[#allocation3 + $0x10] sm:$0xff]
      %v2306 = vld [vmem:[#allocation3 + $0x18] sm:$0xff]
      %v2307 = vld [vmem:[#allocation3 + $0x20] sm:$0xff]
      %v2308 = vld [vmem:[#allocation3 + $0x28] sm:$0xff]
      %v2309 = vld [vmem:[#allocation3 + $0x30] sm:$0xff]
      %v2310 = vld [vmem:[#allocation3 + $0x38] sm:$0xff]
      %v2311 = vld [vmem:[#allocation3 + $0x40] sm:$0xff]
      %v2312 = vld [vmem:[#allocation3 + $0x48] sm:$0xff]
      %v2313 = vld [vmem:[#allocation3 + $0x50] sm:$0xff]
      %v2314 = vld [vmem:[#allocation3 + $0x58] sm:$0xff]
      %v2315 = vld [vmem:[#allocation3 + $0x60] sm:$0x3f]
      %v2316 = vld [vmem:[#allocation3 + $0x68] sm:$0x3f]
      %v2317 = vpack.c.bf16 %v2305, %v2303
      %v2318 = vpack.c.bf16 %v2306, %v2304
      %v2319 = vpack.c.bf16 %v2309, %v2307
      %v2320 = vpack.c.bf16 %v2310, %v2308
      %v2321 = vpack.c.bf16 %v2313, %v2311
      %v2322 = vpack.c.bf16 %v2314, %v2312
      %v2323 = vpack.c.bf16 %v2315, %v2315
      %v2324 = vpack.c.bf16 %v2316, %v2316
      %2326 = vset.pattern.permute.xlu0 0
      %2327 = vperm.xlu0 %2326, %v1935
      %v2328 = vpop.permute.xlu0 %2327
      %v2331 = vsel %vm1875, %v2302, 0
      %v2334 = vsel %vm1879, %v2323, 0
      %v2337 = vsel %vm1879, %v2324, 0
      %2339 = vmatprep.subr.bf16.mxu0 0
      %2340 = vmatpush1.bf16.msra.mxu0 0
      %2341 = vmatprep.subr.bf16.mxu0 0
      %2342 = vmatpush1.bf16.msra.mxu0 0
      %2343 = vmatprep.subr.bf16.mxu0 0
      %2344 = vmatpush1.bf16.msra.mxu0 0
      %2345 = vmatprep.subr.bf16.mxu0 0
      %2346 = vmatpush1.bf16.msra.mxu0 0
      %2347 = vmatprep.subr.bf16.mxu0 %v2337
      %2348 = vmatpush1.bf16.msra.mxu0 %v2334
      %2349 = vmatprep.subr.bf16.mxu0 %v2322
      %2350 = vmatpush1.bf16.msra.mxu0 %v2321
      %2351 = vmatprep.subr.bf16.mxu0 %v2320
      %2352 = vmatpush1.bf16.msra.mxu0 %v2319
      %2353 = vmatprep.subr.bf16.mxu0 %v2318
      %2354 = vmatpush1.bf16.msra.mxu0 %v2317
      %2355 = vmatprep.subr.bf16.mxu0 0
      %2356 = vmatpush2.bf16.msra.mxu0 0
      %2357 = vmatprep.subr.bf16.mxu0 0
      %2358 = vmatpush2.bf16.msra.mxu0 0
      %2359 = vmatprep.subr.bf16.mxu0 0
      %2360 = vmatpush2.bf16.msra.mxu0 0
      %2361 = vmatprep.subr.bf16.mxu0 0
      %2362 = vmatpush2.bf16.msra.mxu0 0
      %2363 = vmatprep.subr.bf16.mxu0 0
      %2364 = vmatpush2.bf16.msra.mxu0 0
      %2365 = vmatprep.subr.bf16.mxu0 0
      %2366 = vmatpush2.bf16.msra.mxu0 0
      %2367 = vmatprep.subr.bf16.mxu0 0
      %2368 = vmatpush2.bf16.msra.mxu0 0
      %2369 = vmatprep.subr.bf16.mxu0 0
      %2370 = vmatpush2.bf16.msra.mxu0 0
      %2371 = vmatprep.mubr.bf16.mxu0 0
      %2372 = vmatmul.mubr.bf16.gmra.mxu0 %v2331
      %v2373 = vpop.f32.mrf.mxu0
      %v2374 = vadd.f32 %v2328, %v2373
      %v2375 = vpop.f32.mrf.mxu0
      %v2376 = vadd.f32 %v2328, %v2375
      %v2377 = vpop.f32.mrf.mxu0
      %v2378 = vpop.f32.mrf.mxu0
      %2379 = vdwg.mxu0
      %v2380 = vadd.f32 %v2374, %v1927
      %v2381 = vadd.f32 %v2376, %v1928
      %2382 = vst [vmem:[#allocation2 + $0x8] sm:$0xff] %v2380
      %2383 = vst [vmem:[#allocation2 + $0x10] sm:$0xff] %v2381
      %v2384 = vld [vmem:[#allocation2] sm:$0xff]
      %v2385 = vld [vmem:[#allocation2 + $0x8] sm:$0xff]
      %v2386 = vld [vmem:[#allocation2 + $0x10] sm:$0xff]
      %2390 = vrot.lane.b32.xlu0 %v2384, 17
      %v2391 = vpop.permute.xlu0 %2390
      %2392 = vrot.lane.b32.xlu0 %v2385, 17
      %v2393 = vpop.permute.xlu0 %2392
      %2394 = vrot.lane.b32.xlu0 %v2386, 17
      %v2395 = vpop.permute.xlu0 %2394
      %v2396 = vsel %vm643, %v2391, %v2393
      %v2397 = vsel %vm643, %v2393, %v2395
      %v2400 = vsel %vm1646, %v2396, 0.0
      %v2401 = vsel %vm1647, %v2397, 0.0
      %2402 = vst [vmem:[#allocation3] sm:$0xff] %v2400
      %2403 = vst [vmem:[#allocation3 + $0x8] sm:$0xff] %v2401
      %v2404 = vld [vmem:[#allocation2] sm:$0xff]
      %v2405 = vld [vmem:[#allocation2 + $0x8] sm:$0xff]
      %v2406 = vld [vmem:[#allocation2 + $0x10] sm:$0xff]
      %2410 = vrot.lane.b32.xlu0 %v2404, 16
      %v2411 = vpop.permute.xlu0 %2410
      %2412 = vrot.lane.b32.xlu0 %v2405, 16
      %v2413 = vpop.permute.xlu0 %2412
      %2414 = vrot.lane.b32.xlu0 %v2406, 16
      %v2415 = vpop.permute.xlu0 %2414
      %v2416 = vsel %vm676, %v2411, %v2413
      %v2417 = vsel %vm676, %v2413, %v2415
      %2420 = vst [vmem:[#allocation3 + $0x10] sm:$0xff] %v2416
      %2421 = vst [vmem:[#allocation3 + $0x18] sm:$0xff] %v2417
      %v2422 = vld [vmem:[#allocation2] sm:$0xff]
      %v2423 = vld [vmem:[#allocation2 + $0x8] sm:$0xff]
      %v2424 = vld [vmem:[#allocation2 + $0x10] sm:$0xff]
      %2428 = vrot.lane.b32.xlu0 %v2422, 15
      %v2429 = vpop.permute.xlu0 %2428
      %2430 = vrot.lane.b32.xlu0 %v2423, 15
      %v2431 = vpop.permute.xlu0 %2430
      %2432 = vrot.lane.b32.xlu0 %v2424, 15
      %v2433 = vpop.permute.xlu0 %2432
      %v2434 = vsel %vm702, %v2429, %v2431
      %v2435 = vsel %vm702, %v2431, %v2433
      %v2438 = vsel %vm1693, %v2434, 0.0
      %v2439 = vsel %vm1694, %v2435, 0.0
      %2440 = vst [vmem:[#allocation3 + $0x20] sm:$0xff] %v2438
      %2441 = vst [vmem:[#allocation3 + $0x28] sm:$0xff] %v2439
      %v2442 = vld [vmem:[#allocation2] sm:$0xff]
      %v2443 = vld [vmem:[#allocation2 + $0x8] sm:$0xff]
      %v2444 = vld [vmem:[#allocation2 + $0x10] sm:$0xff]
      %2448 = vrot.lane.b32.xlu0 %v2442, 1
      %v2449 = vpop.permute.xlu0 %2448
      %2450 = vrot.lane.b32.xlu0 %v2443, 1
      %v2451 = vpop.permute.xlu0 %2450
      %2452 = vrot.lane.b32.xlu0 %v2444, 1
      %v2453 = vpop.permute.xlu0 %2452
      %v2454 = vsel %vm846, %v2449, %v2451
      %v2455 = vsel %vm846, %v2451, %v2453
      %v2458 = vsel %vm1646, %v2454, 0.0
      %v2459 = vsel %vm1647, %v2455, 0.0
      %2460 = vst [vmem:[#allocation3 + $0x30] sm:$0xff] %v2458
      %2461 = vst [vmem:[#allocation3 + $0x38] sm:$0xff] %v2459
      %v2462 = vld [vmem:[#allocation2 + $0x8] sm:$0xff]
      %v2463 = vld [vmem:[#allocation2 + $0x10] sm:$0xff]
      %2464 = vst [vmem:[#allocation3 + $0x40] sm:$0xff] %v2462
      %2465 = vst [vmem:[#allocation3 + $0x48] sm:$0xff] %v2463
      %v2466 = vld [vmem:[#allocation2 + $0x8] sm:$0xff]
      %v2467 = vld [vmem:[#allocation2 + $0x10] sm:$0xff]
      %v2468 = vld [vmem:[#allocation2 + $0x18] sm:$0xff]
      %2472 = vrot.lane.b32.xlu0 %v2466, 127
      %v2473 = vpop.permute.xlu0 %2472
      %2474 = vrot.lane.b32.xlu0 %v2467, 127
      %v2475 = vpop.permute.xlu0 %2474
      %2476 = vrot.lane.b32.xlu0 %v2468, 127
      %v2477 = vpop.permute.xlu0 %2476
      %v2478 = vsel %vm899, %v2473, %v2475
      %v2479 = vsel %vm899, %v2475, %v2477
      %v2482 = vsel %vm1693, %v2478, 0.0
      %v2483 = vsel %vm1694, %v2479, 0.0
      %2484 = vst [vmem:[#allocation3 + $0x50] sm:$0xff] %v2482
      %2485 = vst [vmem:[#allocation3 + $0x58] sm:$0xff] %v2483
      %v2486 = vld [vmem:[#allocation2 + $0x8] sm:$0xff]
      %v2487 = vld [vmem:[#allocation2 + $0x10] sm:$0xff]
      %v2488 = vld [vmem:[#allocation2 + $0x18] sm:$0xff]
      %2492 = vrot.lane.b32.xlu0 %v2486, 113
      %v2493 = vpop.permute.xlu0 %2492
      %2494 = vrot.lane.b32.xlu0 %v2487, 113
      %v2495 = vpop.permute.xlu0 %2494
      %2496 = vrot.lane.b32.xlu0 %v2488, 113
      %v2497 = vpop.permute.xlu0 %2496
      %v2498 = vsel %vm1043, %v2493, %v2495
      %v2499 = vsel %vm1043, %v2495, %v2497
      %v2502 = vsel %vm1646, %v2498, 0.0
      %v2503 = vsel %vm1647, %v2499, 0.0
      %2504 = vst [vmem:[#allocation3 + $0x60] sm:$0xff] %v2502
      %2505 = vst [vmem:[#allocation3 + $0x68] sm:$0xff] %v2503
      %v2506 = vld [vmem:[#allocation2 + $0x8] sm:$0xff]
      %v2507 = vld [vmem:[#allocation2 + $0x10] sm:$0xff]
      %v2508 = vld [vmem:[#allocation2 + $0x18] sm:$0xff]
      %2512 = vrot.lane.b32.xlu0 %v2506, 112
      %v2513 = vpop.permute.xlu0 %2512
      %2514 = vrot.lane.b32.xlu0 %v2507, 112
      %v2515 = vpop.permute.xlu0 %2514
      %2516 = vrot.lane.b32.xlu0 %v2508, 112
      %v2517 = vpop.permute.xlu0 %2516
      %v2518 = vsel %vm1076, %v2513, %v2515
      %v2519 = vsel %vm1076, %v2515, %v2517
      %2522 = vst [vmem:[#allocation3 + $0x70] sm:$0xff] %v2518
      %2523 = vst [vmem:[#allocation3 + $0x78] sm:$0xff] %v2519
      %v2524 = vld [vmem:[#allocation2 + $0x8] sm:$0xff]
      %v2525 = vld [vmem:[#allocation2 + $0x10] sm:$0xff]
      %v2526 = vld [vmem:[#allocation2 + $0x18] sm:$0xff]
      %2530 = vrot.lane.b32.xlu0 %v2524, 111
      %v2531 = vpop.permute.xlu0 %2530
      %2532 = vrot.lane.b32.xlu0 %v2525, 111
      %v2533 = vpop.permute.xlu0 %2532
      %2534 = vrot.lane.b32.xlu0 %v2526, 111
      %v2535 = vpop.permute.xlu0 %2534
      %v2536 = vsel %vm1102, %v2531, %v2533
      %v2537 = vsel %vm1102, %v2533, %v2535
      %v2540 = vsel %vm1693, %v2536, 0.0
      %v2541 = vsel %vm1694, %v2537, 0.0
      %2542 = vst [vmem:[#allocation3 + $0x80] sm:$0xff] %v2540
      %2543 = vst [vmem:[#allocation3 + $0x88] sm:$0xff] %v2541
      %v2544 = vld [vmem:[%s2] sm:$0x1]
      %v2545 = vld [vmem:[#allocation3] sm:$0xff]
      %v2546 = vld [vmem:[#allocation3 + $0x8] sm:$0xff]
      %v2547 = vld [vmem:[#allocation3 + $0x10] sm:$0xff]
      %v2548 = vld [vmem:[#allocation3 + $0x18] sm:$0xff]
      %v2549 = vld [vmem:[#allocation3 + $0x20] sm:$0xff]
      %v2550 = vld [vmem:[#allocation3 + $0x28] sm:$0xff]
      %v2551 = vld [vmem:[#allocation3 + $0x30] sm:$0xff]
      %v2552 = vld [vmem:[#allocation3 + $0x38] sm:$0xff]
      %v2553 = vld [vmem:[#allocation3 + $0x40] sm:$0xff]
      %v2554 = vld [vmem:[#allocation3 + $0x48] sm:$0xff]
      %v2555 = vld [vmem:[#allocation3 + $0x50] sm:$0xff]
      %v2556 = vld [vmem:[#allocation3 + $0x58] sm:$0xff]
      %v2557 = vld [vmem:[#allocation3 + $0x60] sm:$0xff]
      %v2558 = vld [vmem:[#allocation3 + $0x68] sm:$0xff]
      %v2559 = vld [vmem:[#allocation3 + $0x70] sm:$0xff]
      %v2560 = vld [vmem:[#allocation3 + $0x78] sm:$0xff]
      %v2561 = vld [vmem:[#allocation3 + $0x80] sm:$0xff]
      %v2562 = vld [vmem:[#allocation3 + $0x88] sm:$0xff]
      %v2563 = vpack.c.bf16 %v2547, %v2545
      %v2564 = vpack.c.bf16 %v2548, %v2546
      %v2565 = vpack.c.bf16 %v2551, %v2549
      %v2566 = vpack.c.bf16 %v2552, %v2550
      %v2567 = vpack.c.bf16 %v2555, %v2553
      %v2568 = vpack.c.bf16 %v2556, %v2554
      %v2569 = vpack.c.bf16 %v2559, %v2557
      %v2570 = vpack.c.bf16 %v2560, %v2558
      %v2571 = vpack.c.bf16 %v2561, %v2561
      %v2572 = vpack.c.bf16 %v2562, %v2562
      %v2573 = vld [vmem:[%s3 + $0xa] sm:$0x3]
      %2575 = vset.pattern.permute.xlu0 0
      %2576 = vperm.xlu0 %2575, %v2573
      %v2577 = vpop.permute.xlu0 %2576
      %vm2579 = vcmask 588800
      %v2581 = vsel %vm2579, %v2544, 0
      %v2584 = vsel %vm1416, %v2571, 0
      %v2587 = vsel %vm1416, %v2572, 0
      %2589 = vmatprep.subr.bf16.mxu0 0
      %2590 = vmatpush1.bf16.msra.mxu0 0
      %2591 = vmatprep.subr.bf16.mxu0 0
      %2592 = vmatpush1.bf16.msra.mxu0 0
      %2593 = vmatprep.subr.bf16.mxu0 0
      %2594 = vmatpush1.bf16.msra.mxu0 0
      %2595 = vmatprep.subr.bf16.mxu0 %v2587
      %2596 = vmatpush1.bf16.msra.mxu0 %v2584
      %2597 = vmatprep.subr.bf16.mxu0 %v2570
      %2598 = vmatpush1.bf16.msra.mxu0 %v2569
      %2599 = vmatprep.subr.bf16.mxu0 %v2568
      %2600 = vmatpush1.bf16.msra.mxu0 %v2567
      %2601 = vmatprep.subr.bf16.mxu0 %v2566
      %2602 = vmatpush1.bf16.msra.mxu0 %v2565
      %2603 = vmatprep.subr.bf16.mxu0 %v2564
      %2604 = vmatpush1.bf16.msra.mxu0 %v2563
      %2605 = vmatprep.subr.bf16.mxu0 0
      %2606 = vmatpush2.bf16.msra.mxu0 0
      %2607 = vmatprep.subr.bf16.mxu0 0
      %2608 = vmatpush2.bf16.msra.mxu0 0
      %2609 = vmatprep.subr.bf16.mxu0 0
      %2610 = vmatpush2.bf16.msra.mxu0 0
      %2611 = vmatprep.subr.bf16.mxu0 0
      %2612 = vmatpush2.bf16.msra.mxu0 0
      %2613 = vmatprep.subr.bf16.mxu0 0
      %2614 = vmatpush2.bf16.msra.mxu0 0
      %2615 = vmatprep.subr.bf16.mxu0 0
      %2616 = vmatpush2.bf16.msra.mxu0 0
      %2617 = vmatprep.subr.bf16.mxu0 0
      %2618 = vmatpush2.bf16.msra.mxu0 0
      %2619 = vmatprep.subr.bf16.mxu0 0
      %2620 = vmatpush2.bf16.msra.mxu0 0
      %2621 = vmatprep.mubr.bf16.mxu0 0
      %2622 = vmatmul.mubr.bf16.gmra.mxu0 %v2581
      %v2623 = vpop.f32.mrf.mxu0
      %v2624 = vadd.f32 %v2577, %v2623
      %v2625 = vpop.f32.mrf.mxu0
      %v2626 = vadd.f32 %v2577, %v2625
      %v2627 = vpop.f32.mrf.mxu0
      %v2628 = vpop.f32.mrf.mxu0
      %2629 = vdwg.mxu0
      %v2630 = vadd.f32 %v2624, %v1465
      %v2631 = vadd.f32 %v2626, %v1467
      %v2634 = vrot.slane %v2624, 6
      %v2635 = vrot.slane %v2626, 6
      %v2640 = vrot.slane %v1465, 4
      %v2641 = vrot.slane %v1467, 4
      %vm2644 = vcmask 1041408
      %v2645 = vsel %vm2644, %v2630, %v2634
      %v2646 = vsel %vm2644, %v2631, %v2635
      %v2647 = vsel %vm1416, %v2645, %v2640
      %v2648 = vsel %vm1416, %v2646, %v2641
      %2649 = vst [vmem:[%s302] sm:$0x3f] %v2647
      %2650 = vst [vmem:[%s302 + $0x8] sm:$0x3f] %v2648
      %p2651 = scmp.lt.s32.totalorder %s19, 1
      %s2652 = scalar_select %p2651, %s19, 1
      %s2653 = smul.addr %s2652, 2
      %s2654 = smul.addr %s2653, 8
      %s2655 = scalar_lea.vmem %s8, %s2654
      // Predicated region
      $region53: #{wdsr_forward.1} parent=51 // pred_check
        %p2656 = pneg %p210
      $region54: #{wdsr_forward.1} parent=51 // pred_check_branch
        %2658 = sbr.rel (%p2656) target = $region56
      $region55: #{wdsr_forward.1} parent=51 // pred_region
        _
      $region56: #{wdsr_forward.1} parent=51 // pred_fallthru
        _
    $region52: #{wdsr_forward.1} parent=5 // pred_fallthru
      _
    %p2659 = scmp.le.s32.totalorder 2, %s14
    // Predicated region
    $region57: #{wdsr_forward.1} parent=5 // pred_check
      %p2660 = pneg %p2659
    $region58: #{wdsr_forward.1} parent=5 // pred_check_branch
      %2662 = sbr.rel (%p2660) target = $region60
    $region59: #{wdsr_forward.1} parent=5 // pred_region
      %s2663 = ssub.s32 %s14, 2
      // Predicated region
      $region61: #{wdsr_forward.1} parent=59 // pred_check
        %p2664 = pneg %p216
      $region62: #{wdsr_forward.1} parent=59 // pred_check_branch
        %2666 = sbr.rel (%p2664) target = $region64
      $region63: #{wdsr_forward.1} parent=59 // pred_region
        %p2667 = scmp.lt.s32.totalorder %s20, 1
        %s2668 = scalar_select %p2667, %s20, 1
        %s2669 = smul.addr %s2668, 2
        %s2670 = smul.addr %s2669, 8
        %s2671 = scalar_lea.vmem %s8, %s2670
      $region64: #{wdsr_forward.1} parent=59 // pred_fallthru
        _
    $region60: #{wdsr_forward.1} parent=5 // pred_fallthru
      _
  $region6: #{wdsr_forward.1} parent=0 // loop_footer
    %s18 = sadd.s32 1, %s14
  $region7: #{wdsr_forward.1} parent=0 // loop_footer_branch
    %13 = sbr.rel target = $region3
  $region8: #{wdsr_forward.1} parent=0 // loop_exit
    _

</llo_original>
